<compile_context>
chip_gen: v7x
topology: tpu7x:2x2x1
jax: 0.10.0
libtpu: 0.0.40
codegen_flags: <defaults>
</compile_context>

<pallas_src>
import numpy as np

import jax
import jax.numpy as jnp
from jax import lax
from jax.experimental import pallas as pl
from jax.experimental.pallas import tpu as pltpu

EPS = 1e-5  # nn.BatchNorm2d default eps

# ---- layout of the packed f32 constant table (lane width 384) --------------
_ROW_FIN_W = 18      # final 1x1 conv weight (384,)
_ROW_FIN_B = 19      # final bias (1,)
_ROW_WD0 = 24        # ir0_dw tap weights, 9 rows x 192 lanes
_ROW_WD1 = 40        # ir1_dw tap weights, 9 rows x 192 lanes
_ROW_WD2 = 56        # c1_dw tap weights, 16 rows x 384 lanes (rows 9..15 zero)
_CONST_ROWS = 72
_CONST_LANES = 384

# BN layer order inside the table (rows 2*l / 2*l+1 = scale / bias).
_BN_LAYERS = ("c0", "ir0_e", "ir0_dw", "ir0_p",
              "ir1_e", "ir1_dw", "ir1_p", "c1_e", "c1_dw")
(_L_C0, _L_IR0E, _L_IR0DW, _L_IR0P,
 _L_IR1E, _L_IR1DW, _L_IR1P, _L_C1E, _L_C1DW) = range(9)


# ----------------------------------------------------------------------------
# Wrapper-side helpers (trace-time constants / tiny XLA glue)
# ----------------------------------------------------------------------------
def _round_up(x, m):
    return (x + m - 1) // m * m


def _out_hw(h, w):
    return (h - 3) // 2 + 1, (w - 3) // 2 + 1


def _extract_patches(x, k, stride):
    """x: (N, H, W, C) -> (N, Ho, Wo, k*k, C), VALID padding, tap order kh*k+kw."""
    _, H, W, _ = x.shape
    Ho = (H - k) // stride + 1
    Wo = (W - k) // stride + 1
    taps = []
    for i in range(k):
        for j in range(k):
            taps.append(
                x[:, i:i + stride * (Ho - 1) + 1:stride,
                  j:j + stride * (Wo - 1) + 1:stride, :])
    return jnp.stack(taps, axis=3)


def _stacked_gather(h_in, w_in, h_out, w_out, m_in_pad, m_out_pad):
    """(9*m_out_pad, m_in_pad) 0/1 selection matrix for a 3x3 stride-2 VALID
    depthwise conv.  Tap t = 3*kh + kw occupies rows [t*m_out_pad, ...); rows
    beyond h_out*w_out inside each tap block are zero (sublane padding)."""
    g = np.zeros((9 * m_out_pad, m_in_pad), np.float32)
    for i in range(3):
        for j in range(3):
            t = 3 * i + j
            for oh in range(h_out):
                for ow in range(w_out):
                    g[t * m_out_pad + oh * w_out + ow,
                      (2 * oh + i) * w_in + (2 * ow + j)] = 1.0
    return jnp.asarray(g)


def fold_bn(layer):
    """Fold conv bias + eval-mode BatchNorm into per-channel (scale, bias)."""
    w, b, bn = layer["w"], layer["b"], layer["bn"]
    cout = w.shape[0]
    if bn is None:
        return jnp.ones((1, cout), jnp.float32), b.reshape(1, cout)
    gamma, beta, mean, var = bn
    s = gamma / jnp.sqrt(var + EPS)
    return s.reshape(1, cout), (beta + (b - mean) * s).reshape(1, cout)


def _pack_constants(P):
    """All f32 epilogue constants packed into one (72, 384) table (single DMA)."""
    def row(v):
        v = jnp.asarray(v, jnp.float32).reshape(-1)
        return jnp.pad(v, (0, _CONST_LANES - v.shape[0]))

    rows = [jnp.zeros((_CONST_LANES,), jnp.float32) for _ in range(_CONST_ROWS)]
    for l, name in enumerate(_BN_LAYERS):
        s, b = fold_bn(P[name])
        rows[2 * l] = row(s)
        rows[2 * l + 1] = row(b)
    rows[_ROW_FIN_W] = row(P["c1_f"]["w"].reshape(-1))
    rows[_ROW_FIN_B] = row(P["c1_f"]["b"].reshape(-1))

    def dw_taps(name):  # (9, C), bf16-rounded to match matmul-operand quantization
        w = P[name]["w"]
        return w.reshape(w.shape[0], 9).T.astype(jnp.bfloat16).astype(jnp.float32)

    for base, name in ((_ROW_WD0, "ir0_dw"), (_ROW_WD1, "ir1_dw"), (_ROW_WD2, "c1_dw")):
        taps = dw_taps(name)
        for t in range(9):
            rows[base + t] = row(taps[t])
    return jnp.stack(rows, axis=0)                         # (72, 384) f32


# ----------------------------------------------------------------------------
# Full forward pass: ONE pallas_call, batch on a "parallel" grid axis
# ----------------------------------------------------------------------------
def discriminator_forward(x_nchw, P, batch_block=1):
    N, cin, H, W = x_nchw.shape
    assert cin == 3
    B = int(batch_block)
    assert N % B == 0, "batch_block must divide the batch size"
    G = N // B

    bf16, f32 = jnp.bfloat16, jnp.float32
    x = jnp.transpose(x_nchw, (0, 2, 3, 1)).astype(f32)    # NHWC

    H0, W0 = _out_hw(H, W)        # after c0
    H1, W1 = _out_hw(H0, W0)      # after ir0_dw
    H2, W2 = _out_hw(H1, W1)      # after ir1_dw
    H3, W3 = _out_hw(H2, W2)      # after c1_dw
    M0 = H0 * W0
    M1, M2, M3 = H1 * W1, H2 * W2, H3 * W3
    M1p, M2p = _round_up(M1, 8), _round_up(M2, 8)
    # Canonical case: 3x3 -> 1x1 last stage, gather == identity -> pure VPU.
    identity_dw2 = (H2 == 3 and W2 == 3)
    M3p = 1 if identity_dw2 else _round_up(M3, 8)

    # ---- c0 im2col (Cin=3, tiny): K order (ci, kh, kw), padded 27 -> 32 -----
    pats = _extract_patches(x, 3, 2)                        # (N,H0,W0,9,3)
    pats = jnp.transpose(pats, (0, 1, 2, 4, 3))             # (N,H0,W0,3,9)
    x0 = pats.reshape(N, M0, 27)
    x0 = jnp.pad(x0, ((0, 0), (0, 0), (0, 5))).astype(bf16)  # (N, M0, 32)

    # ---- matmul operands (bf16 MXU path) ------------------------------------
    wc0 = jnp.pad(P["c0"]["w"].reshape(32, 27).T, ((0, 5), (0, 0))).astype(bf16)

    def w1x1(name):
        w = P[name]["w"]
        return w.reshape(w.shape[0], w.shape[1]).T.astype(bf16)   # (Cin, Cout)

    g0s = _stacked_gather(H0, W0, H1, W1, M0, M1p).astype(bf16)   # (9*M1p, M0)
    g1s = _stacked_gather(H1, W1, H2, W2, M1p, M2p).astype(bf16)  # (9*M2p, M1p)
    g2s = (None if identity_dw2 else
           _stacked_gather(H2, W2, H3, W3, M2p, M3p).astype(bf16))

    consts = _pack_constants(P)                                   # (72, 384) f32

    operands = [x0, wc0, w1x1("ir0_e"), w1x1("ir0_p"), w1x1("ir1_e"),
                w1x1("ir1_p"), w1x1("c1_e"), g0s, g1s]
    if not identity_dw2:
        operands.append(g2s)
    operands.append(consts)

    # ---- fused kernel --------------------------------------------------------
    def kernel(*refs):
        if identity_dw2:
            (x0_ref, wc0_r, we0_r, wp0_r, we1_r, wp1_r, we2_r,
             g0_r, g1_r, c_ref, out_ref) = refs
            g2_r = None
        else:
            (x0_ref, wc0_r, we0_r, wp0_r, we1_r, wp1_r, we2_r,
             g0_r, g1_r, g2_r, c_ref, out_ref) = refs

        def mm(a, w_ref):                       # bf16 x bf16 MXU, f32 accumulate
            return jnp.dot(a, w_ref[...], preferred_element_type=f32)

        def bn(y, l, relu6):                    # folded bias + eval-BN, f32 VPU
            c = y.shape[-1]
            y = y * c_ref[2 * l:2 * l + 1, 0:c] + c_ref[2 * l + 1:2 * l + 2, 0:c]
            return jnp.clip(y, 0.0, 6.0) if relu6 else y

        def dw(e, g_ref, wd_row, m_in, m_out):
            # Depthwise 3x3 s2 conv: ONE stacked 0/1 gather matmul (all 9 taps
            # at once -> RHS pushed once), then a per-channel tap-weighted VPU
            # tree-sum (exposes ILP for v5e's f32 VALUs).
            c = e.shape[-1]
            wd = [c_ref[wd_row + t:wd_row + t + 1, 0:c] for t in range(9)]
            g = g_ref[...]
            outs = []
            for b in range(B):                                    # static unroll
                slab = jnp.dot(g, e[b * m_in:(b + 1) * m_in, :],
                               preferred_element_type=f32)        # (9*m_out, c)
                parts = [slab[t * m_out:(t + 1) * m_out, :] * wd[t]
                         for t in range(9)]
                while len(parts) > 1:                             # tree reduce
                    nxt = [parts[i] + parts[i + 1]
                           for i in range(0, len(parts) - 1, 2)]
                    if len(parts) % 2:
                        nxt.append(parts[-1])
                    parts = nxt
                outs.append(parts[0])
            return outs[0] if B == 1 else jnp.concatenate(outs, axis=0)

        # ---- c0 + inverted-residual stacks (batch flattened into M) ---------
        x0v = x0_ref[...].reshape(B * M0, 32)
        h = bn(mm(x0v, wc0_r), _L_C0, True).astype(bf16)           # (B*M0, 32)
        e = bn(mm(h, we0_r), _L_IR0E, True).astype(bf16)           # (B*M0, 192)
        d = bn(dw(e, g0_r, _ROW_WD0, M0, M1p), _L_IR0DW, True).astype(bf16)
        p = bn(mm(d, wp0_r), _L_IR0P, False).astype(bf16)          # (B*M1p, 32)
        e = bn(mm(p, we1_r), _L_IR1E, True).astype(bf16)           # (B*M1p, 192)
        d = bn(dw(e, g1_r, _ROW_WD1, M1p, M2p), _L_IR1DW, True).astype(bf16)
        p = bn(mm(d, wp1_r), _L_IR1P, False).astype(bf16)          # (B*M2p, 64)
        e = bn(mm(p, we2_r), _L_C1E, True).astype(bf16)            # (B*M2p, 384)

        if identity_dw2:
            # 3x3 input, 3x3 s2 kernel -> identity gather: pure VPU reduction.
            # wd2 block is padded to 16 rows with zeros so pad rows of e drop out.
            wd2 = c_ref[_ROW_WD2:_ROW_WD2 + M2p, 0:384]            # (16, 384)
            e32 = e.astype(f32)
            outs = [jnp.sum(e32[b * M2p:(b + 1) * M2p, :] * wd2,
                            axis=0, keepdims=True) for b in range(B)]
            d = outs[0] if B == 1 else jnp.concatenate(outs, axis=0)   # (B, 384)
        else:
            d = dw(e, g2_r, _ROW_WD2, M2p, M3p)                    # (B*M3p, 384)
        d = bn(d, _L_C1DW, True)                                   # f32

        # final 1x1 conv (384 -> 1) + sigmoid: VPU multiply + lane reduction.
        logit = (jnp.sum(d * c_ref[_ROW_FIN_W:_ROW_FIN_W + 1, 0:384],
                         axis=-1, keepdims=True)
                 + c_ref[_ROW_FIN_B:_ROW_FIN_B + 1, 0:1])
        out_ref[...] = jax.nn.sigmoid(logit).reshape(B, M3p, 1)

    # ---- pallas_call ---------------------------------------------------------
    def _full(a):
        return pl.BlockSpec(a.shape, lambda g, _nd=a.ndim: (0,) * _nd)

    in_specs = [pl.BlockSpec((B, M0, 32), lambda g: (g, 0, 0))]
    in_specs += [_full(a) for a in operands[1:]]

    out = pl.pallas_call(
        kernel,
        out_shape=jax.ShapeDtypeStruct((N, M3p, 1), jnp.float32),
        grid=(G,),
        in_specs=in_specs,
        out_specs=pl.BlockSpec((B, M3p, 1), lambda g: (g, 0, 0)),
        compiler_params=pltpu.CompilerParams(
            dimension_semantics=("parallel",)),   # batch over v7x's two TCs
    )(*operands)

    out = out[:, :M3, 0]                          # drop sublane row padding
    return jnp.transpose(out.reshape(N, H3, W3, 1), (0, 3, 1, 2))  # (N,1,H3,W3)


# ----------------------------------------------------------------------------
# Parameters (deterministic, synthetic)
# ----------------------------------------------------------------------------
def init_params(key):
    keys = iter(jax.random.split(key, 64))

    def conv(cout, cin, k):
        w = jax.random.normal(next(keys), (cout, cin, k, k), jnp.float32) * 0.1
        b = jax.random.normal(next(keys), (cout,), jnp.float32) * 0.05
        return w, b

    def bn(c):
        gamma = jax.random.uniform(next(keys), (c,), jnp.float32, 0.5, 1.5)
        beta = jax.random.normal(next(keys), (c,), jnp.float32) * 0.1
        mean = jax.random.normal(next(keys), (c,), jnp.float32) * 0.1
        var = jax.random.uniform(next(keys), (c,), jnp.float32, 0.5, 1.5)
        return gamma, beta, mean, var

    def layer(cout, cin, k, with_bn=True):
        w, b = conv(cout, cin, k)
        return {"w": w, "b": b, "bn": bn(cout) if with_bn else None}

    return {
        "c0":     layer(32, 3, 3),
        "ir0_e":  layer(192, 32, 1),
        "ir0_dw": layer(192, 1, 3),
        "ir0_p":  layer(32, 192, 1),
        "ir1_e":  layer(192, 32, 1),
        "ir1_dw": layer(192, 1, 3),
        "ir1_p":  layer(64, 192, 1),
        "c1_e":   layer(384, 64, 1),
        "c1_dw":  layer(384, 1, 3),
        "c1_f":   layer(1, 384, 1, with_bn=False),
    }


# ----------------------------------------------------------------------------
# Pure-JAX reference (lax.conv based), with the same bf16 matmul-operand casts
# ----------------------------------------------------------------------------
def reference_forward(x_nchw, P):
    x = jnp.transpose(x_nchw, (0, 2, 3, 1)).astype(jnp.float32)

    def blk(x, name, stride, groups, act, quant):
        s, b = fold_bn(P[name])
        w = P[name]["w"]
        if quant:
            lhs, rhs = x.astype(jnp.bfloat16), w.astype(jnp.bfloat16)
        else:
            lhs, rhs = x, w
        y = lax.conv_general_dilated(
            lhs, jnp.transpose(rhs, (2, 3, 1, 0)),
            window_strides=(stride, stride), padding="VALID",
            dimension_numbers=("NHWC", "HWIO", "NHWC"),
            feature_group_count=groups,
            preferred_element_type=jnp.float32)
        y = y * s.reshape(-1) + b.reshape(-1)
        if act == "relu6":
            y = jnp.clip(y, 0.0, 6.0)
        elif act == "sigmoid":
            y = jax.nn.sigmoid(y)
        return y

    x = blk(x, "c0", 2, 1, "relu6", True)
    x = blk(x, "ir0_e", 1, 1, "relu6", True)
    x = blk(x, "ir0_dw", 2, 192, "relu6", True)
    x = blk(x, "ir0_p", 1, 1, "none", True)
    x = blk(x, "ir1_e", 1, 1, "relu6", True)
    x = blk(x, "ir1_dw", 2, 192, "relu6", True)
    x = blk(x, "ir1_p", 1, 1, "none", True)
    x = blk(x, "c1_e", 1, 1, "relu6", True)
    x = blk(x, "c1_dw", 2, 384, "relu6", True)
    x = blk(x, "c1_f", 1, 1, "sigmoid", False)
    return jnp.transpose(x, (0, 3, 1, 2))


# ----------------------------------------------------------------------------
if __name__ == "__main__":
    key = jax.random.PRNGKey(0)
    pkey, xkey = jax.random.split(key)
    P = init_params(pkey)

    # Input like PyTorch: NCHW, 3 channels. 33x33 -> 16 -> 7 -> 3 -> 1 spatially.
    N, H, W = 2, 33, 33
    x = jax.random.normal(xkey, (N, 3, H, W), jnp.float32)

    fwd = jax.jit(lambda inp: discriminator_forward(inp, P))
    out = jax.block_until_ready(fwd(x))
    assert out.shape == (N, 1, 1, 1), out.shape

    # Structurally independent reference (lax.conv) with the same bf16
    # matmul-operand quantization; tolerance leaves room for bf16 rounding-path
    # differences while still catching any structural bug.
    ref = reference_forward(x, P)
    err = float(jnp.max(jnp.abs(out - ref)))
    assert jnp.allclose(out, ref, atol=1e-2, rtol=1e-2), f"max abs err {err}"

    # Batch-blocked path: 2 images flattened into the matmul M dimension per
    # grid step (grid length stays 2 -> both v7x TensorCores busy).
    x4 = jax.random.normal(jax.random.split(xkey)[0], (4, 3, H, W), jnp.float32)
    fwd_blk = jax.jit(lambda inp: discriminator_forward(inp, P, batch_block=2))
    out4 = jax.block_until_ready(fwd_blk(x4))
    assert out4.shape == (4, 1, 1, 1), out4.shape
    ref4 = reference_forward(x4, P)
    err4 = float(jnp.max(jnp.abs(out4 - ref4)))
    assert jnp.allclose(out4, ref4, atol=1e-2, rtol=1e-2), f"max abs err {err4}"

    print("KERNEL_OK")
</pallas_src>

<mosaic_0001>
module attributes {stable_mosaic.version = 11 : i64} {
  func.func @kernel(%arg0: i32, %arg1: memref<1x256x32xbf16, #tpu.memory_space<vmem>>, %arg2: memref<32x32xbf16, #tpu.memory_space<vmem>>, %arg3: memref<32x192xbf16, #tpu.memory_space<vmem>>, %arg4: memref<192x32xbf16, #tpu.memory_space<vmem>>, %arg5: memref<32x192xbf16, #tpu.memory_space<vmem>>, %arg6: memref<192x64xbf16, #tpu.memory_space<vmem>>, %arg7: memref<64x384xbf16, #tpu.memory_space<vmem>>, %arg8: memref<504x256xbf16, #tpu.memory_space<vmem>>, %arg9: memref<144x56xbf16, #tpu.memory_space<vmem>>, %arg10: memref<72x384xf32, #tpu.memory_space<vmem>>, %arg11: memref<1x1x1xf32, #tpu.memory_space<vmem>>) attributes {dimension_semantics = [#tpu.dimension_semantics<parallel>], iteration_bounds = array<i64: 2>, scalar_prefetch = 0 : i64, scratch_operands = 0 : i64, tpu.core_type = #tpu.core_type<tc>, window_params = [{transform_indices = @transform_0, window_bounds = array<i64: 1, 256, 32>}, {pipeline_mode = #tpu.pipeline_mode<synchronous>, transform_indices = @transform_1, window_bounds = array<i64: 32, 32>}, {pipeline_mode = #tpu.pipeline_mode<synchronous>, transform_indices = @transform_2, window_bounds = array<i64: 32, 192>}, {pipeline_mode = #tpu.pipeline_mode<synchronous>, transform_indices = @transform_3, window_bounds = array<i64: 192, 32>}, {pipeline_mode = #tpu.pipeline_mode<synchronous>, transform_indices = @transform_4, window_bounds = array<i64: 32, 192>}, {pipeline_mode = #tpu.pipeline_mode<synchronous>, transform_indices = @transform_5, window_bounds = array<i64: 192, 64>}, {pipeline_mode = #tpu.pipeline_mode<synchronous>, transform_indices = @transform_6, window_bounds = array<i64: 64, 384>}, {pipeline_mode = #tpu.pipeline_mode<synchronous>, transform_indices = @transform_7, window_bounds = array<i64: 504, 256>}, {pipeline_mode = #tpu.pipeline_mode<synchronous>, transform_indices = @transform_8, window_bounds = array<i64: 144, 56>}, {pipeline_mode = #tpu.pipeline_mode<synchronous>, transform_indices = @transform_9, window_bounds = array<i64: 72, 384>}, {transform_indices = @transform_10, window_bounds = array<i64: 1, 1, 1>}]} {
    %c0 = arith.constant 0 : index
    %c0_0 = arith.constant 0 : index
    %c0_1 = arith.constant 0 : index
    %0 = vector.load %arg1[%c0, %c0_0, %c0_1] : memref<1x256x32xbf16, #tpu.memory_space<vmem>>, vector<1x256x32xbf16>
    %1 = vector.shape_cast %0 : vector<1x256x32xbf16> to vector<256x32xbf16>
    %c0_2 = arith.constant 0 : index
    %c0_3 = arith.constant 0 : index
    %2 = vector.load %arg2[%c0_2, %c0_3] : memref<32x32xbf16, #tpu.memory_space<vmem>>, vector<32x32xbf16>
    %cst = arith.constant dense<0.000000e+00> : vector<256x32xf32>
    %3 = tpu.matmul %1, %2, %cst {dimension_numbers = #tpu.dot_dimension_numbers<[1], [0], [0], [1], [0, 0, 1, 1], [], []>} : vector<256x32xbf16>, vector<32x32xbf16>, vector<256x32xf32> -> vector<256x32xf32>
    %c0_4 = arith.constant 0 : index
    %c0_5 = arith.constant 0 : index
    %4 = vector.load %arg10[%c0_4, %c0_5] : memref<72x384xf32, #tpu.memory_space<vmem>>, vector<1x32xf32>
    %5 = vector.broadcast %4 : vector<1x32xf32> to vector<256x32xf32>
    %6 = arith.mulf %3, %5 : vector<256x32xf32>
    %c1 = arith.constant 1 : index
    %c0_6 = arith.constant 0 : index
    %7 = vector.load %arg10[%c1, %c0_6] : memref<72x384xf32, #tpu.memory_space<vmem>>, vector<1x32xf32>
    %8 = vector.broadcast %7 : vector<1x32xf32> to vector<256x32xf32>
    %9 = arith.addf %6, %8 : vector<256x32xf32>
    %cst_7 = arith.constant 0.000000e+00 : f32
    %cst_8 = arith.constant 6.000000e+00 : f32
    %10 = vector.broadcast %cst_7 : f32 to vector<256x32xf32>
    %11 = arith.maximumf %10, %9 : vector<256x32xf32>
    %12 = vector.broadcast %cst_8 : f32 to vector<256x32xf32>
    %13 = arith.minimumf %12, %11 : vector<256x32xf32>
    %14 = arith.truncf %13 : vector<256x32xf32> to vector<256x32xbf16>
    %c0_9 = arith.constant 0 : index
    %c0_10 = arith.constant 0 : index
    %15 = vector.load %arg3[%c0_9, %c0_10] : memref<32x192xbf16, #tpu.memory_space<vmem>>, vector<32x192xbf16>
    %cst_11 = arith.constant dense<0.000000e+00> : vector<256x192xf32>
    %16 = tpu.matmul %14, %15, %cst_11 {dimension_numbers = #tpu.dot_dimension_numbers<[1], [0], [0], [1], [0, 0, 1, 1], [], []>} : vector<256x32xbf16>, vector<32x192xbf16>, vector<256x192xf32> -> vector<256x192xf32>
    %c2 = arith.constant 2 : index
    %c0_12 = arith.constant 0 : index
    %17 = vector.load %arg10[%c2, %c0_12] : memref<72x384xf32, #tpu.memory_space<vmem>>, vector<1x192xf32>
    %18 = vector.broadcast %17 : vector<1x192xf32> to vector<256x192xf32>
    %19 = arith.mulf %16, %18 : vector<256x192xf32>
    %c3 = arith.constant 3 : index
    %c0_13 = arith.constant 0 : index
    %20 = vector.load %arg10[%c3, %c0_13] : memref<72x384xf32, #tpu.memory_space<vmem>>, vector<1x192xf32>
    %21 = vector.broadcast %20 : vector<1x192xf32> to vector<256x192xf32>
    %22 = arith.addf %19, %21 : vector<256x192xf32>
    %cst_14 = arith.constant 0.000000e+00 : f32
    %cst_15 = arith.constant 6.000000e+00 : f32
    %23 = vector.broadcast %cst_14 : f32 to vector<256x192xf32>
    %24 = arith.maximumf %23, %22 : vector<256x192xf32>
    %25 = vector.broadcast %cst_15 : f32 to vector<256x192xf32>
    %26 = arith.minimumf %25, %24 : vector<256x192xf32>
    %27 = arith.truncf %26 : vector<256x192xf32> to vector<256x192xbf16>
    %c24 = arith.constant 24 : index
    %c0_16 = arith.constant 0 : index
    %28 = vector.load %arg10[%c24, %c0_16] : memref<72x384xf32, #tpu.memory_space<vmem>>, vector<1x192xf32>
    %c25 = arith.constant 25 : index
    %c0_17 = arith.constant 0 : index
    %29 = vector.load %arg10[%c25, %c0_17] : memref<72x384xf32, #tpu.memory_space<vmem>>, vector<1x192xf32>
    %c26 = arith.constant 26 : index
    %c0_18 = arith.constant 0 : index
    %30 = vector.load %arg10[%c26, %c0_18] : memref<72x384xf32, #tpu.memory_space<vmem>>, vector<1x192xf32>
    %c27 = arith.constant 27 : index
    %c0_19 = arith.constant 0 : index
    %31 = vector.load %arg10[%c27, %c0_19] : memref<72x384xf32, #tpu.memory_space<vmem>>, vector<1x192xf32>
    %c28 = arith.constant 28 : index
    %c0_20 = arith.constant 0 : index
    %32 = vector.load %arg10[%c28, %c0_20] : memref<72x384xf32, #tpu.memory_space<vmem>>, vector<1x192xf32>
    %c29 = arith.constant 29 : index
    %c0_21 = arith.constant 0 : index
    %33 = vector.load %arg10[%c29, %c0_21] : memref<72x384xf32, #tpu.memory_space<vmem>>, vector<1x192xf32>
    %c30 = arith.constant 30 : index
    %c0_22 = arith.constant 0 : index
    %34 = vector.load %arg10[%c30, %c0_22] : memref<72x384xf32, #tpu.memory_space<vmem>>, vector<1x192xf32>
    %c31 = arith.constant 31 : index
    %c0_23 = arith.constant 0 : index
    %35 = vector.load %arg10[%c31, %c0_23] : memref<72x384xf32, #tpu.memory_space<vmem>>, vector<1x192xf32>
    %c32 = arith.constant 32 : index
    %c0_24 = arith.constant 0 : index
    %36 = vector.load %arg10[%c32, %c0_24] : memref<72x384xf32, #tpu.memory_space<vmem>>, vector<1x192xf32>
    %c0_25 = arith.constant 0 : index
    %c0_26 = arith.constant 0 : index
    %37 = vector.load %arg8[%c0_25, %c0_26] : memref<504x256xbf16, #tpu.memory_space<vmem>>, vector<504x256xbf16>
    %cst_27 = arith.constant dense<0.000000e+00> : vector<504x192xf32>
    %38 = tpu.matmul %37, %27, %cst_27 {dimension_numbers = #tpu.dot_dimension_numbers<[1], [0], [0], [1], [0, 0, 1, 1], [], []>} : vector<504x256xbf16>, vector<256x192xbf16>, vector<504x192xf32> -> vector<504x192xf32>
    %39 = vector.extract_strided_slice %38 {offsets = [0, 0], sizes = [56, 192], strides = [1, 1]} : vector<504x192xf32> to vector<56x192xf32>
    %40 = vector.broadcast %28 : vector<1x192xf32> to vector<56x192xf32>
    %41 = arith.mulf %39, %40 : vector<56x192xf32>
    %42 = vector.extract_strided_slice %38 {offsets = [56, 0], sizes = [56, 192], strides = [1, 1]} : vector<504x192xf32> to vector<56x192xf32>
    %43 = vector.broadcast %29 : vector<1x192xf32> to vector<56x192xf32>
    %44 = arith.mulf %42, %43 : vector<56x192xf32>
    %45 = vector.extract_strided_slice %38 {offsets = [112, 0], sizes = [56, 192], strides = [1, 1]} : vector<504x192xf32> to vector<56x192xf32>
    %46 = vector.broadcast %30 : vector<1x192xf32> to vector<56x192xf32>
    %47 = arith.mulf %45, %46 : vector<56x192xf32>
    %48 = vector.extract_strided_slice %38 {offsets = [168, 0], sizes = [56, 192], strides = [1, 1]} : vector<504x192xf32> to vector<56x192xf32>
    %49 = vector.broadcast %31 : vector<1x192xf32> to vector<56x192xf32>
    %50 = arith.mulf %48, %49 : vector<56x192xf32>
    %51 = vector.extract_strided_slice %38 {offsets = [224, 0], sizes = [56, 192], strides = [1, 1]} : vector<504x192xf32> to vector<56x192xf32>
    %52 = vector.broadcast %32 : vector<1x192xf32> to vector<56x192xf32>
    %53 = arith.mulf %51, %52 : vector<56x192xf32>
    %54 = vector.extract_strided_slice %38 {offsets = [280, 0], sizes = [56, 192], strides = [1, 1]} : vector<504x192xf32> to vector<56x192xf32>
    %55 = vector.broadcast %33 : vector<1x192xf32> to vector<56x192xf32>
    %56 = arith.mulf %54, %55 : vector<56x192xf32>
    %57 = vector.extract_strided_slice %38 {offsets = [336, 0], sizes = [56, 192], strides = [1, 1]} : vector<504x192xf32> to vector<56x192xf32>
    %58 = vector.broadcast %34 : vector<1x192xf32> to vector<56x192xf32>
    %59 = arith.mulf %57, %58 : vector<56x192xf32>
    %60 = vector.extract_strided_slice %38 {offsets = [392, 0], sizes = [56, 192], strides = [1, 1]} : vector<504x192xf32> to vector<56x192xf32>
    %61 = vector.broadcast %35 : vector<1x192xf32> to vector<56x192xf32>
    %62 = arith.mulf %60, %61 : vector<56x192xf32>
    %63 = vector.extract_strided_slice %38 {offsets = [448, 0], sizes = [56, 192], strides = [1, 1]} : vector<504x192xf32> to vector<56x192xf32>
    %64 = vector.broadcast %36 : vector<1x192xf32> to vector<56x192xf32>
    %65 = arith.mulf %63, %64 : vector<56x192xf32>
    %66 = arith.addf %41, %44 : vector<56x192xf32>
    %67 = arith.addf %47, %50 : vector<56x192xf32>
    %68 = arith.addf %53, %56 : vector<56x192xf32>
    %69 = arith.addf %59, %62 : vector<56x192xf32>
    %70 = arith.addf %66, %67 : vector<56x192xf32>
    %71 = arith.addf %68, %69 : vector<56x192xf32>
    %72 = arith.addf %70, %71 : vector<56x192xf32>
    %73 = arith.addf %72, %65 : vector<56x192xf32>
    %c4 = arith.constant 4 : index
    %c0_28 = arith.constant 0 : index
    %74 = vector.load %arg10[%c4, %c0_28] : memref<72x384xf32, #tpu.memory_space<vmem>>, vector<1x192xf32>
    %75 = vector.broadcast %74 : vector<1x192xf32> to vector<56x192xf32>
    %76 = arith.mulf %73, %75 : vector<56x192xf32>
    %c5 = arith.constant 5 : index
    %c0_29 = arith.constant 0 : index
    %77 = vector.load %arg10[%c5, %c0_29] : memref<72x384xf32, #tpu.memory_space<vmem>>, vector<1x192xf32>
    %78 = vector.broadcast %77 : vector<1x192xf32> to vector<56x192xf32>
    %79 = arith.addf %76, %78 : vector<56x192xf32>
    %cst_30 = arith.constant 0.000000e+00 : f32
    %cst_31 = arith.constant 6.000000e+00 : f32
    %80 = vector.broadcast %cst_30 : f32 to vector<56x192xf32>
    %81 = arith.maximumf %80, %79 : vector<56x192xf32>
    %82 = vector.broadcast %cst_31 : f32 to vector<56x192xf32>
    %83 = arith.minimumf %82, %81 : vector<56x192xf32>
    %84 = arith.truncf %83 : vector<56x192xf32> to vector<56x192xbf16>
    %c0_32 = arith.constant 0 : index
    %c0_33 = arith.constant 0 : index
    %85 = vector.load %arg4[%c0_32, %c0_33] : memref<192x32xbf16, #tpu.memory_space<vmem>>, vector<192x32xbf16>
    %cst_34 = arith.constant dense<0.000000e+00> : vector<56x32xf32>
    %86 = tpu.matmul %84, %85, %cst_34 {dimension_numbers = #tpu.dot_dimension_numbers<[1], [0], [0], [1], [0, 0, 1, 1], [], []>} : vector<56x192xbf16>, vector<192x32xbf16>, vector<56x32xf32> -> vector<56x32xf32>
    %c6 = arith.constant 6 : index
    %c0_35 = arith.constant 0 : index
    %87 = vector.load %arg10[%c6, %c0_35] : memref<72x384xf32, #tpu.memory_space<vmem>>, vector<1x32xf32>
    %88 = vector.broadcast %87 : vector<1x32xf32> to vector<56x32xf32>
    %89 = arith.mulf %86, %88 : vector<56x32xf32>
    %c7 = arith.constant 7 : index
    %c0_36 = arith.constant 0 : index
    %90 = vector.load %arg10[%c7, %c0_36] : memref<72x384xf32, #tpu.memory_space<vmem>>, vector<1x32xf32>
    %91 = vector.broadcast %90 : vector<1x32xf32> to vector<56x32xf32>
    %92 = arith.addf %89, %91 : vector<56x32xf32>
    %93 = arith.truncf %92 : vector<56x32xf32> to vector<56x32xbf16>
    %c0_37 = arith.constant 0 : index
    %c0_38 = arith.constant 0 : index
    %94 = vector.load %arg5[%c0_37, %c0_38] : memref<32x192xbf16, #tpu.memory_space<vmem>>, vector<32x192xbf16>
    %cst_39 = arith.constant dense<0.000000e+00> : vector<56x192xf32>
    %95 = tpu.matmul %93, %94, %cst_39 {dimension_numbers = #tpu.dot_dimension_numbers<[1], [0], [0], [1], [0, 0, 1, 1], [], []>} : vector<56x32xbf16>, vector<32x192xbf16>, vector<56x192xf32> -> vector<56x192xf32>
    %c8 = arith.constant 8 : index
    %c0_40 = arith.constant 0 : index
    %96 = vector.load %arg10[%c8, %c0_40] : memref<72x384xf32, #tpu.memory_space<vmem>>, vector<1x192xf32>
    %97 = vector.broadcast %96 : vector<1x192xf32> to vector<56x192xf32>
    %98 = arith.mulf %95, %97 : vector<56x192xf32>
    %c9 = arith.constant 9 : index
    %c0_41 = arith.constant 0 : index
    %99 = vector.load %arg10[%c9, %c0_41] : memref<72x384xf32, #tpu.memory_space<vmem>>, vector<1x192xf32>
    %100 = vector.broadcast %99 : vector<1x192xf32> to vector<56x192xf32>
    %101 = arith.addf %98, %100 : vector<56x192xf32>
    %cst_42 = arith.constant 0.000000e+00 : f32
    %cst_43 = arith.constant 6.000000e+00 : f32
    %102 = vector.broadcast %cst_42 : f32 to vector<56x192xf32>
    %103 = arith.maximumf %102, %101 : vector<56x192xf32>
    %104 = vector.broadcast %cst_43 : f32 to vector<56x192xf32>
    %105 = arith.minimumf %104, %103 : vector<56x192xf32>
    %106 = arith.truncf %105 : vector<56x192xf32> to vector<56x192xbf16>
    %c40 = arith.constant 40 : index
    %c0_44 = arith.constant 0 : index
    %107 = vector.load %arg10[%c40, %c0_44] : memref<72x384xf32, #tpu.memory_space<vmem>>, vector<1x192xf32>
    %c41 = arith.constant 41 : index
    %c0_45 = arith.constant 0 : index
    %108 = vector.load %arg10[%c41, %c0_45] : memref<72x384xf32, #tpu.memory_space<vmem>>, vector<1x192xf32>
    %c42 = arith.constant 42 : index
    %c0_46 = arith.constant 0 : index
    %109 = vector.load %arg10[%c42, %c0_46] : memref<72x384xf32, #tpu.memory_space<vmem>>, vector<1x192xf32>
    %c43 = arith.constant 43 : index
    %c0_47 = arith.constant 0 : index
    %110 = vector.load %arg10[%c43, %c0_47] : memref<72x384xf32, #tpu.memory_space<vmem>>, vector<1x192xf32>
    %c44 = arith.constant 44 : index
    %c0_48 = arith.constant 0 : index
    %111 = vector.load %arg10[%c44, %c0_48] : memref<72x384xf32, #tpu.memory_space<vmem>>, vector<1x192xf32>
    %c45 = arith.constant 45 : index
    %c0_49 = arith.constant 0 : index
    %112 = vector.load %arg10[%c45, %c0_49] : memref<72x384xf32, #tpu.memory_space<vmem>>, vector<1x192xf32>
    %c46 = arith.constant 46 : index
    %c0_50 = arith.constant 0 : index
    %113 = vector.load %arg10[%c46, %c0_50] : memref<72x384xf32, #tpu.memory_space<vmem>>, vector<1x192xf32>
    %c47 = arith.constant 47 : index
    %c0_51 = arith.constant 0 : index
    %114 = vector.load %arg10[%c47, %c0_51] : memref<72x384xf32, #tpu.memory_space<vmem>>, vector<1x192xf32>
    %c48 = arith.constant 48 : index
    %c0_52 = arith.constant 0 : index
    %115 = vector.load %arg10[%c48, %c0_52] : memref<72x384xf32, #tpu.memory_space<vmem>>, vector<1x192xf32>
    %c0_53 = arith.constant 0 : index
    %c0_54 = arith.constant 0 : index
    %116 = vector.load %arg9[%c0_53, %c0_54] : memref<144x56xbf16, #tpu.memory_space<vmem>>, vector<144x56xbf16>
    %cst_55 = arith.constant dense<0.000000e+00> : vector<144x192xf32>
    %117 = tpu.matmul %116, %106, %cst_55 {dimension_numbers = #tpu.dot_dimension_numbers<[1], [0], [0], [1], [0, 0, 1, 1], [], []>} : vector<144x56xbf16>, vector<56x192xbf16>, vector<144x192xf32> -> vector<144x192xf32>
    %118 = vector.extract_strided_slice %117 {offsets = [0, 0], sizes = [16, 192], strides = [1, 1]} : vector<144x192xf32> to vector<16x192xf32>
    %119 = vector.broadcast %107 : vector<1x192xf32> to vector<16x192xf32>
    %120 = arith.mulf %118, %119 : vector<16x192xf32>
    %121 = vector.extract_strided_slice %117 {offsets = [16, 0], sizes = [16, 192], strides = [1, 1]} : vector<144x192xf32> to vector<16x192xf32>
    %122 = vector.broadcast %108 : vector<1x192xf32> to vector<16x192xf32>
    %123 = arith.mulf %121, %122 : vector<16x192xf32>
    %124 = vector.extract_strided_slice %117 {offsets = [32, 0], sizes = [16, 192], strides = [1, 1]} : vector<144x192xf32> to vector<16x192xf32>
    %125 = vector.broadcast %109 : vector<1x192xf32> to vector<16x192xf32>
    %126 = arith.mulf %124, %125 : vector<16x192xf32>
    %127 = vector.extract_strided_slice %117 {offsets = [48, 0], sizes = [16, 192], strides = [1, 1]} : vector<144x192xf32> to vector<16x192xf32>
    %128 = vector.broadcast %110 : vector<1x192xf32> to vector<16x192xf32>
    %129 = arith.mulf %127, %128 : vector<16x192xf32>
    %130 = vector.extract_strided_slice %117 {offsets = [64, 0], sizes = [16, 192], strides = [1, 1]} : vector<144x192xf32> to vector<16x192xf32>
    %131 = vector.broadcast %111 : vector<1x192xf32> to vector<16x192xf32>
    %132 = arith.mulf %130, %131 : vector<16x192xf32>
    %133 = vector.extract_strided_slice %117 {offsets = [80, 0], sizes = [16, 192], strides = [1, 1]} : vector<144x192xf32> to vector<16x192xf32>
    %134 = vector.broadcast %112 : vector<1x192xf32> to vector<16x192xf32>
    %135 = arith.mulf %133, %134 : vector<16x192xf32>
    %136 = vector.extract_strided_slice %117 {offsets = [96, 0], sizes = [16, 192], strides = [1, 1]} : vector<144x192xf32> to vector<16x192xf32>
    %137 = vector.broadcast %113 : vector<1x192xf32> to vector<16x192xf32>
    %138 = arith.mulf %136, %137 : vector<16x192xf32>
    %139 = vector.extract_strided_slice %117 {offsets = [112, 0], sizes = [16, 192], strides = [1, 1]} : vector<144x192xf32> to vector<16x192xf32>
    %140 = vector.broadcast %114 : vector<1x192xf32> to vector<16x192xf32>
    %141 = arith.mulf %139, %140 : vector<16x192xf32>
    %142 = vector.extract_strided_slice %117 {offsets = [128, 0], sizes = [16, 192], strides = [1, 1]} : vector<144x192xf32> to vector<16x192xf32>
    %143 = vector.broadcast %115 : vector<1x192xf32> to vector<16x192xf32>
    %144 = arith.mulf %142, %143 : vector<16x192xf32>
    %145 = arith.addf %120, %123 : vector<16x192xf32>
    %146 = arith.addf %126, %129 : vector<16x192xf32>
    %147 = arith.addf %132, %135 : vector<16x192xf32>
    %148 = arith.addf %138, %141 : vector<16x192xf32>
    %149 = arith.addf %145, %146 : vector<16x192xf32>
    %150 = arith.addf %147, %148 : vector<16x192xf32>
    %151 = arith.addf %149, %150 : vector<16x192xf32>
    %152 = arith.addf %151, %144 : vector<16x192xf32>
    %c10 = arith.constant 10 : index
    %c0_56 = arith.constant 0 : index
    %153 = vector.load %arg10[%c10, %c0_56] : memref<72x384xf32, #tpu.memory_space<vmem>>, vector<1x192xf32>
    %154 = vector.broadcast %153 : vector<1x192xf32> to vector<16x192xf32>
    %155 = arith.mulf %152, %154 : vector<16x192xf32>
    %c11 = arith.constant 11 : index
    %c0_57 = arith.constant 0 : index
    %156 = vector.load %arg10[%c11, %c0_57] : memref<72x384xf32, #tpu.memory_space<vmem>>, vector<1x192xf32>
    %157 = vector.broadcast %156 : vector<1x192xf32> to vector<16x192xf32>
    %158 = arith.addf %155, %157 : vector<16x192xf32>
    %cst_58 = arith.constant 0.000000e+00 : f32
    %cst_59 = arith.constant 6.000000e+00 : f32
    %159 = vector.broadcast %cst_58 : f32 to vector<16x192xf32>
    %160 = arith.maximumf %159, %158 : vector<16x192xf32>
    %161 = vector.broadcast %cst_59 : f32 to vector<16x192xf32>
    %162 = arith.minimumf %161, %160 : vector<16x192xf32>
    %163 = arith.truncf %162 : vector<16x192xf32> to vector<16x192xbf16>
    %c0_60 = arith.constant 0 : index
    %c0_61 = arith.constant 0 : index
    %164 = vector.load %arg6[%c0_60, %c0_61] : memref<192x64xbf16, #tpu.memory_space<vmem>>, vector<192x64xbf16>
    %cst_62 = arith.constant dense<0.000000e+00> : vector<16x64xf32>
    %165 = tpu.matmul %163, %164, %cst_62 {dimension_numbers = #tpu.dot_dimension_numbers<[1], [0], [0], [1], [0, 0, 1, 1], [], []>} : vector<16x192xbf16>, vector<192x64xbf16>, vector<16x64xf32> -> vector<16x64xf32>
    %c12 = arith.constant 12 : index
    %c0_63 = arith.constant 0 : index
    %166 = vector.load %arg10[%c12, %c0_63] : memref<72x384xf32, #tpu.memory_space<vmem>>, vector<1x64xf32>
    %167 = vector.broadcast %166 : vector<1x64xf32> to vector<16x64xf32>
    %168 = arith.mulf %165, %167 : vector<16x64xf32>
    %c13 = arith.constant 13 : index
    %c0_64 = arith.constant 0 : index
    %169 = vector.load %arg10[%c13, %c0_64] : memref<72x384xf32, #tpu.memory_space<vmem>>, vector<1x64xf32>
    %170 = vector.broadcast %169 : vector<1x64xf32> to vector<16x64xf32>
    %171 = arith.addf %168, %170 : vector<16x64xf32>
    %172 = arith.truncf %171 : vector<16x64xf32> to vector<16x64xbf16>
    %c0_65 = arith.constant 0 : index
    %c0_66 = arith.constant 0 : index
    %173 = vector.load %arg7[%c0_65, %c0_66] : memref<64x384xbf16, #tpu.memory_space<vmem>>, vector<64x384xbf16>
    %cst_67 = arith.constant dense<0.000000e+00> : vector<16x384xf32>
    %174 = tpu.matmul %172, %173, %cst_67 {dimension_numbers = #tpu.dot_dimension_numbers<[1], [0], [0], [1], [0, 0, 1, 1], [], []>} : vector<16x64xbf16>, vector<64x384xbf16>, vector<16x384xf32> -> vector<16x384xf32>
    %c14 = arith.constant 14 : index
    %c0_68 = arith.constant 0 : index
    %175 = vector.load %arg10[%c14, %c0_68] : memref<72x384xf32, #tpu.memory_space<vmem>>, vector<1x384xf32>
    %176 = vector.broadcast %175 : vector<1x384xf32> to vector<16x384xf32>
    %177 = arith.mulf %174, %176 : vector<16x384xf32>
    %c15 = arith.constant 15 : index
    %c0_69 = arith.constant 0 : index
    %178 = vector.load %arg10[%c15, %c0_69] : memref<72x384xf32, #tpu.memory_space<vmem>>, vector<1x384xf32>
    %179 = vector.broadcast %178 : vector<1x384xf32> to vector<16x384xf32>
    %180 = arith.addf %177, %179 : vector<16x384xf32>
    %cst_70 = arith.constant 0.000000e+00 : f32
    %cst_71 = arith.constant 6.000000e+00 : f32
    %181 = vector.broadcast %cst_70 : f32 to vector<16x384xf32>
    %182 = arith.maximumf %181, %180 : vector<16x384xf32>
    %183 = vector.broadcast %cst_71 : f32 to vector<16x384xf32>
    %184 = arith.minimumf %183, %182 : vector<16x384xf32>
    %185 = arith.truncf %184 : vector<16x384xf32> to vector<16x384xbf16>
    %c56 = arith.constant 56 : index
    %c0_72 = arith.constant 0 : index
    %186 = vector.load %arg10[%c56, %c0_72] : memref<72x384xf32, #tpu.memory_space<vmem>>, vector<16x384xf32>
    %187 = arith.extf %185 : vector<16x384xbf16> to vector<16x384xf32>
    %188 = arith.mulf %187, %186 : vector<16x384xf32>
    %cst_73 = arith.constant dense<0.000000e+00> : vector<384xf32>
    %189 = vector.multi_reduction <add>, %188, %cst_73 [0] : vector<16x384xf32> to vector<384xf32>
    %190 = vector.shape_cast %189 : vector<384xf32> to vector<1x384xf32>
    %c16 = arith.constant 16 : index
    %c0_74 = arith.constant 0 : index
    %191 = vector.load %arg10[%c16, %c0_74] : memref<72x384xf32, #tpu.memory_space<vmem>>, vector<1x384xf32>
    %192 = arith.mulf %190, %191 : vector<1x384xf32>
    %c17 = arith.constant 17 : index
    %c0_75 = arith.constant 0 : index
    %193 = vector.load %arg10[%c17, %c0_75] : memref<72x384xf32, #tpu.memory_space<vmem>>, vector<1x384xf32>
    %194 = arith.addf %192, %193 : vector<1x384xf32>
    %cst_76 = arith.constant 0.000000e+00 : f32
    %cst_77 = arith.constant 6.000000e+00 : f32
    %195 = vector.broadcast %cst_76 : f32 to vector<1x384xf32>
    %196 = arith.maximumf %195, %194 : vector<1x384xf32>
    %197 = vector.broadcast %cst_77 : f32 to vector<1x384xf32>
    %198 = arith.minimumf %197, %196 : vector<1x384xf32>
    %c18 = arith.constant 18 : index
    %c0_78 = arith.constant 0 : index
    %199 = vector.load %arg10[%c18, %c0_78] : memref<72x384xf32, #tpu.memory_space<vmem>>, vector<1x384xf32>
    %200 = arith.mulf %198, %199 : vector<1x384xf32>
    %cst_79 = arith.constant dense<0.000000e+00> : vector<1xf32>
    %201 = vector.multi_reduction <add>, %200, %cst_79 [1] : vector<1x384xf32> to vector<1xf32>
    %202 = vector.shape_cast %201 : vector<1xf32> to vector<1x1xf32>
    %c19 = arith.constant 19 : index
    %c0_80 = arith.constant 0 : index
    %203 = vector.load %arg10[%c19, %c0_80] : memref<72x384xf32, #tpu.memory_space<vmem>>, vector<1x1xf32>
    %204 = arith.addf %202, %203 : vector<1x1xf32>
    %205 = arith.negf %204 : vector<1x1xf32>
    %206 = math.exp %205 : vector<1x1xf32>
    %cst_81 = arith.constant 1.000000e+00 : f32
    %207 = vector.broadcast %cst_81 : f32 to vector<1x1xf32>
    %208 = arith.addf %207, %206 : vector<1x1xf32>
    %209 = arith.divf %207, %208 : vector<1x1xf32>
    %210 = vector.shape_cast %209 : vector<1x1xf32> to vector<1x1x1xf32>
    %c0_82 = arith.constant 0 : index
    %c0_83 = arith.constant 0 : index
    %c0_84 = arith.constant 0 : index
    %211 = vector.load %arg11[%c0_82, %c0_83, %c0_84] : memref<1x1x1xf32, #tpu.memory_space<vmem>>, vector<1x1x1xf32>
    tpu.vector_store %arg11[%c0_82, %c0_83, %c0_84], %210 {strides = array<i32>} : memref<1x1x1xf32, #tpu.memory_space<vmem>>, vector<1x1x1xf32>,
    return
  }
  func.func @transform_0(%arg0: i32) -> (i32, i32, i32) {
    %c0_i32 = arith.constant 0 : i32
    %c0_i32_0 = arith.constant 0 : i32
    %c0_i32_1 = arith.constant 0 : i32
    return %arg0, %c0_i32, %c0_i32_0 : i32, i32, i32
  }
  func.func @transform_1(%arg0: i32) -> (i32, i32) {
    %c0_i32 = arith.constant 0 : i32
    %c0_i32_0 = arith.constant 0 : i32
    %c0_i32_1 = arith.constant 0 : i32
    return %c0_i32, %c0_i32_0 : i32, i32
  }
  func.func @transform_2(%arg0: i32) -> (i32, i32) {
    %c0_i32 = arith.constant 0 : i32
    %c0_i32_0 = arith.constant 0 : i32
    %c0_i32_1 = arith.constant 0 : i32
    return %c0_i32, %c0_i32_0 : i32, i32
  }
  func.func @transform_3(%arg0: i32) -> (i32, i32) {
    %c0_i32 = arith.constant 0 : i32
    %c0_i32_0 = arith.constant 0 : i32
    %c0_i32_1 = arith.constant 0 : i32
    return %c0_i32, %c0_i32_0 : i32, i32
  }
  func.func @transform_4(%arg0: i32) -> (i32, i32) {
    %c0_i32 = arith.constant 0 : i32
    %c0_i32_0 = arith.constant 0 : i32
    %c0_i32_1 = arith.constant 0 : i32
    return %c0_i32, %c0_i32_0 : i32, i32
  }
  func.func @transform_5(%arg0: i32) -> (i32, i32) {
    %c0_i32 = arith.constant 0 : i32
    %c0_i32_0 = arith.constant 0 : i32
    %c0_i32_1 = arith.constant 0 : i32
    return %c0_i32, %c0_i32_0 : i32, i32
  }
  func.func @transform_6(%arg0: i32) -> (i32, i32) {
    %c0_i32 = arith.constant 0 : i32
    %c0_i32_0 = arith.constant 0 : i32
    %c0_i32_1 = arith.constant 0 : i32
    return %c0_i32, %c0_i32_0 : i32, i32
  }
  func.func @transform_7(%arg0: i32) -> (i32, i32) {
    %c0_i32 = arith.constant 0 : i32
    %c0_i32_0 = arith.constant 0 : i32
    %c0_i32_1 = arith.constant 0 : i32
    return %c0_i32, %c0_i32_0 : i32, i32
  }
  func.func @transform_8(%arg0: i32) -> (i32, i32) {
    %c0_i32 = arith.constant 0 : i32
    %c0_i32_0 = arith.constant 0 : i32
    %c0_i32_1 = arith.constant 0 : i32
    return %c0_i32, %c0_i32_0 : i32, i32
  }
  func.func @transform_9(%arg0: i32) -> (i32, i32) {
    %c0_i32 = arith.constant 0 : i32
    %c0_i32_0 = arith.constant 0 : i32
    %c0_i32_1 = arith.constant 0 : i32
    return %c0_i32, %c0_i32_0 : i32, i32
  }
  func.func @transform_10(%arg0: i32) -> (i32, i32, i32) {
    %c0_i32 = arith.constant 0 : i32
    %c0_i32_0 = arith.constant 0 : i32
    %c0_i32_1 = arith.constant 0 : i32
    return %arg0, %c0_i32, %c0_i32_0 : i32, i32, i32
  }
}

</mosaic_0001>

<llo_original>
// kernel: _lambda_.1
$region0: #{_lambda_.1}
  #allocation0 [shape = 'u32[]', space=smem, size = 0x4, offset = 0x4, fixed_abs, tag = 'smem constant byte address 0x4 - core index']
  #allocation1 [shape = 'u32[144,128]{1,0:T(1,128)}', space=vmem, size = 0x12000, scoped, tag = 'internal scratch']
  %s0 = inlined_call_operand.vmem [shape: bf16[2,256,32], index: 0, kind: input, shape index: {}]
  %s1 = inlined_call_operand.vmem [shape: bf16[32,32], index: 1, kind: input, shape index: {}]
  %s2 = inlined_call_operand.vmem [shape: bf16[32,192], index: 2, kind: input, shape index: {}]
  %s3 = inlined_call_operand.vmem [shape: bf16[192,32], index: 3, kind: input, shape index: {}]
  %s4 = inlined_call_operand.vmem [shape: bf16[32,192], index: 4, kind: input, shape index: {}]
  %s5 = inlined_call_operand.vmem [shape: bf16[192,64], index: 5, kind: input, shape index: {}]
  %s6 = inlined_call_operand.vmem [shape: bf16[64,384], index: 6, kind: input, shape index: {}]
  %s7 = inlined_call_operand.vmem [shape: bf16[504,256], index: 7, kind: input, shape index: {}]
  %s8 = inlined_call_operand.vmem [shape: bf16[144,56], index: 8, kind: input, shape index: {}]
  %s9 = inlined_call_operand.vmem [shape: f32[72,384], index: 9, kind: input, shape index: {}]
  %s10 = inlined_call_operand.vmem [shape: f32[2,1,1], index: 10, kind: output, shape index: {}]
  %s11 = sld [smem:[#allocation0]]
  $region73: #{_lambda_.1} parent=0
    _
  %s13 = ssub.s32 1, %s11
  %s14 = scalar_select 0, %s13, %s11
  loop: start=0, step=1, limit=4
  $region2: #{_lambda_.1} parent=0 // loop_pre_header
    _
  $region3: #{_lambda_.1} parent=0 // loop_header
    %s16 = sphi 0, %s20
    %p17 = scmp.ge.s32.totalorder %s16, 4
    %s26 = sphi 0, %s28
    %s29 = sphi 0, %s26
    %s30 = sphi 0, %s29
    %s46 = sphi 0, %s30
    %s50 = sphi 0, %s50
    %s52 = sphi 0, %s50
    %s53 = sphi 0, %s52
    %s67 = sphi 0, %s53
    %s71 = sphi 0, %s71
    %s73 = sphi 0, %s71
    %s74 = sphi 0, %s73
    %s88 = sphi 0, %s74
    %s92 = sphi 0, %s92
    %s94 = sphi 0, %s92
    %s95 = sphi 0, %s94
    %s109 = sphi 0, %s95
    %s113 = sphi 0, %s113
    %s115 = sphi 0, %s113
    %s116 = sphi 0, %s115
    %s130 = sphi 0, %s116
    %s134 = sphi 0, %s134
    %s136 = sphi 0, %s134
    %s137 = sphi 0, %s136
    %s151 = sphi 0, %s137
    %s155 = sphi 0, %s155
    %s157 = sphi 0, %s155
    %s158 = sphi 0, %s157
    %s172 = sphi 0, %s158
    %s176 = sphi 0, %s176
    %s178 = sphi 0, %s176
    %s179 = sphi 0, %s178
    %s193 = sphi 0, %s179
    %s197 = sphi 0, %s197
    %s199 = sphi 0, %s197
    %s200 = sphi 0, %s199
    %s214 = sphi 0, %s200
    %s218 = sphi 0, %s218
    %s220 = sphi 0, %s218
    %s221 = sphi 0, %s220
    %s235 = sphi 0, %s221
    %s241 = sphi 0, %s243
    %s244 = sphi 0, %s241
    %s245 = sphi 0, %s244
    %s261 = sphi 0, %s245
  $region4: #{_lambda_.1} parent=0 // loop_header_branch
    %19 = sbr.rel (%p17) target = $region8
  $region5: #{_lambda_.1} parent=0 // loop_body
    %s21 = ssub.s32 %s16, 1
    %s22 = ssub.s32 %s16, 2
    %s23 = sadd.s32 %s16, 1
    %s24 = ssub.s32 %s16, %s23
    %p25 = scmp.eq.s32.totalorder %s24, 0
    %s27 = sadd.s32 %s26, 1
    %s28 = scalar_select %p25, %s26, %s27
    %p31 = pneg %p25
    %p32 = scmp.eq.s32.totalorder %s16, 1
    %p33 = por %p31, %p32
    %p34 = scmp.ne.s32.totalorder %s26, %s29
    %p35 = scmp.eq.s32.totalorder %s16, 0
    %p36 = por %p34, %p35
    %p37 = scmp.ne.s32.totalorder %s26, %s29
    %p38 = scmp.eq.s32.totalorder %s21, 1
    %p39 = por %p37, %p38
    %p40 = scmp.ne.s32.totalorder %s29, %s30
    %p41 = scmp.eq.s32.totalorder %s21, 0
    %p42 = por %p40, %p41
    %p43 = scmp.ne.s32.totalorder %s29, %s30
    %p44 = scmp.eq.s32.totalorder %s22, 1
    %p45 = por %p43, %p44
    %p47 = scmp.ne.s32.totalorder %s30, %s46
    %p48 = scmp.eq.s32.totalorder %s22, 0
    %p49 = por %p47, %p48
    %s51 = sadd.s32 %s50, 1
    %p54 = scmp.eq.s32.totalorder %s16, 1
    %p55 = scmp.ne.s32.totalorder %s50, %s52
    %p56 = scmp.eq.s32.totalorder %s16, 0
    %p57 = por %p55, %p56
    %p58 = scmp.ne.s32.totalorder %s50, %s52
    %p59 = scmp.eq.s32.totalorder %s21, 1
    %p60 = por %p58, %p59
    %p61 = scmp.ne.s32.totalorder %s52, %s53
    %p62 = scmp.eq.s32.totalorder %s21, 0
    %p63 = por %p61, %p62
    %p64 = scmp.ne.s32.totalorder %s52, %s53
    %p65 = scmp.eq.s32.totalorder %s22, 1
    %p66 = por %p64, %p65
    %p68 = scmp.ne.s32.totalorder %s53, %s67
    %p69 = scmp.eq.s32.totalorder %s22, 0
    %p70 = por %p68, %p69
    %s72 = sadd.s32 %s71, 1
    %p75 = scmp.eq.s32.totalorder %s16, 1
    %p76 = scmp.ne.s32.totalorder %s71, %s73
    %p77 = scmp.eq.s32.totalorder %s16, 0
    %p78 = por %p76, %p77
    %p79 = scmp.ne.s32.totalorder %s71, %s73
    %p80 = scmp.eq.s32.totalorder %s21, 1
    %p81 = por %p79, %p80
    %p82 = scmp.ne.s32.totalorder %s73, %s74
    %p83 = scmp.eq.s32.totalorder %s21, 0
    %p84 = por %p82, %p83
    %p85 = scmp.ne.s32.totalorder %s73, %s74
    %p86 = scmp.eq.s32.totalorder %s22, 1
    %p87 = por %p85, %p86
    %p89 = scmp.ne.s32.totalorder %s74, %s88
    %p90 = scmp.eq.s32.totalorder %s22, 0
    %p91 = por %p89, %p90
    %s93 = sadd.s32 %s92, 1
    %p96 = scmp.eq.s32.totalorder %s16, 1
    %p97 = scmp.ne.s32.totalorder %s92, %s94
    %p98 = scmp.eq.s32.totalorder %s16, 0
    %p99 = por %p97, %p98
    %p100 = scmp.ne.s32.totalorder %s92, %s94
    %p101 = scmp.eq.s32.totalorder %s21, 1
    %p102 = por %p100, %p101
    %p103 = scmp.ne.s32.totalorder %s94, %s95
    %p104 = scmp.eq.s32.totalorder %s21, 0
    %p105 = por %p103, %p104
    %p106 = scmp.ne.s32.totalorder %s94, %s95
    %p107 = scmp.eq.s32.totalorder %s22, 1
    %p108 = por %p106, %p107
    %p110 = scmp.ne.s32.totalorder %s95, %s109
    %p111 = scmp.eq.s32.totalorder %s22, 0
    %p112 = por %p110, %p111
    %s114 = sadd.s32 %s113, 1
    %p117 = scmp.eq.s32.totalorder %s16, 1
    %p118 = scmp.ne.s32.totalorder %s113, %s115
    %p119 = scmp.eq.s32.totalorder %s16, 0
    %p120 = por %p118, %p119
    %p121 = scmp.ne.s32.totalorder %s113, %s115
    %p122 = scmp.eq.s32.totalorder %s21, 1
    %p123 = por %p121, %p122
    %p124 = scmp.ne.s32.totalorder %s115, %s116
    %p125 = scmp.eq.s32.totalorder %s21, 0
    %p126 = por %p124, %p125
    %p127 = scmp.ne.s32.totalorder %s115, %s116
    %p128 = scmp.eq.s32.totalorder %s22, 1
    %p129 = por %p127, %p128
    %p131 = scmp.ne.s32.totalorder %s116, %s130
    %p132 = scmp.eq.s32.totalorder %s22, 0
    %p133 = por %p131, %p132
    %s135 = sadd.s32 %s134, 1
    %p138 = scmp.eq.s32.totalorder %s16, 1
    %p139 = scmp.ne.s32.totalorder %s134, %s136
    %p140 = scmp.eq.s32.totalorder %s16, 0
    %p141 = por %p139, %p140
    %p142 = scmp.ne.s32.totalorder %s134, %s136
    %p143 = scmp.eq.s32.totalorder %s21, 1
    %p144 = por %p142, %p143
    %p145 = scmp.ne.s32.totalorder %s136, %s137
    %p146 = scmp.eq.s32.totalorder %s21, 0
    %p147 = por %p145, %p146
    %p148 = scmp.ne.s32.totalorder %s136, %s137
    %p149 = scmp.eq.s32.totalorder %s22, 1
    %p150 = por %p148, %p149
    %p152 = scmp.ne.s32.totalorder %s137, %s151
    %p153 = scmp.eq.s32.totalorder %s22, 0
    %p154 = por %p152, %p153
    %s156 = sadd.s32 %s155, 1
    %p159 = scmp.eq.s32.totalorder %s16, 1
    %p160 = scmp.ne.s32.totalorder %s155, %s157
    %p161 = scmp.eq.s32.totalorder %s16, 0
    %p162 = por %p160, %p161
    %p163 = scmp.ne.s32.totalorder %s155, %s157
    %p164 = scmp.eq.s32.totalorder %s21, 1
    %p165 = por %p163, %p164
    %p166 = scmp.ne.s32.totalorder %s157, %s158
    %p167 = scmp.eq.s32.totalorder %s21, 0
    %p168 = por %p166, %p167
    %p169 = scmp.ne.s32.totalorder %s157, %s158
    %p170 = scmp.eq.s32.totalorder %s22, 1
    %p171 = por %p169, %p170
    %p173 = scmp.ne.s32.totalorder %s158, %s172
    %p174 = scmp.eq.s32.totalorder %s22, 0
    %p175 = por %p173, %p174
    %s177 = sadd.s32 %s176, 1
    %p180 = scmp.eq.s32.totalorder %s16, 1
    %p181 = scmp.ne.s32.totalorder %s176, %s178
    %p182 = scmp.eq.s32.totalorder %s16, 0
    %p183 = por %p181, %p182
    %p184 = scmp.ne.s32.totalorder %s176, %s178
    %p185 = scmp.eq.s32.totalorder %s21, 1
    %p186 = por %p184, %p185
    %p187 = scmp.ne.s32.totalorder %s178, %s179
    %p188 = scmp.eq.s32.totalorder %s21, 0
    %p189 = por %p187, %p188
    %p190 = scmp.ne.s32.totalorder %s178, %s179
    %p191 = scmp.eq.s32.totalorder %s22, 1
    %p192 = por %p190, %p191
    %p194 = scmp.ne.s32.totalorder %s179, %s193
    %p195 = scmp.eq.s32.totalorder %s22, 0
    %p196 = por %p194, %p195
    %s198 = sadd.s32 %s197, 1
    %p201 = scmp.eq.s32.totalorder %s16, 1
    %p202 = scmp.ne.s32.totalorder %s197, %s199
    %p203 = scmp.eq.s32.totalorder %s16, 0
    %p204 = por %p202, %p203
    %p205 = scmp.ne.s32.totalorder %s197, %s199
    %p206 = scmp.eq.s32.totalorder %s21, 1
    %p207 = por %p205, %p206
    %p208 = scmp.ne.s32.totalorder %s199, %s200
    %p209 = scmp.eq.s32.totalorder %s21, 0
    %p210 = por %p208, %p209
    %p211 = scmp.ne.s32.totalorder %s199, %s200
    %p212 = scmp.eq.s32.totalorder %s22, 1
    %p213 = por %p211, %p212
    %p215 = scmp.ne.s32.totalorder %s200, %s214
    %p216 = scmp.eq.s32.totalorder %s22, 0
    %p217 = por %p215, %p216
    %s219 = sadd.s32 %s218, 1
    %p222 = scmp.eq.s32.totalorder %s16, 1
    %p223 = scmp.ne.s32.totalorder %s218, %s220
    %p224 = scmp.eq.s32.totalorder %s16, 0
    %p225 = por %p223, %p224
    %p226 = scmp.ne.s32.totalorder %s218, %s220
    %p227 = scmp.eq.s32.totalorder %s21, 1
    %p228 = por %p226, %p227
    %p229 = scmp.ne.s32.totalorder %s220, %s221
    %p230 = scmp.eq.s32.totalorder %s21, 0
    %p231 = por %p229, %p230
    %p232 = scmp.ne.s32.totalorder %s220, %s221
    %p233 = scmp.eq.s32.totalorder %s22, 1
    %p234 = por %p232, %p233
    %p236 = scmp.ne.s32.totalorder %s221, %s235
    %p237 = scmp.eq.s32.totalorder %s22, 0
    %p238 = por %p236, %p237
    %s239 = ssub.s32 %s16, %s23
    %p240 = scmp.eq.s32.totalorder %s239, 0
    %s242 = sadd.s32 %s241, 1
    %s243 = scalar_select %p240, %s241, %s242
    %p246 = pneg %p240
    %p247 = scmp.eq.s32.totalorder %s16, 1
    %p248 = por %p246, %p247
    %p249 = scmp.ne.s32.totalorder %s241, %s244
    %p250 = scmp.eq.s32.totalorder %s16, 0
    %p251 = por %p249, %p250
    %p252 = scmp.ne.s32.totalorder %s241, %s244
    %p253 = scmp.eq.s32.totalorder %s21, 1
    %p254 = por %p252, %p253
    %p255 = scmp.ne.s32.totalorder %s244, %s245
    %p256 = scmp.eq.s32.totalorder %s21, 0
    %p257 = por %p255, %p256
    %p258 = scmp.ne.s32.totalorder %s244, %s245
    %p259 = scmp.eq.s32.totalorder %s22, 1
    %p260 = por %p258, %p259
    %p262 = scmp.ne.s32.totalorder %s245, %s261
    %p263 = scmp.eq.s32.totalorder %s22, 0
    %p264 = por %p262, %p263
    %p265 = scmp.le.s32.totalorder 1, %s16
    %p266 = scmp.lt.s32.totalorder %s16, 3
    %p267 = pnand %p265, %p266
    %p268 = pneg %p267
    // Predicated region
    $region9: #{_lambda_.1} parent=5 // pred_check
      _
    $region10: #{_lambda_.1} parent=5 // pred_check_branch
      %270 = sbr.rel (%p267) target = $region12
    $region11: #{_lambda_.1} parent=5 // pred_region
      %s271 = ssub.s32 %s16, 1
      // Predicated region
      $region13: #{_lambda_.1} parent=11 // pred_check
        %p272 = pneg %p63
      $region14: #{_lambda_.1} parent=11 // pred_check_branch
        %274 = sbr.rel (%p272) target = $region16
      $region15: #{_lambda_.1} parent=11 // pred_region
        _
      $region16: #{_lambda_.1} parent=11 // pred_fallthru
        _
      // Predicated region
      $region17: #{_lambda_.1} parent=11 // pred_check
        %p275 = pneg %p84
      $region18: #{_lambda_.1} parent=11 // pred_check_branch
        %277 = sbr.rel (%p275) target = $region20
      $region19: #{_lambda_.1} parent=11 // pred_region
        _
      $region20: #{_lambda_.1} parent=11 // pred_fallthru
        _
      // Predicated region
      $region21: #{_lambda_.1} parent=11 // pred_check
        %p278 = pneg %p105
      $region22: #{_lambda_.1} parent=11 // pred_check_branch
        %280 = sbr.rel (%p278) target = $region24
      $region23: #{_lambda_.1} parent=11 // pred_region
        _
      $region24: #{_lambda_.1} parent=11 // pred_fallthru
        _
      // Predicated region
      $region25: #{_lambda_.1} parent=11 // pred_check
        %p281 = pneg %p126
      $region26: #{_lambda_.1} parent=11 // pred_check_branch
        %283 = sbr.rel (%p281) target = $region28
      $region27: #{_lambda_.1} parent=11 // pred_region
        _
      $region28: #{_lambda_.1} parent=11 // pred_fallthru
        _
      // Predicated region
      $region29: #{_lambda_.1} parent=11 // pred_check
        %p284 = pneg %p147
      $region30: #{_lambda_.1} parent=11 // pred_check_branch
        %286 = sbr.rel (%p284) target = $region32
      $region31: #{_lambda_.1} parent=11 // pred_region
        _
      $region32: #{_lambda_.1} parent=11 // pred_fallthru
        _
      // Predicated region
      $region33: #{_lambda_.1} parent=11 // pred_check
        %p287 = pneg %p168
      $region34: #{_lambda_.1} parent=11 // pred_check_branch
        %289 = sbr.rel (%p287) target = $region36
      $region35: #{_lambda_.1} parent=11 // pred_region
        _
      $region36: #{_lambda_.1} parent=11 // pred_fallthru
        _
      // Predicated region
      $region37: #{_lambda_.1} parent=11 // pred_check
        %p290 = pneg %p189
      $region38: #{_lambda_.1} parent=11 // pred_check_branch
        %292 = sbr.rel (%p290) target = $region40
      $region39: #{_lambda_.1} parent=11 // pred_region
        _
      $region40: #{_lambda_.1} parent=11 // pred_fallthru
        _
      // Predicated region
      $region41: #{_lambda_.1} parent=11 // pred_check
        %p293 = pneg %p210
      $region42: #{_lambda_.1} parent=11 // pred_check_branch
        %295 = sbr.rel (%p293) target = $region44
      $region43: #{_lambda_.1} parent=11 // pred_region
        _
      $region44: #{_lambda_.1} parent=11 // pred_fallthru
        _
      // Predicated region
      $region45: #{_lambda_.1} parent=11 // pred_check
        %p296 = pneg %p231
      $region46: #{_lambda_.1} parent=11 // pred_check_branch
        %298 = sbr.rel (%p296) target = $region48
      $region47: #{_lambda_.1} parent=11 // pred_region
        _
      $region48: #{_lambda_.1} parent=11 // pred_fallthru
        _
    $region12: #{_lambda_.1} parent=5 // pred_fallthru
      _
    %p299 = scmp.lt.s32.totalorder %s16, 2
    // Predicated region
    $region49: #{_lambda_.1} parent=5 // pred_check
      %p300 = pneg %p299
    $region50: #{_lambda_.1} parent=5 // pred_check_branch
      %302 = sbr.rel (%p300) target = $region52
    $region51: #{_lambda_.1} parent=5 // pred_region
      // Predicated region
      $region53: #{_lambda_.1} parent=51 // pred_check
        %p303 = pneg %p36
      $region54: #{_lambda_.1} parent=51 // pred_check_branch
        %305 = sbr.rel (%p303) target = $region56
      $region55: #{_lambda_.1} parent=51 // pred_region
        %p306 = scmp.lt.s32.totalorder %s16, 1
        %s307 = scalar_select %p306, %s16, 1
        %s308 = smul.addr %s307, 32
        %s309 = smul.addr %s308, 4
        %s310 = scalar_lea.vmem %s0, %s309
      $region56: #{_lambda_.1} parent=51 // pred_fallthru
        _
    $region52: #{_lambda_.1} parent=5 // pred_fallthru
      _
    %p311 = scmp.le.s32.totalorder 1, %s16
    %p312 = scmp.lt.s32.totalorder %s16, 3
    %p313 = pnand %p311, %p312
    %p314 = pneg %p313
    // Predicated region
    $region57: #{_lambda_.1} parent=5 // pred_check
      _
    $region58: #{_lambda_.1} parent=5 // pred_check_branch
      %316 = sbr.rel (%p313) target = $region60
    $region59: #{_lambda_.1} parent=5 // pred_region
      %s317 = ssub.s32 %s16, 1
      %p318 = scmp.lt.s32.totalorder %s21, 1
      %s319 = scalar_select %p318, %s21, 1
      %s320 = smul.addr %s319, 32
      %s321 = smul.addr %s320, 4
      %s322 = scalar_lea.vmem %s0, %s321
      %p323 = pneg %p42
      %p324 = pneg %p39
      %p325 = pneg %p63
      %p326 = pneg %p60
      %p327 = pneg %p84
      %p328 = pneg %p81
      %p329 = pneg %p105
      %p330 = pneg %p102
      %p331 = pneg %p126
      %p332 = pneg %p123
      %p333 = pneg %p147
      %p334 = pneg %p144
      %p335 = pneg %p168
      %p336 = pneg %p165
      %p337 = pneg %p189
      %p338 = pneg %p186
      %p339 = pneg %p210
      %p340 = pneg %p207
      %p341 = pneg %p231
      %p342 = pneg %p228
      %p343 = pneg %p257
      %p344 = pneg %p254
      %p345 = scmp.lt.s32.totalorder %s21, 1
      %s346 = scalar_select %p345, %s21, 1
      %s347 = scalar_lea.vmem %s10, %s346
      %p348 = scmp.lt.s32.totalorder %s21, 1
      %s349 = scalar_select %p348, %s21, 1
      %s350 = smul.addr %s349, 32
      %s351 = smul.addr %s350, 4
      %s352 = scalar_lea.vmem %s0, %s351
      %p353 = scmp.lt.s32.totalorder %s21, 1
      %s354 = scalar_select %p353, %s21, 1
      %s355 = scalar_lea.vmem %s10, %s354
      %v357 = vld [vmem:[%s352] sm:$0xf]
      %v358 = vld [vmem:[%s352 + $0x4] sm:$0xf]
      %v359 = vld [vmem:[%s352 + $0x8] sm:$0xf]
      %v360 = vld [vmem:[%s352 + $0xc] sm:$0xf]
      %v361 = vld [vmem:[%s352 + $0x10] sm:$0xf]
      %v362 = vld [vmem:[%s352 + $0x14] sm:$0xf]
      %v363 = vld [vmem:[%s352 + $0x18] sm:$0xf]
      %v364 = vld [vmem:[%s352 + $0x1c] sm:$0xf]
      %v365 = vld [vmem:[%s352 + $0x20] sm:$0xf]
      %v366 = vld [vmem:[%s352 + $0x24] sm:$0xf]
      %v367 = vld [vmem:[%s352 + $0x28] sm:$0xf]
      %v368 = vld [vmem:[%s352 + $0x2c] sm:$0xf]
      %v369 = vld [vmem:[%s352 + $0x30] sm:$0xf]
      %v370 = vld [vmem:[%s352 + $0x34] sm:$0xf]
      %v371 = vld [vmem:[%s352 + $0x38] sm:$0xf]
      %v372 = vld [vmem:[%s352 + $0x3c] sm:$0xf]
      %v373 = vld [vmem:[%s352 + $0x40] sm:$0xf]
      %v374 = vld [vmem:[%s352 + $0x44] sm:$0xf]
      %v375 = vld [vmem:[%s352 + $0x48] sm:$0xf]
      %v376 = vld [vmem:[%s352 + $0x4c] sm:$0xf]
      %v377 = vld [vmem:[%s352 + $0x50] sm:$0xf]
      %v378 = vld [vmem:[%s352 + $0x54] sm:$0xf]
      %v379 = vld [vmem:[%s352 + $0x58] sm:$0xf]
      %v380 = vld [vmem:[%s352 + $0x5c] sm:$0xf]
      %v381 = vld [vmem:[%s352 + $0x60] sm:$0xf]
      %v382 = vld [vmem:[%s352 + $0x64] sm:$0xf]
      %v383 = vld [vmem:[%s352 + $0x68] sm:$0xf]
      %v384 = vld [vmem:[%s352 + $0x6c] sm:$0xf]
      %v385 = vld [vmem:[%s352 + $0x70] sm:$0xf]
      %v386 = vld [vmem:[%s352 + $0x74] sm:$0xf]
      %v387 = vld [vmem:[%s352 + $0x78] sm:$0xf]
      %v388 = vld [vmem:[%s352 + $0x7c] sm:$0xf]
      %v389 = vld [vmem:[%s1] sm:$0xf]
      %v390 = vld [vmem:[%s1 + $0x4] sm:$0xf]
      %v391 = vld [vmem:[%s1 + $0x8] sm:$0xf]
      %v392 = vld [vmem:[%s1 + $0xc] sm:$0xf]
      %v425 = vunpack.c.l.b16 %v357
      %v426 = vunpack.c.l.b16 %v358
      %v427 = vunpack.c.l.b16 %v359
      %v428 = vunpack.c.l.b16 %v360
      %v429 = vunpack.c.l.b16 %v361
      %v430 = vunpack.c.l.b16 %v362
      %v431 = vunpack.c.l.b16 %v363
      %v432 = vunpack.c.l.b16 %v364
      %v433 = vunpack.c.l.b16 %v365
      %v434 = vunpack.c.l.b16 %v366
      %v435 = vunpack.c.l.b16 %v367
      %v436 = vunpack.c.l.b16 %v368
      %v437 = vunpack.c.l.b16 %v369
      %v438 = vunpack.c.l.b16 %v370
      %v439 = vunpack.c.l.b16 %v371
      %v440 = vunpack.c.l.b16 %v372
      %v441 = vunpack.c.l.b16 %v373
      %v442 = vunpack.c.l.b16 %v374
      %v443 = vunpack.c.l.b16 %v375
      %v444 = vunpack.c.l.b16 %v376
      %v445 = vunpack.c.l.b16 %v377
      %v446 = vunpack.c.l.b16 %v378
      %v447 = vunpack.c.l.b16 %v379
      %v448 = vunpack.c.l.b16 %v380
      %v449 = vunpack.c.l.b16 %v381
      %v450 = vunpack.c.l.b16 %v382
      %v451 = vunpack.c.l.b16 %v383
      %v452 = vunpack.c.l.b16 %v384
      %v453 = vunpack.c.l.b16 %v385
      %v454 = vunpack.c.l.b16 %v386
      %v455 = vunpack.c.l.b16 %v387
      %v456 = vunpack.c.l.b16 %v388
      %v457 = vpack.c.b16 %v426, %v425
      %v458 = vpack.c.b16 %v428, %v427
      %v459 = vpack.c.b16 %v430, %v429
      %v460 = vpack.c.b16 %v432, %v431
      %v461 = vpack.c.b16 %v434, %v433
      %v462 = vpack.c.b16 %v436, %v435
      %v463 = vpack.c.b16 %v438, %v437
      %v464 = vpack.c.b16 %v440, %v439
      %v465 = vpack.c.b16 %v442, %v441
      %v466 = vpack.c.b16 %v444, %v443
      %v467 = vpack.c.b16 %v446, %v445
      %v468 = vpack.c.b16 %v448, %v447
      %v469 = vpack.c.b16 %v450, %v449
      %v470 = vpack.c.b16 %v452, %v451
      %v471 = vpack.c.b16 %v454, %v453
      %v472 = vpack.c.b16 %v456, %v455
      %v477 = vunpack.c.l.b16 %v389
      %v478 = vunpack.c.l.b16 %v390
      %v479 = vunpack.c.l.b16 %v391
      %v480 = vunpack.c.l.b16 %v392
      %v481 = vpack.c.b16 %v478, %v477
      %v482 = vpack.c.b16 %v480, %v479
      %vm485 = vcmask 261120
      %v487 = vsel %vm485, %v457, 0
      %v490 = vsel %vm485, %v458, 0
      %v493 = vsel %vm485, %v459, 0
      %v496 = vsel %vm485, %v460, 0
      %v499 = vsel %vm485, %v461, 0
      %v502 = vsel %vm485, %v462, 0
      %v505 = vsel %vm485, %v463, 0
      %v508 = vsel %vm485, %v464, 0
      %v511 = vsel %vm485, %v465, 0
      %v514 = vsel %vm485, %v466, 0
      %v517 = vsel %vm485, %v467, 0
      %v520 = vsel %vm485, %v468, 0
      %v523 = vsel %vm485, %v469, 0
      %v526 = vsel %vm485, %v470, 0
      %v529 = vsel %vm485, %v471, 0
      %v532 = vsel %vm485, %v472, 0
      %534 = vmatprep.subr.bf16.mxu0 0
      %535 = vmatpush1.bf16.msra.mxu0 %v481
      %536 = vmatprep.subr.bf16.mxu0 0
      %537 = vmatpush1.bf16.msra.mxu0 %v482
      %538 = vmatprep.subr.bf16.mxu0 0
      %539 = vmatpush1.bf16.msra.mxu0 0
      %540 = vmatprep.subr.bf16.mxu0 0
      %541 = vmatpush1.bf16.msra.mxu0 0
      %542 = vmatprep.subr.bf16.mxu0 0
      %543 = vmatpush1.bf16.msra.mxu0 0
      %544 = vmatprep.subr.bf16.mxu0 0
      %545 = vmatpush1.bf16.msra.mxu0 0
      %546 = vmatprep.subr.bf16.mxu0 0
      %547 = vmatpush1.bf16.msra.mxu0 0
      %548 = vmatprep.subr.bf16.mxu0 0
      %549 = vmatpush1.bf16.msra.mxu0 0
      %550 = vmatprep.subr.bf16.mxu0 0
      %551 = vmatpush1.bf16.msra.mxu0 0
      %552 = vmatprep.subr.bf16.mxu0 0
      %553 = vmatpush1.bf16.msra.mxu0 0
      %554 = vmatprep.subr.bf16.mxu0 0
      %555 = vmatpush1.bf16.msra.mxu0 0
      %556 = vmatprep.subr.bf16.mxu0 0
      %557 = vmatpush1.bf16.msra.mxu0 0
      %558 = vmatprep.subr.bf16.mxu0 0
      %559 = vmatpush1.bf16.msra.mxu0 0
      %560 = vmatprep.subr.bf16.mxu0 0
      %561 = vmatpush1.bf16.msra.mxu0 0
      %562 = vmatprep.subr.bf16.mxu0 0
      %563 = vmatpush1.bf16.msra.mxu0 0
      %564 = vmatprep.subr.bf16.mxu0 0
      %565 = vmatpush1.bf16.msra.mxu0 0
      %566 = vmatprep.mubr.bf16.mxu0 0
      %567 = vmatmul.mubr.bf16.gmra.mrb[0].mxu0 %v487
      %v568 = vpop.f32.mrb[0].mxu0
      %v569 = vadd.f32 0.0, %v568
      %v570 = vpop.f32.mrb[0].mxu0
      %v571 = vpop.f32.mrb[0].mxu0
      %v572 = vadd.f32 0.0, %v571
      %v573 = vpop.f32.mrb[0].mxu0
      %574 = vmatprep.mubr.bf16.mxu0 0
      %575 = vmatmul.mubr.bf16.gmra.mrb[0].mxu0 %v490
      %v576 = vpop.f32.mrb[0].mxu0
      %v577 = vadd.f32 0.0, %v576
      %v578 = vpop.f32.mrb[0].mxu0
      %v579 = vpop.f32.mrb[0].mxu0
      %v580 = vadd.f32 0.0, %v579
      %v581 = vpop.f32.mrb[0].mxu0
      %582 = vmatprep.mubr.bf16.mxu0 0
      %583 = vmatmul.mubr.bf16.gmra.mrb[0].mxu0 %v493
      %v584 = vpop.f32.mrb[0].mxu0
      %v585 = vadd.f32 0.0, %v584
      %v586 = vpop.f32.mrb[0].mxu0
      %v587 = vpop.f32.mrb[0].mxu0
      %v588 = vadd.f32 0.0, %v587
      %v589 = vpop.f32.mrb[0].mxu0
      %590 = vmatprep.mubr.bf16.mxu0 0
      %591 = vmatmul.mubr.bf16.gmra.mrb[0].mxu0 %v496
      %v592 = vpop.f32.mrb[0].mxu0
      %v593 = vadd.f32 0.0, %v592
      %v594 = vpop.f32.mrb[0].mxu0
      %v595 = vpop.f32.mrb[0].mxu0
      %v596 = vadd.f32 0.0, %v595
      %v597 = vpop.f32.mrb[0].mxu0
      %598 = vmatprep.mubr.bf16.mxu0 0
      %599 = vmatmul.mubr.bf16.gmra.mrb[0].mxu0 %v499
      %v600 = vpop.f32.mrb[0].mxu0
      %v601 = vadd.f32 0.0, %v600
      %v602 = vpop.f32.mrb[0].mxu0
      %v603 = vpop.f32.mrb[0].mxu0
      %v604 = vadd.f32 0.0, %v603
      %v605 = vpop.f32.mrb[0].mxu0
      %606 = vmatprep.mubr.bf16.mxu0 0
      %607 = vmatmul.mubr.bf16.gmra.mrb[0].mxu0 %v502
      %v608 = vpop.f32.mrb[0].mxu0
      %v609 = vadd.f32 0.0, %v608
      %v610 = vpop.f32.mrb[0].mxu0
      %v611 = vpop.f32.mrb[0].mxu0
      %v612 = vadd.f32 0.0, %v611
      %v613 = vpop.f32.mrb[0].mxu0
      %614 = vmatprep.mubr.bf16.mxu0 0
      %615 = vmatmul.mubr.bf16.gmra.mrb[0].mxu0 %v505
      %v616 = vpop.f32.mrb[0].mxu0
      %v617 = vadd.f32 0.0, %v616
      %v618 = vpop.f32.mrb[0].mxu0
      %v619 = vpop.f32.mrb[0].mxu0
      %v620 = vadd.f32 0.0, %v619
      %v621 = vpop.f32.mrb[0].mxu0
      %622 = vmatprep.mubr.bf16.mxu0 0
      %623 = vmatmul.mubr.bf16.gmra.mrb[0].mxu0 %v508
      %v624 = vpop.f32.mrb[0].mxu0
      %v625 = vadd.f32 0.0, %v624
      %v626 = vpop.f32.mrb[0].mxu0
      %v627 = vpop.f32.mrb[0].mxu0
      %v628 = vadd.f32 0.0, %v627
      %v629 = vpop.f32.mrb[0].mxu0
      %630 = vmatprep.mubr.bf16.mxu0 0
      %631 = vmatmul.mubr.bf16.gmra.mrb[0].mxu0 %v511
      %v632 = vpop.f32.mrb[0].mxu0
      %v633 = vadd.f32 0.0, %v632
      %v634 = vpop.f32.mrb[0].mxu0
      %v635 = vpop.f32.mrb[0].mxu0
      %v636 = vadd.f32 0.0, %v635
      %v637 = vpop.f32.mrb[0].mxu0
      %638 = vmatprep.mubr.bf16.mxu0 0
      %639 = vmatmul.mubr.bf16.gmra.mrb[0].mxu0 %v514
      %v640 = vpop.f32.mrb[0].mxu0
      %v641 = vadd.f32 0.0, %v640
      %v642 = vpop.f32.mrb[0].mxu0
      %v643 = vpop.f32.mrb[0].mxu0
      %v644 = vadd.f32 0.0, %v643
      %v645 = vpop.f32.mrb[0].mxu0
      %646 = vmatprep.mubr.bf16.mxu0 0
      %647 = vmatmul.mubr.bf16.gmra.mrb[0].mxu0 %v517
      %v648 = vpop.f32.mrb[0].mxu0
      %v649 = vadd.f32 0.0, %v648
      %v650 = vpop.f32.mrb[0].mxu0
      %v651 = vpop.f32.mrb[0].mxu0
      %v652 = vadd.f32 0.0, %v651
      %v653 = vpop.f32.mrb[0].mxu0
      %654 = vmatprep.mubr.bf16.mxu0 0
      %655 = vmatmul.mubr.bf16.gmra.mrb[0].mxu0 %v520
      %v656 = vpop.f32.mrb[0].mxu0
      %v657 = vadd.f32 0.0, %v656
      %v658 = vpop.f32.mrb[0].mxu0
      %v659 = vpop.f32.mrb[0].mxu0
      %v660 = vadd.f32 0.0, %v659
      %v661 = vpop.f32.mrb[0].mxu0
      %662 = vmatprep.mubr.bf16.mxu0 0
      %663 = vmatmul.mubr.bf16.gmra.mrb[0].mxu0 %v523
      %v664 = vpop.f32.mrb[0].mxu0
      %v665 = vadd.f32 0.0, %v664
      %v666 = vpop.f32.mrb[0].mxu0
      %v667 = vpop.f32.mrb[0].mxu0
      %v668 = vadd.f32 0.0, %v667
      %v669 = vpop.f32.mrb[0].mxu0
      %670 = vmatprep.mubr.bf16.mxu0 0
      %671 = vmatmul.mubr.bf16.gmra.mrb[0].mxu0 %v526
      %v672 = vpop.f32.mrb[0].mxu0
      %v673 = vadd.f32 0.0, %v672
      %v674 = vpop.f32.mrb[0].mxu0
      %v675 = vpop.f32.mrb[0].mxu0
      %v676 = vadd.f32 0.0, %v675
      %v677 = vpop.f32.mrb[0].mxu0
      %678 = vmatprep.mubr.bf16.mxu0 0
      %679 = vmatmul.mubr.bf16.gmra.mrb[0].mxu0 %v529
      %v680 = vpop.f32.mrb[0].mxu0
      %v681 = vadd.f32 0.0, %v680
      %v682 = vpop.f32.mrb[0].mxu0
      %v683 = vpop.f32.mrb[0].mxu0
      %v684 = vadd.f32 0.0, %v683
      %v685 = vpop.f32.mrb[0].mxu0
      %686 = vmatprep.mubr.bf16.mxu0 0
      %687 = vmatmul.mubr.bf16.gmra.mrb[0].mxu0 %v532
      %v688 = vpop.f32.mrb[0].mxu0
      %v689 = vadd.f32 0.0, %v688
      %v690 = vpop.f32.mrb[0].mxu0
      %v691 = vpop.f32.mrb[0].mxu0
      %v692 = vadd.f32 0.0, %v691
      %v693 = vpop.f32.mrb[0].mxu0
      %694 = vdwg.mxu0
      %v695 = vld [vmem:[%s9] ss:$0 sm:$0xff]
      %v696 = vmul.f32 %v569, %v695
      %v697 = vmul.f32 %v572, %v695
      %v698 = vmul.f32 %v577, %v695
      %v699 = vmul.f32 %v580, %v695
      %v700 = vmul.f32 %v585, %v695
      %v701 = vmul.f32 %v588, %v695
      %v702 = vmul.f32 %v593, %v695
      %v703 = vmul.f32 %v596, %v695
      %v704 = vmul.f32 %v601, %v695
      %v705 = vmul.f32 %v604, %v695
      %v706 = vmul.f32 %v609, %v695
      %v707 = vmul.f32 %v612, %v695
      %v708 = vmul.f32 %v617, %v695
      %v709 = vmul.f32 %v620, %v695
      %v710 = vmul.f32 %v625, %v695
      %v711 = vmul.f32 %v628, %v695
      %v712 = vmul.f32 %v633, %v695
      %v713 = vmul.f32 %v636, %v695
      %v714 = vmul.f32 %v641, %v695
      %v715 = vmul.f32 %v644, %v695
      %v716 = vmul.f32 %v649, %v695
      %v717 = vmul.f32 %v652, %v695
      %v718 = vmul.f32 %v657, %v695
      %v719 = vmul.f32 %v660, %v695
      %v720 = vmul.f32 %v665, %v695
      %v721 = vmul.f32 %v668, %v695
      %v722 = vmul.f32 %v673, %v695
      %v723 = vmul.f32 %v676, %v695
      %v724 = vmul.f32 %v681, %v695
      %v725 = vmul.f32 %v684, %v695
      %v726 = vmul.f32 %v689, %v695
      %v727 = vmul.f32 %v692, %v695
      %v728 = vld [vmem:[%s9 + $0x1] ss:$0 sm:$0xff]
      %v729 = vadd.f32 %v696, %v728
      %v730 = vadd.f32 %v697, %v728
      %v731 = vadd.f32 %v698, %v728
      %v732 = vadd.f32 %v699, %v728
      %v733 = vadd.f32 %v700, %v728
      %v734 = vadd.f32 %v701, %v728
      %v735 = vadd.f32 %v702, %v728
      %v736 = vadd.f32 %v703, %v728
      %v737 = vadd.f32 %v704, %v728
      %v738 = vadd.f32 %v705, %v728
      %v739 = vadd.f32 %v706, %v728
      %v740 = vadd.f32 %v707, %v728
      %v741 = vadd.f32 %v708, %v728
      %v742 = vadd.f32 %v709, %v728
      %v743 = vadd.f32 %v710, %v728
      %v744 = vadd.f32 %v711, %v728
      %v745 = vadd.f32 %v712, %v728
      %v746 = vadd.f32 %v713, %v728
      %v747 = vadd.f32 %v714, %v728
      %v748 = vadd.f32 %v715, %v728
      %v749 = vadd.f32 %v716, %v728
      %v750 = vadd.f32 %v717, %v728
      %v751 = vadd.f32 %v718, %v728
      %v752 = vadd.f32 %v719, %v728
      %v753 = vadd.f32 %v720, %v728
      %v754 = vadd.f32 %v721, %v728
      %v755 = vadd.f32 %v722, %v728
      %v756 = vadd.f32 %v723, %v728
      %v757 = vadd.f32 %v724, %v728
      %v758 = vadd.f32 %v725, %v728
      %v759 = vadd.f32 %v726, %v728
      %v760 = vadd.f32 %v727, %v728
      %v761 = vmax.f32 %v729, 0.0
      %v762 = vmax.f32 %v730, 0.0
      %v763 = vmax.f32 %v731, 0.0
      %v764 = vmax.f32 %v732, 0.0
      %v765 = vmax.f32 %v733, 0.0
      %v766 = vmax.f32 %v734, 0.0
      %v767 = vmax.f32 %v735, 0.0
      %v768 = vmax.f32 %v736, 0.0
      %v769 = vmax.f32 %v737, 0.0
      %v770 = vmax.f32 %v738, 0.0
      %v771 = vmax.f32 %v739, 0.0
      %v772 = vmax.f32 %v740, 0.0
      %v773 = vmax.f32 %v741, 0.0
      %v774 = vmax.f32 %v742, 0.0
      %v775 = vmax.f32 %v743, 0.0
      %v776 = vmax.f32 %v744, 0.0
      %v777 = vmax.f32 %v745, 0.0
      %v778 = vmax.f32 %v746, 0.0
      %v779 = vmax.f32 %v747, 0.0
      %v780 = vmax.f32 %v748, 0.0
      %v781 = vmax.f32 %v749, 0.0
      %v782 = vmax.f32 %v750, 0.0
      %v783 = vmax.f32 %v751, 0.0
      %v784 = vmax.f32 %v752, 0.0
      %v785 = vmax.f32 %v753, 0.0
      %v786 = vmax.f32 %v754, 0.0
      %v787 = vmax.f32 %v755, 0.0
      %v788 = vmax.f32 %v756, 0.0
      %v789 = vmax.f32 %v757, 0.0
      %v790 = vmax.f32 %v758, 0.0
      %v791 = vmax.f32 %v759, 0.0
      %v792 = vmax.f32 %v760, 0.0
      %v793 = vmin.f32 %v761, 6.0
      %v794 = vmin.f32 %v762, 6.0
      %v795 = vmin.f32 %v763, 6.0
      %v796 = vmin.f32 %v764, 6.0
      %v797 = vmin.f32 %v765, 6.0
      %v798 = vmin.f32 %v766, 6.0
      %v799 = vmin.f32 %v767, 6.0
      %v800 = vmin.f32 %v768, 6.0
      %v801 = vmin.f32 %v769, 6.0
      %v802 = vmin.f32 %v770, 6.0
      %v803 = vmin.f32 %v771, 6.0
      %v804 = vmin.f32 %v772, 6.0
      %v805 = vmin.f32 %v773, 6.0
      %v806 = vmin.f32 %v774, 6.0
      %v807 = vmin.f32 %v775, 6.0
      %v808 = vmin.f32 %v776, 6.0
      %v809 = vmin.f32 %v777, 6.0
      %v810 = vmin.f32 %v778, 6.0
      %v811 = vmin.f32 %v779, 6.0
      %v812 = vmin.f32 %v780, 6.0
      %v813 = vmin.f32 %v781, 6.0
      %v814 = vmin.f32 %v782, 6.0
      %v815 = vmin.f32 %v783, 6.0
      %v816 = vmin.f32 %v784, 6.0
      %v817 = vmin.f32 %v785, 6.0
      %v818 = vmin.f32 %v786, 6.0
      %v819 = vmin.f32 %v787, 6.0
      %v820 = vmin.f32 %v788, 6.0
      %v821 = vmin.f32 %v789, 6.0
      %v822 = vmin.f32 %v790, 6.0
      %v823 = vmin.f32 %v791, 6.0
      %v824 = vmin.f32 %v792, 6.0
      %v825 = vpack.c.bf16 %v794, %v793
      %v826 = vpack.c.bf16 %v796, %v795
      %v827 = vpack.c.bf16 %v798, %v797
      %v828 = vpack.c.bf16 %v800, %v799
      %v829 = vpack.c.bf16 %v802, %v801
      %v830 = vpack.c.bf16 %v804, %v803
      %v831 = vpack.c.bf16 %v806, %v805
      %v832 = vpack.c.bf16 %v808, %v807
      %v833 = vpack.c.bf16 %v810, %v809
      %v834 = vpack.c.bf16 %v812, %v811
      %v835 = vpack.c.bf16 %v814, %v813
      %v836 = vpack.c.bf16 %v816, %v815
      %v837 = vpack.c.bf16 %v818, %v817
      %v838 = vpack.c.bf16 %v820, %v819
      %v839 = vpack.c.bf16 %v822, %v821
      %v840 = vpack.c.bf16 %v824, %v823
      %v841 = vld [vmem:[%s2] sm:$0xff]
      %v842 = vld [vmem:[%s2 + $0x8] sm:$0xff]
      %v843 = vld [vmem:[%s2 + $0x10] sm:$0xff]
      %v844 = vld [vmem:[%s2 + $0x18] sm:$0xff]
      %v849 = vunpack.c.l.b16 %v841
      %v850 = vunpack.c.h.b16 %v841
      %v851 = vunpack.c.l.b16 %v842
      %v852 = vunpack.c.h.b16 %v842
      %v853 = vunpack.c.l.b16 %v843
      %v854 = vunpack.c.h.b16 %v843
      %v855 = vunpack.c.l.b16 %v844
      %v856 = vunpack.c.h.b16 %v844
      %v857 = vpack.c.b16 %v851, %v849
      %v858 = vpack.c.b16 %v852, %v850
      %v859 = vpack.c.b16 %v855, %v853
      %v860 = vpack.c.b16 %v856, %v854
      %v866 = vsel %vm485, %v825, 0
      %v869 = vsel %vm485, %v826, 0
      %v872 = vsel %vm485, %v827, 0
      %v875 = vsel %vm485, %v828, 0
      %v878 = vsel %vm485, %v829, 0
      %v881 = vsel %vm485, %v830, 0
      %v884 = vsel %vm485, %v831, 0
      %v887 = vsel %vm485, %v832, 0
      %v890 = vsel %vm485, %v833, 0
      %v893 = vsel %vm485, %v834, 0
      %v896 = vsel %vm485, %v835, 0
      %v899 = vsel %vm485, %v836, 0
      %v902 = vsel %vm485, %v837, 0
      %v905 = vsel %vm485, %v838, 0
      %v908 = vsel %vm485, %v839, 0
      %v911 = vsel %vm485, %v840, 0
      %913 = vmatprep.subr.bf16.mxu0 %v858
      %914 = vmatpush1.bf16.msra.mxu0 %v857
      %915 = vmatprep.subr.bf16.mxu0 %v860
      %916 = vmatpush1.bf16.msra.mxu0 %v859
      %917 = vmatprep.subr.bf16.mxu0 0
      %918 = vmatpush1.bf16.msra.mxu0 0
      %919 = vmatprep.subr.bf16.mxu0 0
      %920 = vmatpush1.bf16.msra.mxu0 0
      %921 = vmatprep.subr.bf16.mxu0 0
      %922 = vmatpush1.bf16.msra.mxu0 0
      %923 = vmatprep.subr.bf16.mxu0 0
      %924 = vmatpush1.bf16.msra.mxu0 0
      %925 = vmatprep.subr.bf16.mxu0 0
      %926 = vmatpush1.bf16.msra.mxu0 0
      %927 = vmatprep.subr.bf16.mxu0 0
      %928 = vmatpush1.bf16.msra.mxu0 0
      %929 = vmatprep.subr.bf16.mxu0 0
      %930 = vmatpush1.bf16.msra.mxu0 0
      %931 = vmatprep.subr.bf16.mxu0 0
      %932 = vmatpush1.bf16.msra.mxu0 0
      %933 = vmatprep.subr.bf16.mxu0 0
      %934 = vmatpush1.bf16.msra.mxu0 0
      %935 = vmatprep.subr.bf16.mxu0 0
      %936 = vmatpush1.bf16.msra.mxu0 0
      %937 = vmatprep.subr.bf16.mxu0 0
      %938 = vmatpush1.bf16.msra.mxu0 0
      %939 = vmatprep.subr.bf16.mxu0 0
      %940 = vmatpush1.bf16.msra.mxu0 0
      %941 = vmatprep.subr.bf16.mxu0 0
      %942 = vmatpush1.bf16.msra.mxu0 0
      %943 = vmatprep.subr.bf16.mxu0 0
      %944 = vmatpush1.bf16.msra.mxu0 0
      %945 = vmatprep.mubr.bf16.mxu0 0
      %946 = vmatmul.mubr.bf16.gmra.mrb[0].mxu0 %v866
      %v947 = vpop.f32.mrb[0].mxu0
      %v948 = vadd.f32 0.0, %v947
      %v949 = vpop.f32.mrb[0].mxu0
      %v950 = vadd.f32 0.0, %v949
      %v951 = vpop.f32.mrb[0].mxu0
      %v952 = vadd.f32 0.0, %v951
      %v953 = vpop.f32.mrb[0].mxu0
      %v954 = vadd.f32 0.0, %v953
      %955 = vmatprep.mubr.bf16.mxu0 0
      %956 = vmatmul.mubr.bf16.gmra.mrb[0].mxu0 %v869
      %v957 = vpop.f32.mrb[0].mxu0
      %v958 = vadd.f32 0.0, %v957
      %v959 = vpop.f32.mrb[0].mxu0
      %v960 = vadd.f32 0.0, %v959
      %v961 = vpop.f32.mrb[0].mxu0
      %v962 = vadd.f32 0.0, %v961
      %v963 = vpop.f32.mrb[0].mxu0
      %v964 = vadd.f32 0.0, %v963
      %965 = vmatprep.mubr.bf16.mxu0 0
      %966 = vmatmul.mubr.bf16.gmra.mrb[0].mxu0 %v872
      %v967 = vpop.f32.mrb[0].mxu0
      %v968 = vadd.f32 0.0, %v967
      %v969 = vpop.f32.mrb[0].mxu0
      %v970 = vadd.f32 0.0, %v969
      %v971 = vpop.f32.mrb[0].mxu0
      %v972 = vadd.f32 0.0, %v971
      %v973 = vpop.f32.mrb[0].mxu0
      %v974 = vadd.f32 0.0, %v973
      %975 = vmatprep.mubr.bf16.mxu0 0
      %976 = vmatmul.mubr.bf16.gmra.mrb[0].mxu0 %v875
      %v977 = vpop.f32.mrb[0].mxu0
      %v978 = vadd.f32 0.0, %v977
      %v979 = vpop.f32.mrb[0].mxu0
      %v980 = vadd.f32 0.0, %v979
      %v981 = vpop.f32.mrb[0].mxu0
      %v982 = vadd.f32 0.0, %v981
      %v983 = vpop.f32.mrb[0].mxu0
      %v984 = vadd.f32 0.0, %v983
      %985 = vmatprep.mubr.bf16.mxu0 0
      %986 = vmatmul.mubr.bf16.gmra.mrb[0].mxu0 %v878
      %v987 = vpop.f32.mrb[0].mxu0
      %v988 = vadd.f32 0.0, %v987
      %v989 = vpop.f32.mrb[0].mxu0
      %v990 = vadd.f32 0.0, %v989
      %v991 = vpop.f32.mrb[0].mxu0
      %v992 = vadd.f32 0.0, %v991
      %v993 = vpop.f32.mrb[0].mxu0
      %v994 = vadd.f32 0.0, %v993
      %995 = vmatprep.mubr.bf16.mxu0 0
      %996 = vmatmul.mubr.bf16.gmra.mrb[0].mxu0 %v881
      %v997 = vpop.f32.mrb[0].mxu0
      %v998 = vadd.f32 0.0, %v997
      %v999 = vpop.f32.mrb[0].mxu0
      %v1000 = vadd.f32 0.0, %v999
      %v1001 = vpop.f32.mrb[0].mxu0
      %v1002 = vadd.f32 0.0, %v1001
      %v1003 = vpop.f32.mrb[0].mxu0
      %v1004 = vadd.f32 0.0, %v1003
      %1005 = vmatprep.mubr.bf16.mxu0 0
      %1006 = vmatmul.mubr.bf16.gmra.mrb[0].mxu0 %v884
      %v1007 = vpop.f32.mrb[0].mxu0
      %v1008 = vadd.f32 0.0, %v1007
      %v1009 = vpop.f32.mrb[0].mxu0
      %v1010 = vadd.f32 0.0, %v1009
      %v1011 = vpop.f32.mrb[0].mxu0
      %v1012 = vadd.f32 0.0, %v1011
      %v1013 = vpop.f32.mrb[0].mxu0
      %v1014 = vadd.f32 0.0, %v1013
      %1015 = vmatprep.mubr.bf16.mxu0 0
      %1016 = vmatmul.mubr.bf16.gmra.mrb[0].mxu0 %v887
      %v1017 = vpop.f32.mrb[0].mxu0
      %v1018 = vadd.f32 0.0, %v1017
      %v1019 = vpop.f32.mrb[0].mxu0
      %v1020 = vadd.f32 0.0, %v1019
      %v1021 = vpop.f32.mrb[0].mxu0
      %v1022 = vadd.f32 0.0, %v1021
      %v1023 = vpop.f32.mrb[0].mxu0
      %v1024 = vadd.f32 0.0, %v1023
      %1025 = vmatprep.mubr.bf16.mxu0 0
      %1026 = vmatmul.mubr.bf16.gmra.mrb[0].mxu0 %v890
      %v1027 = vpop.f32.mrb[0].mxu0
      %v1028 = vadd.f32 0.0, %v1027
      %v1029 = vpop.f32.mrb[0].mxu0
      %v1030 = vadd.f32 0.0, %v1029
      %v1031 = vpop.f32.mrb[0].mxu0
      %v1032 = vadd.f32 0.0, %v1031
      %v1033 = vpop.f32.mrb[0].mxu0
      %v1034 = vadd.f32 0.0, %v1033
      %1035 = vmatprep.mubr.bf16.mxu0 0
      %1036 = vmatmul.mubr.bf16.gmra.mrb[0].mxu0 %v893
      %v1037 = vpop.f32.mrb[0].mxu0
      %v1038 = vadd.f32 0.0, %v1037
      %v1039 = vpop.f32.mrb[0].mxu0
      %v1040 = vadd.f32 0.0, %v1039
      %v1041 = vpop.f32.mrb[0].mxu0
      %v1042 = vadd.f32 0.0, %v1041
      %v1043 = vpop.f32.mrb[0].mxu0
      %v1044 = vadd.f32 0.0, %v1043
      %1045 = vmatprep.mubr.bf16.mxu0 0
      %1046 = vmatmul.mubr.bf16.gmra.mrb[0].mxu0 %v896
      %v1047 = vpop.f32.mrb[0].mxu0
      %v1048 = vadd.f32 0.0, %v1047
      %v1049 = vpop.f32.mrb[0].mxu0
      %v1050 = vadd.f32 0.0, %v1049
      %v1051 = vpop.f32.mrb[0].mxu0
      %v1052 = vadd.f32 0.0, %v1051
      %v1053 = vpop.f32.mrb[0].mxu0
      %v1054 = vadd.f32 0.0, %v1053
      %1055 = vmatprep.mubr.bf16.mxu0 0
      %1056 = vmatmul.mubr.bf16.gmra.mrb[0].mxu0 %v899
      %v1057 = vpop.f32.mrb[0].mxu0
      %v1058 = vadd.f32 0.0, %v1057
      %v1059 = vpop.f32.mrb[0].mxu0
      %v1060 = vadd.f32 0.0, %v1059
      %v1061 = vpop.f32.mrb[0].mxu0
      %v1062 = vadd.f32 0.0, %v1061
      %v1063 = vpop.f32.mrb[0].mxu0
      %v1064 = vadd.f32 0.0, %v1063
      %1065 = vmatprep.mubr.bf16.mxu0 0
      %1066 = vmatmul.mubr.bf16.gmra.mrb[0].mxu0 %v902
      %v1067 = vpop.f32.mrb[0].mxu0
      %v1068 = vadd.f32 0.0, %v1067
      %v1069 = vpop.f32.mrb[0].mxu0
      %v1070 = vadd.f32 0.0, %v1069
      %v1071 = vpop.f32.mrb[0].mxu0
      %v1072 = vadd.f32 0.0, %v1071
      %v1073 = vpop.f32.mrb[0].mxu0
      %v1074 = vadd.f32 0.0, %v1073
      %1075 = vmatprep.mubr.bf16.mxu0 0
      %1076 = vmatmul.mubr.bf16.gmra.mrb[0].mxu0 %v905
      %v1077 = vpop.f32.mrb[0].mxu0
      %v1078 = vadd.f32 0.0, %v1077
      %v1079 = vpop.f32.mrb[0].mxu0
      %v1080 = vadd.f32 0.0, %v1079
      %v1081 = vpop.f32.mrb[0].mxu0
      %v1082 = vadd.f32 0.0, %v1081
      %v1083 = vpop.f32.mrb[0].mxu0
      %v1084 = vadd.f32 0.0, %v1083
      %1085 = vmatprep.mubr.bf16.mxu0 0
      %1086 = vmatmul.mubr.bf16.gmra.mrb[0].mxu0 %v908
      %v1087 = vpop.f32.mrb[0].mxu0
      %v1088 = vadd.f32 0.0, %v1087
      %v1089 = vpop.f32.mrb[0].mxu0
      %v1090 = vadd.f32 0.0, %v1089
      %v1091 = vpop.f32.mrb[0].mxu0
      %v1092 = vadd.f32 0.0, %v1091
      %v1093 = vpop.f32.mrb[0].mxu0
      %v1094 = vadd.f32 0.0, %v1093
      %1095 = vmatprep.mubr.bf16.mxu0 0
      %1096 = vmatmul.mubr.bf16.gmra.mrb[0].mxu0 %v911
      %v1097 = vpop.f32.mrb[0].mxu0
      %v1098 = vadd.f32 0.0, %v1097
      %v1099 = vpop.f32.mrb[0].mxu0
      %v1100 = vadd.f32 0.0, %v1099
      %v1101 = vpop.f32.mrb[0].mxu0
      %v1102 = vadd.f32 0.0, %v1101
      %v1103 = vpop.f32.mrb[0].mxu0
      %v1104 = vadd.f32 0.0, %v1103
      %1105 = vdwg.mxu0
      %s1106 = scalar_lea.vmem %s9, 2
      %v1107 = vld [vmem:[%s1106] ss:$8 sm:$0x3]
      %v1109 = vlaneseq
      %v1110 = vshrl.u32 %v1109, 7
      %v1111 = vsub.s32 0, %v1110
      %v1112 = vrot.slane %v1107, %v1111
      %v1113 = vlaneseq
      %v1114 = vshrl.u32 %v1113, 7
      %v1115 = vsub.s32 1, %v1114
      %v1116 = vrot.slane %v1107, %v1115
      %v1119 = vmul.f32 %v948, %v1112
      %v1120 = vmul.f32 %v950, %v1116
      %v1121 = vmul.f32 %v952, %v1112
      %v1122 = vmul.f32 %v954, %v1116
      %v1123 = vmul.f32 %v958, %v1112
      %v1124 = vmul.f32 %v960, %v1116
      %v1125 = vmul.f32 %v962, %v1112
      %v1126 = vmul.f32 %v964, %v1116
      %v1127 = vmul.f32 %v968, %v1112
      %v1128 = vmul.f32 %v970, %v1116
      %v1129 = vmul.f32 %v972, %v1112
      %v1130 = vmul.f32 %v974, %v1116
      %v1131 = vmul.f32 %v978, %v1112
      %v1132 = vmul.f32 %v980, %v1116
      %v1133 = vmul.f32 %v982, %v1112
      %v1134 = vmul.f32 %v984, %v1116
      %v1135 = vmul.f32 %v988, %v1112
      %v1136 = vmul.f32 %v990, %v1116
      %v1137 = vmul.f32 %v992, %v1112
      %v1138 = vmul.f32 %v994, %v1116
      %v1139 = vmul.f32 %v998, %v1112
      %v1140 = vmul.f32 %v1000, %v1116
      %v1141 = vmul.f32 %v1002, %v1112
      %v1142 = vmul.f32 %v1004, %v1116
      %v1143 = vmul.f32 %v1008, %v1112
      %v1144 = vmul.f32 %v1010, %v1116
      %v1145 = vmul.f32 %v1012, %v1112
      %v1146 = vmul.f32 %v1014, %v1116
      %v1147 = vmul.f32 %v1018, %v1112
      %v1148 = vmul.f32 %v1020, %v1116
      %v1149 = vmul.f32 %v1022, %v1112
      %v1150 = vmul.f32 %v1024, %v1116
      %v1151 = vmul.f32 %v1028, %v1112
      %v1152 = vmul.f32 %v1030, %v1116
      %v1153 = vmul.f32 %v1032, %v1112
      %v1154 = vmul.f32 %v1034, %v1116
      %v1155 = vmul.f32 %v1038, %v1112
      %v1156 = vmul.f32 %v1040, %v1116
      %v1157 = vmul.f32 %v1042, %v1112
      %v1158 = vmul.f32 %v1044, %v1116
      %v1159 = vmul.f32 %v1048, %v1112
      %v1160 = vmul.f32 %v1050, %v1116
      %v1161 = vmul.f32 %v1052, %v1112
      %v1162 = vmul.f32 %v1054, %v1116
      %v1163 = vmul.f32 %v1058, %v1112
      %v1164 = vmul.f32 %v1060, %v1116
      %v1165 = vmul.f32 %v1062, %v1112
      %v1166 = vmul.f32 %v1064, %v1116
      %v1167 = vmul.f32 %v1068, %v1112
      %v1168 = vmul.f32 %v1070, %v1116
      %v1169 = vmul.f32 %v1072, %v1112
      %v1170 = vmul.f32 %v1074, %v1116
      %v1171 = vmul.f32 %v1078, %v1112
      %v1172 = vmul.f32 %v1080, %v1116
      %v1173 = vmul.f32 %v1082, %v1112
      %v1174 = vmul.f32 %v1084, %v1116
      %v1175 = vmul.f32 %v1088, %v1112
      %v1176 = vmul.f32 %v1090, %v1116
      %v1177 = vmul.f32 %v1092, %v1112
      %v1178 = vmul.f32 %v1094, %v1116
      %v1179 = vmul.f32 %v1098, %v1112
      %v1180 = vmul.f32 %v1100, %v1116
      %v1181 = vmul.f32 %v1102, %v1112
      %v1182 = vmul.f32 %v1104, %v1116
      %s1183 = scalar_lea.vmem %s9, 3
      %v1184 = vld [vmem:[%s1183] ss:$8 sm:$0x3]
      %v1186 = vlaneseq
      %v1187 = vshrl.u32 %v1186, 7
      %v1188 = vsub.s32 0, %v1187
      %v1189 = vrot.slane %v1184, %v1188
      %v1190 = vlaneseq
      %v1191 = vshrl.u32 %v1190, 7
      %v1192 = vsub.s32 1, %v1191
      %v1193 = vrot.slane %v1184, %v1192
      %v1196 = vadd.f32 %v1119, %v1189
      %v1197 = vadd.f32 %v1120, %v1193
      %v1198 = vadd.f32 %v1121, %v1189
      %v1199 = vadd.f32 %v1122, %v1193
      %v1200 = vadd.f32 %v1123, %v1189
      %v1201 = vadd.f32 %v1124, %v1193
      %v1202 = vadd.f32 %v1125, %v1189
      %v1203 = vadd.f32 %v1126, %v1193
      %v1204 = vadd.f32 %v1127, %v1189
      %v1205 = vadd.f32 %v1128, %v1193
      %v1206 = vadd.f32 %v1129, %v1189
      %v1207 = vadd.f32 %v1130, %v1193
      %v1208 = vadd.f32 %v1131, %v1189
      %v1209 = vadd.f32 %v1132, %v1193
      %v1210 = vadd.f32 %v1133, %v1189
      %v1211 = vadd.f32 %v1134, %v1193
      %v1212 = vadd.f32 %v1135, %v1189
      %v1213 = vadd.f32 %v1136, %v1193
      %v1214 = vadd.f32 %v1137, %v1189
      %v1215 = vadd.f32 %v1138, %v1193
      %v1216 = vadd.f32 %v1139, %v1189
      %v1217 = vadd.f32 %v1140, %v1193
      %v1218 = vadd.f32 %v1141, %v1189
      %v1219 = vadd.f32 %v1142, %v1193
      %v1220 = vadd.f32 %v1143, %v1189
      %v1221 = vadd.f32 %v1144, %v1193
      %v1222 = vadd.f32 %v1145, %v1189
      %v1223 = vadd.f32 %v1146, %v1193
      %v1224 = vadd.f32 %v1147, %v1189
      %v1225 = vadd.f32 %v1148, %v1193
      %v1226 = vadd.f32 %v1149, %v1189
      %v1227 = vadd.f32 %v1150, %v1193
      %v1228 = vadd.f32 %v1151, %v1189
      %v1229 = vadd.f32 %v1152, %v1193
      %v1230 = vadd.f32 %v1153, %v1189
      %v1231 = vadd.f32 %v1154, %v1193
      %v1232 = vadd.f32 %v1155, %v1189
      %v1233 = vadd.f32 %v1156, %v1193
      %v1234 = vadd.f32 %v1157, %v1189
      %v1235 = vadd.f32 %v1158, %v1193
      %v1236 = vadd.f32 %v1159, %v1189
      %v1237 = vadd.f32 %v1160, %v1193
      %v1238 = vadd.f32 %v1161, %v1189
      %v1239 = vadd.f32 %v1162, %v1193
      %v1240 = vadd.f32 %v1163, %v1189
      %v1241 = vadd.f32 %v1164, %v1193
      %v1242 = vadd.f32 %v1165, %v1189
      %v1243 = vadd.f32 %v1166, %v1193
      %v1244 = vadd.f32 %v1167, %v1189
      %v1245 = vadd.f32 %v1168, %v1193
      %v1246 = vadd.f32 %v1169, %v1189
      %v1247 = vadd.f32 %v1170, %v1193
      %v1248 = vadd.f32 %v1171, %v1189
      %v1249 = vadd.f32 %v1172, %v1193
      %v1250 = vadd.f32 %v1173, %v1189
      %v1251 = vadd.f32 %v1174, %v1193
      %v1252 = vadd.f32 %v1175, %v1189
      %v1253 = vadd.f32 %v1176, %v1193
      %v1254 = vadd.f32 %v1177, %v1189
      %v1255 = vadd.f32 %v1178, %v1193
      %v1256 = vadd.f32 %v1179, %v1189
      %v1257 = vadd.f32 %v1180, %v1193
      %v1258 = vadd.f32 %v1181, %v1189
      %v1259 = vadd.f32 %v1182, %v1193
      %v1260 = vmax.f32 %v1196, 0.0
      %v1261 = vmax.f32 %v1197, 0.0
      %v1262 = vmax.f32 %v1198, 0.0
      %v1263 = vmax.f32 %v1199, 0.0
      %v1264 = vmax.f32 %v1200, 0.0
      %v1265 = vmax.f32 %v1201, 0.0
      %v1266 = vmax.f32 %v1202, 0.0
      %v1267 = vmax.f32 %v1203, 0.0
      %v1268 = vmax.f32 %v1204, 0.0
      %v1269 = vmax.f32 %v1205, 0.0
      %v1270 = vmax.f32 %v1206, 0.0
      %v1271 = vmax.f32 %v1207, 0.0
      %v1272 = vmax.f32 %v1208, 0.0
      %v1273 = vmax.f32 %v1209, 0.0
      %v1274 = vmax.f32 %v1210, 0.0
      %v1275 = vmax.f32 %v1211, 0.0
      %v1276 = vmax.f32 %v1212, 0.0
      %v1277 = vmax.f32 %v1213, 0.0
      %v1278 = vmax.f32 %v1214, 0.0
      %v1279 = vmax.f32 %v1215, 0.0
      %v1280 = vmax.f32 %v1216, 0.0
      %v1281 = vmax.f32 %v1217, 0.0
      %v1282 = vmax.f32 %v1218, 0.0
      %v1283 = vmax.f32 %v1219, 0.0
      %v1284 = vmax.f32 %v1220, 0.0
      %v1285 = vmax.f32 %v1221, 0.0
      %v1286 = vmax.f32 %v1222, 0.0
      %v1287 = vmax.f32 %v1223, 0.0
      %v1288 = vmax.f32 %v1224, 0.0
      %v1289 = vmax.f32 %v1225, 0.0
      %v1290 = vmax.f32 %v1226, 0.0
      %v1291 = vmax.f32 %v1227, 0.0
      %v1292 = vmax.f32 %v1228, 0.0
      %v1293 = vmax.f32 %v1229, 0.0
      %v1294 = vmax.f32 %v1230, 0.0
      %v1295 = vmax.f32 %v1231, 0.0
      %v1296 = vmax.f32 %v1232, 0.0
      %v1297 = vmax.f32 %v1233, 0.0
      %v1298 = vmax.f32 %v1234, 0.0
      %v1299 = vmax.f32 %v1235, 0.0
      %v1300 = vmax.f32 %v1236, 0.0
      %v1301 = vmax.f32 %v1237, 0.0
      %v1302 = vmax.f32 %v1238, 0.0
      %v1303 = vmax.f32 %v1239, 0.0
      %v1304 = vmax.f32 %v1240, 0.0
      %v1305 = vmax.f32 %v1241, 0.0
      %v1306 = vmax.f32 %v1242, 0.0
      %v1307 = vmax.f32 %v1243, 0.0
      %v1308 = vmax.f32 %v1244, 0.0
      %v1309 = vmax.f32 %v1245, 0.0
      %v1310 = vmax.f32 %v1246, 0.0
      %v1311 = vmax.f32 %v1247, 0.0
      %v1312 = vmax.f32 %v1248, 0.0
      %v1313 = vmax.f32 %v1249, 0.0
      %v1314 = vmax.f32 %v1250, 0.0
      %v1315 = vmax.f32 %v1251, 0.0
      %v1316 = vmax.f32 %v1252, 0.0
      %v1317 = vmax.f32 %v1253, 0.0
      %v1318 = vmax.f32 %v1254, 0.0
      %v1319 = vmax.f32 %v1255, 0.0
      %v1320 = vmax.f32 %v1256, 0.0
      %v1321 = vmax.f32 %v1257, 0.0
      %v1322 = vmax.f32 %v1258, 0.0
      %v1323 = vmax.f32 %v1259, 0.0
      %v1324 = vmin.f32 %v1260, 6.0
      %v1325 = vmin.f32 %v1261, 6.0
      %v1326 = vmin.f32 %v1262, 6.0
      %v1327 = vmin.f32 %v1263, 6.0
      %v1328 = vmin.f32 %v1264, 6.0
      %v1329 = vmin.f32 %v1265, 6.0
      %v1330 = vmin.f32 %v1266, 6.0
      %v1331 = vmin.f32 %v1267, 6.0
      %v1332 = vmin.f32 %v1268, 6.0
      %v1333 = vmin.f32 %v1269, 6.0
      %v1334 = vmin.f32 %v1270, 6.0
      %v1335 = vmin.f32 %v1271, 6.0
      %v1336 = vmin.f32 %v1272, 6.0
      %v1337 = vmin.f32 %v1273, 6.0
      %v1338 = vmin.f32 %v1274, 6.0
      %v1339 = vmin.f32 %v1275, 6.0
      %v1340 = vmin.f32 %v1276, 6.0
      %v1341 = vmin.f32 %v1277, 6.0
      %v1342 = vmin.f32 %v1278, 6.0
      %v1343 = vmin.f32 %v1279, 6.0
      %v1344 = vmin.f32 %v1280, 6.0
      %v1345 = vmin.f32 %v1281, 6.0
      %v1346 = vmin.f32 %v1282, 6.0
      %v1347 = vmin.f32 %v1283, 6.0
      %v1348 = vmin.f32 %v1284, 6.0
      %v1349 = vmin.f32 %v1285, 6.0
      %v1350 = vmin.f32 %v1286, 6.0
      %v1351 = vmin.f32 %v1287, 6.0
      %v1352 = vmin.f32 %v1288, 6.0
      %v1353 = vmin.f32 %v1289, 6.0
      %v1354 = vmin.f32 %v1290, 6.0
      %v1355 = vmin.f32 %v1291, 6.0
      %v1356 = vmin.f32 %v1292, 6.0
      %v1357 = vmin.f32 %v1293, 6.0
      %v1358 = vmin.f32 %v1294, 6.0
      %v1359 = vmin.f32 %v1295, 6.0
      %v1360 = vmin.f32 %v1296, 6.0
      %v1361 = vmin.f32 %v1297, 6.0
      %v1362 = vmin.f32 %v1298, 6.0
      %v1363 = vmin.f32 %v1299, 6.0
      %v1364 = vmin.f32 %v1300, 6.0
      %v1365 = vmin.f32 %v1301, 6.0
      %v1366 = vmin.f32 %v1302, 6.0
      %v1367 = vmin.f32 %v1303, 6.0
      %v1368 = vmin.f32 %v1304, 6.0
      %v1369 = vmin.f32 %v1305, 6.0
      %v1370 = vmin.f32 %v1306, 6.0
      %v1371 = vmin.f32 %v1307, 6.0
      %v1372 = vmin.f32 %v1308, 6.0
      %v1373 = vmin.f32 %v1309, 6.0
      %v1374 = vmin.f32 %v1310, 6.0
      %v1375 = vmin.f32 %v1311, 6.0
      %v1376 = vmin.f32 %v1312, 6.0
      %v1377 = vmin.f32 %v1313, 6.0
      %v1378 = vmin.f32 %v1314, 6.0
      %v1379 = vmin.f32 %v1315, 6.0
      %v1380 = vmin.f32 %v1316, 6.0
      %v1381 = vmin.f32 %v1317, 6.0
      %v1382 = vmin.f32 %v1318, 6.0
      %v1383 = vmin.f32 %v1319, 6.0
      %v1384 = vmin.f32 %v1320, 6.0
      %v1385 = vmin.f32 %v1321, 6.0
      %v1386 = vmin.f32 %v1322, 6.0
      %v1387 = vmin.f32 %v1323, 6.0
      %v1388 = vpack.c.bf16 %v1326, %v1324
      %v1389 = vpack.c.bf16 %v1327, %v1325
      %v1390 = vpack.c.bf16 %v1330, %v1328
      %v1391 = vpack.c.bf16 %v1331, %v1329
      %v1392 = vpack.c.bf16 %v1334, %v1332
      %v1393 = vpack.c.bf16 %v1335, %v1333
      %v1394 = vpack.c.bf16 %v1338, %v1336
      %v1395 = vpack.c.bf16 %v1339, %v1337
      %v1396 = vpack.c.bf16 %v1342, %v1340
      %v1397 = vpack.c.bf16 %v1343, %v1341
      %v1398 = vpack.c.bf16 %v1346, %v1344
      %v1399 = vpack.c.bf16 %v1347, %v1345
      %v1400 = vpack.c.bf16 %v1350, %v1348
      %v1401 = vpack.c.bf16 %v1351, %v1349
      %v1402 = vpack.c.bf16 %v1354, %v1352
      %v1403 = vpack.c.bf16 %v1355, %v1353
      %v1404 = vpack.c.bf16 %v1358, %v1356
      %v1405 = vpack.c.bf16 %v1359, %v1357
      %v1406 = vpack.c.bf16 %v1362, %v1360
      %v1407 = vpack.c.bf16 %v1363, %v1361
      %v1408 = vpack.c.bf16 %v1366, %v1364
      %v1409 = vpack.c.bf16 %v1367, %v1365
      %v1410 = vpack.c.bf16 %v1370, %v1368
      %v1411 = vpack.c.bf16 %v1371, %v1369
      %v1412 = vpack.c.bf16 %v1374, %v1372
      %v1413 = vpack.c.bf16 %v1375, %v1373
      %v1414 = vpack.c.bf16 %v1378, %v1376
      %v1415 = vpack.c.bf16 %v1379, %v1377
      %v1416 = vpack.c.bf16 %v1382, %v1380
      %v1417 = vpack.c.bf16 %v1383, %v1381
      %v1418 = vpack.c.bf16 %v1386, %v1384
      %v1419 = vpack.c.bf16 %v1387, %v1385
      %s1420 = scalar_lea.vmem %s9, 72
      %v1421 = vld [vmem:[%s1420] ss:$8 sm:$0x3]
      %s1422 = scalar_lea.vmem %s9, 73
      %v1423 = vld [vmem:[%s1422] ss:$8 sm:$0x3]
      %s1424 = scalar_lea.vmem %s9, 74
      %v1425 = vld [vmem:[%s1424] ss:$8 sm:$0x3]
      %s1426 = scalar_lea.vmem %s9, 75
      %v1427 = vld [vmem:[%s1426] ss:$8 sm:$0x3]
      %s1428 = scalar_lea.vmem %s9, 76
      %v1429 = vld [vmem:[%s1428] ss:$8 sm:$0x3]
      %s1430 = scalar_lea.vmem %s9, 77
      %v1431 = vld [vmem:[%s1430] ss:$8 sm:$0x3]
      %s1432 = scalar_lea.vmem %s9, 78
      %v1433 = vld [vmem:[%s1432] ss:$8 sm:$0x3]
      %s1434 = scalar_lea.vmem %s9, 79
      %v1435 = vld [vmem:[%s1434] ss:$8 sm:$0x3]
      %s1436 = scalar_lea.vmem %s9, 96
      %v1437 = vld [vmem:[%s1436] ss:$8 sm:$0x3]
      %v1438 = vld [vmem:[%s7] sm:$0xff]
      %v1439 = vld [vmem:[%s7 + $0x8] sm:$0xff]
      %v1440 = vld [vmem:[%s7 + $0x10] sm:$0xff]
      %v1441 = vld [vmem:[%s7 + $0x18] sm:$0xff]
      %v1442 = vld [vmem:[%s7 + $0x20] sm:$0xff]
      %v1443 = vld [vmem:[%s7 + $0x28] sm:$0xff]
      %v1444 = vld [vmem:[%s7 + $0x30] sm:$0xff]
      %v1445 = vld [vmem:[%s7 + $0x38] sm:$0xff]
      %v1446 = vld [vmem:[%s7 + $0x40] sm:$0xff]
      %v1447 = vld [vmem:[%s7 + $0x48] sm:$0xff]
      %v1448 = vld [vmem:[%s7 + $0x50] sm:$0xff]
      %v1449 = vld [vmem:[%s7 + $0x58] sm:$0xff]
      %v1450 = vld [vmem:[%s7 + $0x60] sm:$0xff]
      %v1451 = vld [vmem:[%s7 + $0x68] sm:$0xff]
      %v1452 = vld [vmem:[%s7 + $0x70] sm:$0xff]
      %v1453 = vld [vmem:[%s7 + $0x78] sm:$0xff]
      %v1454 = vld [vmem:[%s7 + $0x80] sm:$0xff]
      %v1455 = vld [vmem:[%s7 + $0x88] sm:$0xff]
      %v1456 = vld [vmem:[%s7 + $0x90] sm:$0xff]
      %v1457 = vld [vmem:[%s7 + $0x98] sm:$0xff]
      %v1458 = vld [vmem:[%s7 + $0xa0] sm:$0xff]
      %v1459 = vld [vmem:[%s7 + $0xa8] sm:$0xff]
      %v1460 = vld [vmem:[%s7 + $0xb0] sm:$0xff]
      %v1461 = vld [vmem:[%s7 + $0xb8] sm:$0xff]
      %v1462 = vld [vmem:[%s7 + $0xc0] sm:$0xff]
      %v1463 = vld [vmem:[%s7 + $0xc8] sm:$0xff]
      %v1464 = vld [vmem:[%s7 + $0xd0] sm:$0xff]
      %v1465 = vld [vmem:[%s7 + $0xd8] sm:$0xff]
      %v1466 = vld [vmem:[%s7 + $0xe0] sm:$0xff]
      %v1467 = vld [vmem:[%s7 + $0xe8] sm:$0xff]
      %v1468 = vld [vmem:[%s7 + $0xf0] sm:$0xff]
      %v1469 = vld [vmem:[%s7 + $0xf8] sm:$0xff]
      %v1470 = vld [vmem:[%s7 + $0x100] sm:$0xff]
      %v1471 = vld [vmem:[%s7 + $0x108] sm:$0xff]
      %v1472 = vld [vmem:[%s7 + $0x110] sm:$0xff]
      %v1473 = vld [vmem:[%s7 + $0x118] sm:$0xff]
      %v1474 = vld [vmem:[%s7 + $0x120] sm:$0xff]
      %v1475 = vld [vmem:[%s7 + $0x128] sm:$0xff]
      %v1476 = vld [vmem:[%s7 + $0x130] sm:$0xff]
      %v1477 = vld [vmem:[%s7 + $0x138] sm:$0xff]
      %v1478 = vld [vmem:[%s7 + $0x140] sm:$0xff]
      %v1479 = vld [vmem:[%s7 + $0x148] sm:$0xff]
      %v1480 = vld [vmem:[%s7 + $0x150] sm:$0xff]
      %v1481 = vld [vmem:[%s7 + $0x158] sm:$0xff]
      %v1482 = vld [vmem:[%s7 + $0x160] sm:$0xff]
      %v1483 = vld [vmem:[%s7 + $0x168] sm:$0xff]
      %v1484 = vld [vmem:[%s7 + $0x170] sm:$0xff]
      %v1485 = vld [vmem:[%s7 + $0x178] sm:$0xff]
      %v1486 = vld [vmem:[%s7 + $0x180] sm:$0xff]
      %v1487 = vld [vmem:[%s7 + $0x188] sm:$0xff]
      %v1488 = vld [vmem:[%s7 + $0x190] sm:$0xff]
      %v1489 = vld [vmem:[%s7 + $0x198] sm:$0xff]
      %v1490 = vld [vmem:[%s7 + $0x1a0] sm:$0xff]
      %v1491 = vld [vmem:[%s7 + $0x1a8] sm:$0xff]
      %v1492 = vld [vmem:[%s7 + $0x1b0] sm:$0xff]
      %v1493 = vld [vmem:[%s7 + $0x1b8] sm:$0xff]
      %v1494 = vld [vmem:[%s7 + $0x1c0] sm:$0xff]
      %v1495 = vld [vmem:[%s7 + $0x1c8] sm:$0xff]
      %v1496 = vld [vmem:[%s7 + $0x1d0] sm:$0xff]
      %v1497 = vld [vmem:[%s7 + $0x1d8] sm:$0xff]
      %v1498 = vld [vmem:[%s7 + $0x1e0] sm:$0xff]
      %v1499 = vld [vmem:[%s7 + $0x1e8] sm:$0xff]
      %v1500 = vld [vmem:[%s7 + $0x1f0] sm:$0xff]
      %v1564 = vunpack.c.l.b16 %v1438
      %v1565 = vunpack.c.h.b16 %v1438
      %v1566 = vunpack.c.l.b16 %v1439
      %v1567 = vunpack.c.h.b16 %v1439
      %v1568 = vunpack.c.l.b16 %v1440
      %v1569 = vunpack.c.h.b16 %v1440
      %v1570 = vunpack.c.l.b16 %v1441
      %v1571 = vunpack.c.h.b16 %v1441
      %v1572 = vunpack.c.l.b16 %v1442
      %v1573 = vunpack.c.h.b16 %v1442
      %v1574 = vunpack.c.l.b16 %v1443
      %v1575 = vunpack.c.h.b16 %v1443
      %v1576 = vunpack.c.l.b16 %v1444
      %v1577 = vunpack.c.h.b16 %v1444
      %v1578 = vunpack.c.l.b16 %v1445
      %v1579 = vunpack.c.h.b16 %v1445
      %v1580 = vunpack.c.l.b16 %v1446
      %v1581 = vunpack.c.h.b16 %v1446
      %v1582 = vunpack.c.l.b16 %v1447
      %v1583 = vunpack.c.h.b16 %v1447
      %v1584 = vunpack.c.l.b16 %v1448
      %v1585 = vunpack.c.h.b16 %v1448
      %v1586 = vunpack.c.l.b16 %v1449
      %v1587 = vunpack.c.h.b16 %v1449
      %v1588 = vunpack.c.l.b16 %v1450
      %v1589 = vunpack.c.h.b16 %v1450
      %v1590 = vunpack.c.l.b16 %v1451
      %v1591 = vunpack.c.h.b16 %v1451
      %v1592 = vunpack.c.l.b16 %v1452
      %v1593 = vunpack.c.h.b16 %v1452
      %v1594 = vunpack.c.l.b16 %v1453
      %v1595 = vunpack.c.h.b16 %v1453
      %v1596 = vunpack.c.l.b16 %v1454
      %v1597 = vunpack.c.h.b16 %v1454
      %v1598 = vunpack.c.l.b16 %v1455
      %v1599 = vunpack.c.h.b16 %v1455
      %v1600 = vunpack.c.l.b16 %v1456
      %v1601 = vunpack.c.h.b16 %v1456
      %v1602 = vunpack.c.l.b16 %v1457
      %v1603 = vunpack.c.h.b16 %v1457
      %v1604 = vunpack.c.l.b16 %v1458
      %v1605 = vunpack.c.h.b16 %v1458
      %v1606 = vunpack.c.l.b16 %v1459
      %v1607 = vunpack.c.h.b16 %v1459
      %v1608 = vunpack.c.l.b16 %v1460
      %v1609 = vunpack.c.h.b16 %v1460
      %v1610 = vunpack.c.l.b16 %v1461
      %v1611 = vunpack.c.h.b16 %v1461
      %v1612 = vunpack.c.l.b16 %v1462
      %v1613 = vunpack.c.h.b16 %v1462
      %v1614 = vunpack.c.l.b16 %v1463
      %v1615 = vunpack.c.h.b16 %v1463
      %v1616 = vunpack.c.l.b16 %v1464
      %v1617 = vunpack.c.h.b16 %v1464
      %v1618 = vunpack.c.l.b16 %v1465
      %v1619 = vunpack.c.h.b16 %v1465
      %v1620 = vunpack.c.l.b16 %v1466
      %v1621 = vunpack.c.h.b16 %v1466
      %v1622 = vunpack.c.l.b16 %v1467
      %v1623 = vunpack.c.h.b16 %v1467
      %v1624 = vunpack.c.l.b16 %v1468
      %v1625 = vunpack.c.h.b16 %v1468
      %v1626 = vunpack.c.l.b16 %v1469
      %v1627 = vunpack.c.h.b16 %v1469
      %v1628 = vunpack.c.l.b16 %v1470
      %v1629 = vunpack.c.h.b16 %v1470
      %v1630 = vunpack.c.l.b16 %v1471
      %v1631 = vunpack.c.h.b16 %v1471
      %v1632 = vunpack.c.l.b16 %v1472
      %v1633 = vunpack.c.h.b16 %v1472
      %v1634 = vunpack.c.l.b16 %v1473
      %v1635 = vunpack.c.h.b16 %v1473
      %v1636 = vunpack.c.l.b16 %v1474
      %v1637 = vunpack.c.h.b16 %v1474
      %v1638 = vunpack.c.l.b16 %v1475
      %v1639 = vunpack.c.h.b16 %v1475
      %v1640 = vunpack.c.l.b16 %v1476
      %v1641 = vunpack.c.h.b16 %v1476
      %v1642 = vunpack.c.l.b16 %v1477
      %v1643 = vunpack.c.h.b16 %v1477
      %v1644 = vunpack.c.l.b16 %v1478
      %v1645 = vunpack.c.h.b16 %v1478
      %v1646 = vunpack.c.l.b16 %v1479
      %v1647 = vunpack.c.h.b16 %v1479
      %v1648 = vunpack.c.l.b16 %v1480
      %v1649 = vunpack.c.h.b16 %v1480
      %v1650 = vunpack.c.l.b16 %v1481
      %v1651 = vunpack.c.h.b16 %v1481
      %v1652 = vunpack.c.l.b16 %v1482
      %v1653 = vunpack.c.h.b16 %v1482
      %v1654 = vunpack.c.l.b16 %v1483
      %v1655 = vunpack.c.h.b16 %v1483
      %v1656 = vunpack.c.l.b16 %v1484
      %v1657 = vunpack.c.h.b16 %v1484
      %v1658 = vunpack.c.l.b16 %v1485
      %v1659 = vunpack.c.h.b16 %v1485
      %v1660 = vunpack.c.l.b16 %v1486
      %v1661 = vunpack.c.h.b16 %v1486
      %v1662 = vunpack.c.l.b16 %v1487
      %v1663 = vunpack.c.h.b16 %v1487
      %v1664 = vunpack.c.l.b16 %v1488
      %v1665 = vunpack.c.h.b16 %v1488
      %v1666 = vunpack.c.l.b16 %v1489
      %v1667 = vunpack.c.h.b16 %v1489
      %v1668 = vunpack.c.l.b16 %v1490
      %v1669 = vunpack.c.h.b16 %v1490
      %v1670 = vunpack.c.l.b16 %v1491
      %v1671 = vunpack.c.h.b16 %v1491
      %v1672 = vunpack.c.l.b16 %v1492
      %v1673 = vunpack.c.h.b16 %v1492
      %v1674 = vunpack.c.l.b16 %v1493
      %v1675 = vunpack.c.h.b16 %v1493
      %v1676 = vunpack.c.l.b16 %v1494
      %v1677 = vunpack.c.h.b16 %v1494
      %v1678 = vunpack.c.l.b16 %v1495
      %v1679 = vunpack.c.h.b16 %v1495
      %v1680 = vunpack.c.l.b16 %v1496
      %v1681 = vunpack.c.h.b16 %v1496
      %v1682 = vunpack.c.l.b16 %v1497
      %v1683 = vunpack.c.h.b16 %v1497
      %v1684 = vunpack.c.l.b16 %v1498
      %v1685 = vunpack.c.h.b16 %v1498
      %v1686 = vunpack.c.l.b16 %v1499
      %v1687 = vunpack.c.h.b16 %v1499
      %v1688 = vunpack.c.l.b16 %v1500
      %v1689 = vunpack.c.h.b16 %v1500
      %v1690 = vpack.c.b16 %v1566, %v1564
      %v1691 = vpack.c.b16 %v1567, %v1565
      %v1692 = vpack.c.b16 %v1570, %v1568
      %v1693 = vpack.c.b16 %v1571, %v1569
      %v1694 = vpack.c.b16 %v1574, %v1572
      %v1695 = vpack.c.b16 %v1575, %v1573
      %v1696 = vpack.c.b16 %v1578, %v1576
      %v1697 = vpack.c.b16 %v1579, %v1577
      %v1698 = vpack.c.b16 %v1582, %v1580
      %v1699 = vpack.c.b16 %v1583, %v1581
      %v1700 = vpack.c.b16 %v1586, %v1584
      %v1701 = vpack.c.b16 %v1587, %v1585
      %v1702 = vpack.c.b16 %v1590, %v1588
      %v1703 = vpack.c.b16 %v1591, %v1589
      %v1704 = vpack.c.b16 %v1594, %v1592
      %v1705 = vpack.c.b16 %v1595, %v1593
      %v1706 = vpack.c.b16 %v1598, %v1596
      %v1707 = vpack.c.b16 %v1599, %v1597
      %v1708 = vpack.c.b16 %v1602, %v1600
      %v1709 = vpack.c.b16 %v1603, %v1601
      %v1710 = vpack.c.b16 %v1606, %v1604
      %v1711 = vpack.c.b16 %v1607, %v1605
      %v1712 = vpack.c.b16 %v1610, %v1608
      %v1713 = vpack.c.b16 %v1611, %v1609
      %v1714 = vpack.c.b16 %v1614, %v1612
      %v1715 = vpack.c.b16 %v1615, %v1613
      %v1716 = vpack.c.b16 %v1618, %v1616
      %v1717 = vpack.c.b16 %v1619, %v1617
      %v1718 = vpack.c.b16 %v1622, %v1620
      %v1719 = vpack.c.b16 %v1623, %v1621
      %v1720 = vpack.c.b16 %v1626, %v1624
      %v1721 = vpack.c.b16 %v1627, %v1625
      %v1722 = vpack.c.b16 %v1630, %v1628
      %v1723 = vpack.c.b16 %v1631, %v1629
      %v1724 = vpack.c.b16 %v1634, %v1632
      %v1725 = vpack.c.b16 %v1635, %v1633
      %v1726 = vpack.c.b16 %v1638, %v1636
      %v1727 = vpack.c.b16 %v1639, %v1637
      %v1728 = vpack.c.b16 %v1642, %v1640
      %v1729 = vpack.c.b16 %v1643, %v1641
      %v1730 = vpack.c.b16 %v1646, %v1644
      %v1731 = vpack.c.b16 %v1647, %v1645
      %v1732 = vpack.c.b16 %v1650, %v1648
      %v1733 = vpack.c.b16 %v1651, %v1649
      %v1734 = vpack.c.b16 %v1654, %v1652
      %v1735 = vpack.c.b16 %v1655, %v1653
      %v1736 = vpack.c.b16 %v1658, %v1656
      %v1737 = vpack.c.b16 %v1659, %v1657
      %v1738 = vpack.c.b16 %v1662, %v1660
      %v1739 = vpack.c.b16 %v1663, %v1661
      %v1740 = vpack.c.b16 %v1666, %v1664
      %v1741 = vpack.c.b16 %v1667, %v1665
      %v1742 = vpack.c.b16 %v1670, %v1668
      %v1743 = vpack.c.b16 %v1671, %v1669
      %v1744 = vpack.c.b16 %v1674, %v1672
      %v1745 = vpack.c.b16 %v1675, %v1673
      %v1746 = vpack.c.b16 %v1678, %v1676
      %v1747 = vpack.c.b16 %v1679, %v1677
      %v1748 = vpack.c.b16 %v1682, %v1680
      %v1749 = vpack.c.b16 %v1683, %v1681
      %v1750 = vpack.c.b16 %v1686, %v1684
      %v1751 = vpack.c.b16 %v1687, %v1685
      %v1752 = vpack.c.b16 %v1688, %v1688
      %v1753 = vpack.c.b16 %v1689, %v1689
      %1818 = vmatprep.subr.bf16.mxu0 %v1389
      %1819 = vmatpush1.bf16.msra.mxu0 %v1388
      %1820 = vmatprep.subr.bf16.mxu0 %v1391
      %1821 = vmatpush1.bf16.msra.mxu0 %v1390
      %1822 = vmatprep.subr.bf16.mxu0 %v1393
      %1823 = vmatpush1.bf16.msra.mxu0 %v1392
      %1824 = vmatprep.subr.bf16.mxu0 %v1395
      %1825 = vmatpush1.bf16.msra.mxu0 %v1394
      %1826 = vmatprep.subr.bf16.mxu0 %v1397
      %1827 = vmatpush1.bf16.msra.mxu0 %v1396
      %1828 = vmatprep.subr.bf16.mxu0 %v1399
      %1829 = vmatpush1.bf16.msra.mxu0 %v1398
      %1830 = vmatprep.subr.bf16.mxu0 %v1401
      %1831 = vmatpush1.bf16.msra.mxu0 %v1400
      %1832 = vmatprep.subr.bf16.mxu0 %v1403
      %1833 = vmatpush1.bf16.msra.mxu0 %v1402
      %1834 = vmatprep.subr.bf16.mxu0 %v1405
      %1835 = vmatpush1.bf16.msra.mxu0 %v1404
      %1836 = vmatprep.subr.bf16.mxu0 %v1407
      %1837 = vmatpush1.bf16.msra.mxu0 %v1406
      %1838 = vmatprep.subr.bf16.mxu0 %v1409
      %1839 = vmatpush1.bf16.msra.mxu0 %v1408
      %1840 = vmatprep.subr.bf16.mxu0 %v1411
      %1841 = vmatpush1.bf16.msra.mxu0 %v1410
      %1842 = vmatprep.subr.bf16.mxu0 %v1413
      %1843 = vmatpush1.bf16.msra.mxu0 %v1412
      %1844 = vmatprep.subr.bf16.mxu0 %v1415
      %1845 = vmatpush1.bf16.msra.mxu0 %v1414
      %1846 = vmatprep.subr.bf16.mxu0 %v1417
      %1847 = vmatpush1.bf16.msra.mxu0 %v1416
      %1848 = vmatprep.subr.bf16.mxu0 %v1419
      %1849 = vmatpush1.bf16.msra.mxu0 %v1418
      %1850 = vmatprep.mubr.bf16.mxu0 %v1691
      %1851 = vmatmul.mubr.bf16.gmra.mrb[0].mxu0 %v1690
      %v1852 = vpop.f32.mrb[0].mxu0
      %v1853 = vadd.f32 0.0, %v1852
      %v1854 = vpop.f32.mrb[0].mxu0
      %v1855 = vadd.f32 0.0, %v1854
      %v1856 = vpop.f32.mrb[0].mxu0
      %v1857 = vadd.f32 0.0, %v1856
      %v1858 = vpop.f32.mrb[0].mxu0
      %v1859 = vadd.f32 0.0, %v1858
      %1860 = vmatprep.mubr.bf16.mxu0 %v1693
      %1861 = vmatmul.mubr.bf16.gmra.mrb[0].mxu0 %v1692
      %v1862 = vpop.f32.mrb[0].mxu0
      %v1863 = vadd.f32 0.0, %v1862
      %v1864 = vpop.f32.mrb[0].mxu0
      %v1865 = vadd.f32 0.0, %v1864
      %v1866 = vpop.f32.mrb[0].mxu0
      %v1867 = vadd.f32 0.0, %v1866
      %v1868 = vpop.f32.mrb[0].mxu0
      %v1869 = vadd.f32 0.0, %v1868
      %1870 = vmatprep.mubr.bf16.mxu0 %v1695
      %1871 = vmatmul.mubr.bf16.gmra.mrb[0].mxu0 %v1694
      %v1872 = vpop.f32.mrb[0].mxu0
      %v1873 = vadd.f32 0.0, %v1872
      %v1874 = vpop.f32.mrb[0].mxu0
      %v1875 = vadd.f32 0.0, %v1874
      %v1876 = vpop.f32.mrb[0].mxu0
      %v1877 = vadd.f32 0.0, %v1876
      %v1878 = vpop.f32.mrb[0].mxu0
      %v1879 = vadd.f32 0.0, %v1878
      %1880 = vmatprep.mubr.bf16.mxu0 %v1697
      %1881 = vmatmul.mubr.bf16.gmra.mrb[0].mxu0 %v1696
      %v1882 = vpop.f32.mrb[0].mxu0
      %v1883 = vadd.f32 0.0, %v1882
      %v1884 = vpop.f32.mrb[0].mxu0
      %v1885 = vadd.f32 0.0, %v1884
      %v1886 = vpop.f32.mrb[0].mxu0
      %v1887 = vadd.f32 0.0, %v1886
      %v1888 = vpop.f32.mrb[0].mxu0
      %v1889 = vadd.f32 0.0, %v1888
      %1890 = vmatprep.mubr.bf16.mxu0 %v1699
      %1891 = vmatmul.mubr.bf16.gmra.mrb[0].mxu0 %v1698
      %v1892 = vpop.f32.mrb[0].mxu0
      %v1893 = vadd.f32 0.0, %v1892
      %v1894 = vpop.f32.mrb[0].mxu0
      %v1895 = vadd.f32 0.0, %v1894
      %v1896 = vpop.f32.mrb[0].mxu0
      %v1897 = vadd.f32 0.0, %v1896
      %v1898 = vpop.f32.mrb[0].mxu0
      %v1899 = vadd.f32 0.0, %v1898
      %1900 = vmatprep.mubr.bf16.mxu0 %v1701
      %1901 = vmatmul.mubr.bf16.gmra.mrb[0].mxu0 %v1700
      %v1902 = vpop.f32.mrb[0].mxu0
      %v1903 = vadd.f32 0.0, %v1902
      %v1904 = vpop.f32.mrb[0].mxu0
      %v1905 = vadd.f32 0.0, %v1904
      %v1906 = vpop.f32.mrb[0].mxu0
      %v1907 = vadd.f32 0.0, %v1906
      %v1908 = vpop.f32.mrb[0].mxu0
      %v1909 = vadd.f32 0.0, %v1908
      %1910 = vmatprep.mubr.bf16.mxu0 %v1703
      %1911 = vmatmul.mubr.bf16.gmra.mrb[0].mxu0 %v1702
      %v1912 = vpop.f32.mrb[0].mxu0
      %v1913 = vadd.f32 0.0, %v1912
      %v1914 = vpop.f32.mrb[0].mxu0
      %v1915 = vadd.f32 0.0, %v1914
      %v1916 = vpop.f32.mrb[0].mxu0
      %v1917 = vadd.f32 0.0, %v1916
      %v1918 = vpop.f32.mrb[0].mxu0
      %v1919 = vadd.f32 0.0, %v1918
      %1920 = vmatprep.mubr.bf16.mxu0 %v1705
      %1921 = vmatmul.mubr.bf16.gmra.mrb[0].mxu0 %v1704
      %v1922 = vpop.f32.mrb[0].mxu0
      %v1923 = vadd.f32 0.0, %v1922
      %v1924 = vpop.f32.mrb[0].mxu0
      %v1925 = vadd.f32 0.0, %v1924
      %v1926 = vpop.f32.mrb[0].mxu0
      %v1927 = vadd.f32 0.0, %v1926
      %v1928 = vpop.f32.mrb[0].mxu0
      %v1929 = vadd.f32 0.0, %v1928
      %1930 = vmatprep.mubr.bf16.mxu0 %v1707
      %1931 = vmatmul.mubr.bf16.gmra.mrb[0].mxu0 %v1706
      %v1932 = vpop.f32.mrb[0].mxu0
      %v1933 = vadd.f32 0.0, %v1932
      %v1934 = vpop.f32.mrb[0].mxu0
      %v1935 = vadd.f32 0.0, %v1934
      %v1936 = vpop.f32.mrb[0].mxu0
      %v1937 = vadd.f32 0.0, %v1936
      %v1938 = vpop.f32.mrb[0].mxu0
      %v1939 = vadd.f32 0.0, %v1938
      %1940 = vmatprep.mubr.bf16.mxu0 %v1709
      %1941 = vmatmul.mubr.bf16.gmra.mrb[0].mxu0 %v1708
      %v1942 = vpop.f32.mrb[0].mxu0
      %v1943 = vadd.f32 0.0, %v1942
      %v1944 = vpop.f32.mrb[0].mxu0
      %v1945 = vadd.f32 0.0, %v1944
      %v1946 = vpop.f32.mrb[0].mxu0
      %v1947 = vadd.f32 0.0, %v1946
      %v1948 = vpop.f32.mrb[0].mxu0
      %v1949 = vadd.f32 0.0, %v1948
      %1950 = vmatprep.mubr.bf16.mxu0 %v1711
      %1951 = vmatmul.mubr.bf16.gmra.mrb[0].mxu0 %v1710
      %v1952 = vpop.f32.mrb[0].mxu0
      %v1953 = vadd.f32 0.0, %v1952
      %v1954 = vpop.f32.mrb[0].mxu0
      %v1955 = vadd.f32 0.0, %v1954
      %v1956 = vpop.f32.mrb[0].mxu0
      %v1957 = vadd.f32 0.0, %v1956
      %v1958 = vpop.f32.mrb[0].mxu0
      %v1959 = vadd.f32 0.0, %v1958
      %1960 = vmatprep.mubr.bf16.mxu0 %v1713
      %1961 = vmatmul.mubr.bf16.gmra.mrb[0].mxu0 %v1712
      %v1962 = vpop.f32.mrb[0].mxu0
      %v1963 = vadd.f32 0.0, %v1962
      %v1964 = vpop.f32.mrb[0].mxu0
      %v1965 = vadd.f32 0.0, %v1964
      %v1966 = vpop.f32.mrb[0].mxu0
      %v1967 = vadd.f32 0.0, %v1966
      %v1968 = vpop.f32.mrb[0].mxu0
      %v1969 = vadd.f32 0.0, %v1968
      %1970 = vmatprep.mubr.bf16.mxu0 %v1715
      %1971 = vmatmul.mubr.bf16.gmra.mrb[0].mxu0 %v1714
      %v1972 = vpop.f32.mrb[0].mxu0
      %v1973 = vadd.f32 0.0, %v1972
      %v1974 = vpop.f32.mrb[0].mxu0
      %v1975 = vadd.f32 0.0, %v1974
      %v1976 = vpop.f32.mrb[0].mxu0
      %v1977 = vadd.f32 0.0, %v1976
      %v1978 = vpop.f32.mrb[0].mxu0
      %v1979 = vadd.f32 0.0, %v1978
      %1980 = vmatprep.mubr.bf16.mxu0 %v1717
      %1981 = vmatmul.mubr.bf16.gmra.mrb[0].mxu0 %v1716
      %v1982 = vpop.f32.mrb[0].mxu0
      %v1983 = vadd.f32 0.0, %v1982
      %v1984 = vpop.f32.mrb[0].mxu0
      %v1985 = vadd.f32 0.0, %v1984
      %v1986 = vpop.f32.mrb[0].mxu0
      %v1987 = vadd.f32 0.0, %v1986
      %v1988 = vpop.f32.mrb[0].mxu0
      %v1989 = vadd.f32 0.0, %v1988
      %1990 = vmatprep.mubr.bf16.mxu0 %v1719
      %1991 = vmatmul.mubr.bf16.gmra.mrb[0].mxu0 %v1718
      %v1992 = vpop.f32.mrb[0].mxu0
      %v1993 = vadd.f32 0.0, %v1992
      %v1994 = vpop.f32.mrb[0].mxu0
      %v1995 = vadd.f32 0.0, %v1994
      %v1996 = vpop.f32.mrb[0].mxu0
      %v1997 = vadd.f32 0.0, %v1996
      %v1998 = vpop.f32.mrb[0].mxu0
      %v1999 = vadd.f32 0.0, %v1998
      %2000 = vmatprep.mubr.bf16.mxu0 %v1721
      %2001 = vmatmul.mubr.bf16.gmra.mrb[0].mxu0 %v1720
      %v2002 = vpop.f32.mrb[0].mxu0
      %v2003 = vadd.f32 0.0, %v2002
      %v2004 = vpop.f32.mrb[0].mxu0
      %v2005 = vadd.f32 0.0, %v2004
      %v2006 = vpop.f32.mrb[0].mxu0
      %v2007 = vadd.f32 0.0, %v2006
      %v2008 = vpop.f32.mrb[0].mxu0
      %v2009 = vadd.f32 0.0, %v2008
      %2010 = vmatprep.mubr.bf16.mxu0 %v1723
      %2011 = vmatmul.mubr.bf16.gmra.mrb[0].mxu0 %v1722
      %v2012 = vpop.f32.mrb[0].mxu0
      %v2013 = vadd.f32 0.0, %v2012
      %v2014 = vpop.f32.mrb[0].mxu0
      %v2015 = vadd.f32 0.0, %v2014
      %v2016 = vpop.f32.mrb[0].mxu0
      %v2017 = vadd.f32 0.0, %v2016
      %v2018 = vpop.f32.mrb[0].mxu0
      %v2019 = vadd.f32 0.0, %v2018
      %2020 = vmatprep.mubr.bf16.mxu0 %v1725
      %2021 = vmatmul.mubr.bf16.gmra.mrb[0].mxu0 %v1724
      %v2022 = vpop.f32.mrb[0].mxu0
      %v2023 = vadd.f32 0.0, %v2022
      %v2024 = vpop.f32.mrb[0].mxu0
      %v2025 = vadd.f32 0.0, %v2024
      %v2026 = vpop.f32.mrb[0].mxu0
      %v2027 = vadd.f32 0.0, %v2026
      %v2028 = vpop.f32.mrb[0].mxu0
      %v2029 = vadd.f32 0.0, %v2028
      %2030 = vmatprep.mubr.bf16.mxu0 %v1727
      %2031 = vmatmul.mubr.bf16.gmra.mrb[0].mxu0 %v1726
      %v2032 = vpop.f32.mrb[0].mxu0
      %v2033 = vadd.f32 0.0, %v2032
      %v2034 = vpop.f32.mrb[0].mxu0
      %v2035 = vadd.f32 0.0, %v2034
      %v2036 = vpop.f32.mrb[0].mxu0
      %v2037 = vadd.f32 0.0, %v2036
      %v2038 = vpop.f32.mrb[0].mxu0
      %v2039 = vadd.f32 0.0, %v2038
      %2040 = vmatprep.mubr.bf16.mxu0 %v1729
      %2041 = vmatmul.mubr.bf16.gmra.mrb[0].mxu0 %v1728
      %v2042 = vpop.f32.mrb[0].mxu0
      %v2043 = vadd.f32 0.0, %v2042
      %v2044 = vpop.f32.mrb[0].mxu0
      %v2045 = vadd.f32 0.0, %v2044
      %v2046 = vpop.f32.mrb[0].mxu0
      %v2047 = vadd.f32 0.0, %v2046
      %v2048 = vpop.f32.mrb[0].mxu0
      %v2049 = vadd.f32 0.0, %v2048
      %2050 = vmatprep.mubr.bf16.mxu0 %v1731
      %2051 = vmatmul.mubr.bf16.gmra.mrb[0].mxu0 %v1730
      %v2052 = vpop.f32.mrb[0].mxu0
      %v2053 = vadd.f32 0.0, %v2052
      %v2054 = vpop.f32.mrb[0].mxu0
      %v2055 = vadd.f32 0.0, %v2054
      %v2056 = vpop.f32.mrb[0].mxu0
      %v2057 = vadd.f32 0.0, %v2056
      %v2058 = vpop.f32.mrb[0].mxu0
      %v2059 = vadd.f32 0.0, %v2058
      %2060 = vmatprep.mubr.bf16.mxu0 %v1733
      %2061 = vmatmul.mubr.bf16.gmra.mrb[0].mxu0 %v1732
      %v2062 = vpop.f32.mrb[0].mxu0
      %v2063 = vadd.f32 0.0, %v2062
      %v2064 = vpop.f32.mrb[0].mxu0
      %v2065 = vadd.f32 0.0, %v2064
      %v2066 = vpop.f32.mrb[0].mxu0
      %v2067 = vadd.f32 0.0, %v2066
      %v2068 = vpop.f32.mrb[0].mxu0
      %v2069 = vadd.f32 0.0, %v2068
      %2070 = vmatprep.mubr.bf16.mxu0 %v1735
      %2071 = vmatmul.mubr.bf16.gmra.mrb[0].mxu0 %v1734
      %v2072 = vpop.f32.mrb[0].mxu0
      %v2073 = vadd.f32 0.0, %v2072
      %v2074 = vpop.f32.mrb[0].mxu0
      %v2075 = vadd.f32 0.0, %v2074
      %v2076 = vpop.f32.mrb[0].mxu0
      %v2077 = vadd.f32 0.0, %v2076
      %v2078 = vpop.f32.mrb[0].mxu0
      %v2079 = vadd.f32 0.0, %v2078
      %2080 = vmatprep.mubr.bf16.mxu0 %v1737
      %2081 = vmatmul.mubr.bf16.gmra.mrb[0].mxu0 %v1736
      %v2082 = vpop.f32.mrb[0].mxu0
      %v2083 = vadd.f32 0.0, %v2082
      %v2084 = vpop.f32.mrb[0].mxu0
      %v2085 = vadd.f32 0.0, %v2084
      %v2086 = vpop.f32.mrb[0].mxu0
      %v2087 = vadd.f32 0.0, %v2086
      %v2088 = vpop.f32.mrb[0].mxu0
      %v2089 = vadd.f32 0.0, %v2088
      %2090 = vmatprep.mubr.bf16.mxu0 %v1739
      %2091 = vmatmul.mubr.bf16.gmra.mrb[0].mxu0 %v1738
      %v2092 = vpop.f32.mrb[0].mxu0
      %v2093 = vadd.f32 0.0, %v2092
      %v2094 = vpop.f32.mrb[0].mxu0
      %v2095 = vadd.f32 0.0, %v2094
      %v2096 = vpop.f32.mrb[0].mxu0
      %v2097 = vadd.f32 0.0, %v2096
      %v2098 = vpop.f32.mrb[0].mxu0
      %v2099 = vadd.f32 0.0, %v2098
      %2100 = vmatprep.mubr.bf16.mxu0 %v1741
      %2101 = vmatmul.mubr.bf16.gmra.mrb[0].mxu0 %v1740
      %v2102 = vpop.f32.mrb[0].mxu0
      %v2103 = vadd.f32 0.0, %v2102
      %v2104 = vpop.f32.mrb[0].mxu0
      %v2105 = vadd.f32 0.0, %v2104
      %v2106 = vpop.f32.mrb[0].mxu0
      %v2107 = vadd.f32 0.0, %v2106
      %v2108 = vpop.f32.mrb[0].mxu0
      %v2109 = vadd.f32 0.0, %v2108
      %2110 = vmatprep.mubr.bf16.mxu0 %v1743
      %2111 = vmatmul.mubr.bf16.gmra.mrb[0].mxu0 %v1742
      %v2112 = vpop.f32.mrb[0].mxu0
      %v2113 = vadd.f32 0.0, %v2112
      %v2114 = vpop.f32.mrb[0].mxu0
      %v2115 = vadd.f32 0.0, %v2114
      %v2116 = vpop.f32.mrb[0].mxu0
      %v2117 = vadd.f32 0.0, %v2116
      %v2118 = vpop.f32.mrb[0].mxu0
      %v2119 = vadd.f32 0.0, %v2118
      %2120 = vmatprep.mubr.bf16.mxu0 %v1745
      %2121 = vmatmul.mubr.bf16.gmra.mrb[0].mxu0 %v1744
      %v2122 = vpop.f32.mrb[0].mxu0
      %v2123 = vadd.f32 0.0, %v2122
      %v2124 = vpop.f32.mrb[0].mxu0
      %v2125 = vadd.f32 0.0, %v2124
      %v2126 = vpop.f32.mrb[0].mxu0
      %v2127 = vadd.f32 0.0, %v2126
      %v2128 = vpop.f32.mrb[0].mxu0
      %v2129 = vadd.f32 0.0, %v2128
      %2130 = vmatprep.mubr.bf16.mxu0 %v1747
      %2131 = vmatmul.mubr.bf16.gmra.mrb[0].mxu0 %v1746
      %v2132 = vpop.f32.mrb[0].mxu0
      %v2133 = vadd.f32 0.0, %v2132
      %v2134 = vpop.f32.mrb[0].mxu0
      %v2135 = vadd.f32 0.0, %v2134
      %v2136 = vpop.f32.mrb[0].mxu0
      %v2137 = vadd.f32 0.0, %v2136
      %v2138 = vpop.f32.mrb[0].mxu0
      %v2139 = vadd.f32 0.0, %v2138
      %2140 = vmatprep.mubr.bf16.mxu0 %v1749
      %2141 = vmatmul.mubr.bf16.gmra.mrb[0].mxu0 %v1748
      %v2142 = vpop.f32.mrb[0].mxu0
      %v2143 = vadd.f32 0.0, %v2142
      %v2144 = vpop.f32.mrb[0].mxu0
      %v2145 = vadd.f32 0.0, %v2144
      %v2146 = vpop.f32.mrb[0].mxu0
      %v2147 = vadd.f32 0.0, %v2146
      %v2148 = vpop.f32.mrb[0].mxu0
      %v2149 = vadd.f32 0.0, %v2148
      %2150 = vmatprep.mubr.bf16.mxu0 %v1751
      %2151 = vmatmul.mubr.bf16.gmra.mrb[0].mxu0 %v1750
      %v2152 = vpop.f32.mrb[0].mxu0
      %v2153 = vadd.f32 0.0, %v2152
      %v2154 = vpop.f32.mrb[0].mxu0
      %v2155 = vadd.f32 0.0, %v2154
      %v2156 = vpop.f32.mrb[0].mxu0
      %v2157 = vadd.f32 0.0, %v2156
      %v2158 = vpop.f32.mrb[0].mxu0
      %v2159 = vadd.f32 0.0, %v2158
      %2160 = vmatprep.mubr.bf16.mxu0 %v1753
      %2161 = vmatmul.mubr.bf16.gmra.mrb[0].mxu0 %v1752
      %v2162 = vpop.f32.mrb[0].mxu0
      %v2163 = vadd.f32 0.0, %v2162
      %v2164 = vpop.f32.mrb[0].mxu0
      %v2165 = vadd.f32 0.0, %v2164
      %v2166 = vpop.f32.mrb[0].mxu0
      %v2167 = vpop.f32.mrb[0].mxu0
      %2168 = vdwg.mxu0
      %v2170 = vlaneseq
      %v2171 = vshrl.u32 %v2170, 7
      %v2172 = vsub.s32 0, %v2171
      %v2173 = vrot.slane %v1421, %v2172
      %v2174 = vlaneseq
      %v2175 = vshrl.u32 %v2174, 7
      %v2176 = vsub.s32 1, %v2175
      %v2177 = vrot.slane %v1421, %v2176
      %v2180 = vmul.f32 %v1853, %v2173
      %v2181 = vmul.f32 %v1855, %v2177
      %v2182 = vmul.f32 %v1857, %v2173
      %v2183 = vmul.f32 %v1859, %v2177
      %v2184 = vmul.f32 %v1863, %v2173
      %v2185 = vmul.f32 %v1865, %v2177
      %v2186 = vmul.f32 %v1867, %v2173
      %v2187 = vmul.f32 %v1869, %v2177
      %v2188 = vmul.f32 %v1873, %v2173
      %v2189 = vmul.f32 %v1875, %v2177
      %v2190 = vmul.f32 %v1877, %v2173
      %v2191 = vmul.f32 %v1879, %v2177
      %v2192 = vmul.f32 %v1883, %v2173
      %v2193 = vmul.f32 %v1885, %v2177
      %v2195 = vlaneseq
      %v2196 = vshrl.u32 %v2195, 7
      %v2197 = vsub.s32 0, %v2196
      %v2198 = vrot.slane %v1423, %v2197
      %v2199 = vlaneseq
      %v2200 = vshrl.u32 %v2199, 7
      %v2201 = vsub.s32 1, %v2200
      %v2202 = vrot.slane %v1423, %v2201
      %v2205 = vmul.f32 %v1887, %v2198
      %v2206 = vmul.f32 %v1889, %v2202
      %v2207 = vmul.f32 %v1893, %v2198
      %v2208 = vmul.f32 %v1895, %v2202
      %v2209 = vmul.f32 %v1897, %v2198
      %v2210 = vmul.f32 %v1899, %v2202
      %v2211 = vmul.f32 %v1903, %v2198
      %v2212 = vmul.f32 %v1905, %v2202
      %v2213 = vmul.f32 %v1907, %v2198
      %v2214 = vmul.f32 %v1909, %v2202
      %v2215 = vmul.f32 %v1913, %v2198
      %v2216 = vmul.f32 %v1915, %v2202
      %v2217 = vmul.f32 %v1917, %v2198
      %v2218 = vmul.f32 %v1919, %v2202
      %v2220 = vlaneseq
      %v2221 = vshrl.u32 %v2220, 7
      %v2222 = vsub.s32 0, %v2221
      %v2223 = vrot.slane %v1425, %v2222
      %v2224 = vlaneseq
      %v2225 = vshrl.u32 %v2224, 7
      %v2226 = vsub.s32 1, %v2225
      %v2227 = vrot.slane %v1425, %v2226
      %v2230 = vmul.f32 %v1923, %v2223
      %v2231 = vmul.f32 %v1925, %v2227
      %v2232 = vmul.f32 %v1927, %v2223
      %v2233 = vmul.f32 %v1929, %v2227
      %v2234 = vmul.f32 %v1933, %v2223
      %v2235 = vmul.f32 %v1935, %v2227
      %v2236 = vmul.f32 %v1937, %v2223
      %v2237 = vmul.f32 %v1939, %v2227
      %v2238 = vmul.f32 %v1943, %v2223
      %v2239 = vmul.f32 %v1945, %v2227
      %v2240 = vmul.f32 %v1947, %v2223
      %v2241 = vmul.f32 %v1949, %v2227
      %v2242 = vmul.f32 %v1953, %v2223
      %v2243 = vmul.f32 %v1955, %v2227
      %v2245 = vlaneseq
      %v2246 = vshrl.u32 %v2245, 7
      %v2247 = vsub.s32 0, %v2246
      %v2248 = vrot.slane %v1427, %v2247
      %v2249 = vlaneseq
      %v2250 = vshrl.u32 %v2249, 7
      %v2251 = vsub.s32 1, %v2250
      %v2252 = vrot.slane %v1427, %v2251
      %v2255 = vmul.f32 %v1957, %v2248
      %v2256 = vmul.f32 %v1959, %v2252
      %v2257 = vmul.f32 %v1963, %v2248
      %v2258 = vmul.f32 %v1965, %v2252
      %v2259 = vmul.f32 %v1967, %v2248
      %v2260 = vmul.f32 %v1969, %v2252
      %v2261 = vmul.f32 %v1973, %v2248
      %v2262 = vmul.f32 %v1975, %v2252
      %v2263 = vmul.f32 %v1977, %v2248
      %v2264 = vmul.f32 %v1979, %v2252
      %v2265 = vmul.f32 %v1983, %v2248
      %v2266 = vmul.f32 %v1985, %v2252
      %v2267 = vmul.f32 %v1987, %v2248
      %v2268 = vmul.f32 %v1989, %v2252
      %v2270 = vlaneseq
      %v2271 = vshrl.u32 %v2270, 7
      %v2272 = vsub.s32 0, %v2271
      %v2273 = vrot.slane %v1429, %v2272
      %v2274 = vlaneseq
      %v2275 = vshrl.u32 %v2274, 7
      %v2276 = vsub.s32 1, %v2275
      %v2277 = vrot.slane %v1429, %v2276
      %v2280 = vmul.f32 %v1993, %v2273
      %v2281 = vmul.f32 %v1995, %v2277
      %v2282 = vmul.f32 %v1997, %v2273
      %v2283 = vmul.f32 %v1999, %v2277
      %v2284 = vmul.f32 %v2003, %v2273
      %v2285 = vmul.f32 %v2005, %v2277
      %v2286 = vmul.f32 %v2007, %v2273
      %v2287 = vmul.f32 %v2009, %v2277
      %v2288 = vmul.f32 %v2013, %v2273
      %v2289 = vmul.f32 %v2015, %v2277
      %v2290 = vmul.f32 %v2017, %v2273
      %v2291 = vmul.f32 %v2019, %v2277
      %v2292 = vmul.f32 %v2023, %v2273
      %v2293 = vmul.f32 %v2025, %v2277
      %v2295 = vlaneseq
      %v2296 = vshrl.u32 %v2295, 7
      %v2297 = vsub.s32 0, %v2296
      %v2298 = vrot.slane %v1431, %v2297
      %v2299 = vlaneseq
      %v2300 = vshrl.u32 %v2299, 7
      %v2301 = vsub.s32 1, %v2300
      %v2302 = vrot.slane %v1431, %v2301
      %v2305 = vmul.f32 %v2027, %v2298
      %v2306 = vmul.f32 %v2029, %v2302
      %v2307 = vmul.f32 %v2033, %v2298
      %v2308 = vmul.f32 %v2035, %v2302
      %v2309 = vmul.f32 %v2037, %v2298
      %v2310 = vmul.f32 %v2039, %v2302
      %v2311 = vmul.f32 %v2043, %v2298
      %v2312 = vmul.f32 %v2045, %v2302
      %v2313 = vmul.f32 %v2047, %v2298
      %v2314 = vmul.f32 %v2049, %v2302
      %v2315 = vmul.f32 %v2053, %v2298
      %v2316 = vmul.f32 %v2055, %v2302
      %v2317 = vmul.f32 %v2057, %v2298
      %v2318 = vmul.f32 %v2059, %v2302
      %v2320 = vlaneseq
      %v2321 = vshrl.u32 %v2320, 7
      %v2322 = vsub.s32 0, %v2321
      %v2323 = vrot.slane %v1433, %v2322
      %v2324 = vlaneseq
      %v2325 = vshrl.u32 %v2324, 7
      %v2326 = vsub.s32 1, %v2325
      %v2327 = vrot.slane %v1433, %v2326
      %v2330 = vmul.f32 %v2063, %v2323
      %v2331 = vmul.f32 %v2065, %v2327
      %v2332 = vmul.f32 %v2067, %v2323
      %v2333 = vmul.f32 %v2069, %v2327
      %v2334 = vmul.f32 %v2073, %v2323
      %v2335 = vmul.f32 %v2075, %v2327
      %v2336 = vmul.f32 %v2077, %v2323
      %v2337 = vmul.f32 %v2079, %v2327
      %v2338 = vmul.f32 %v2083, %v2323
      %v2339 = vmul.f32 %v2085, %v2327
      %v2340 = vmul.f32 %v2087, %v2323
      %v2341 = vmul.f32 %v2089, %v2327
      %v2342 = vmul.f32 %v2093, %v2323
      %v2343 = vmul.f32 %v2095, %v2327
      %v2345 = vlaneseq
      %v2346 = vshrl.u32 %v2345, 7
      %v2347 = vsub.s32 0, %v2346
      %v2348 = vrot.slane %v1435, %v2347
      %v2349 = vlaneseq
      %v2350 = vshrl.u32 %v2349, 7
      %v2351 = vsub.s32 1, %v2350
      %v2352 = vrot.slane %v1435, %v2351
      %v2355 = vmul.f32 %v2097, %v2348
      %v2356 = vmul.f32 %v2099, %v2352
      %v2357 = vmul.f32 %v2103, %v2348
      %v2358 = vmul.f32 %v2105, %v2352
      %v2359 = vmul.f32 %v2107, %v2348
      %v2360 = vmul.f32 %v2109, %v2352
      %v2361 = vmul.f32 %v2113, %v2348
      %v2362 = vmul.f32 %v2115, %v2352
      %v2363 = vmul.f32 %v2117, %v2348
      %v2364 = vmul.f32 %v2119, %v2352
      %v2365 = vmul.f32 %v2123, %v2348
      %v2366 = vmul.f32 %v2125, %v2352
      %v2367 = vmul.f32 %v2127, %v2348
      %v2368 = vmul.f32 %v2129, %v2352
      %v2370 = vlaneseq
      %v2371 = vshrl.u32 %v2370, 7
      %v2372 = vsub.s32 0, %v2371
      %v2373 = vrot.slane %v1437, %v2372
      %v2374 = vlaneseq
      %v2375 = vshrl.u32 %v2374, 7
      %v2376 = vsub.s32 1, %v2375
      %v2377 = vrot.slane %v1437, %v2376
      %v2380 = vmul.f32 %v2133, %v2373
      %v2381 = vmul.f32 %v2135, %v2377
      %v2382 = vmul.f32 %v2137, %v2373
      %v2383 = vmul.f32 %v2139, %v2377
      %v2384 = vmul.f32 %v2143, %v2373
      %v2385 = vmul.f32 %v2145, %v2377
      %v2386 = vmul.f32 %v2147, %v2373
      %v2387 = vmul.f32 %v2149, %v2377
      %v2388 = vmul.f32 %v2153, %v2373
      %v2389 = vmul.f32 %v2155, %v2377
      %v2390 = vmul.f32 %v2157, %v2373
      %v2391 = vmul.f32 %v2159, %v2377
      %v2392 = vmul.f32 %v2163, %v2373
      %v2393 = vmul.f32 %v2165, %v2377
      %v2394 = vadd.f32 %v2180, %v2205
      %v2395 = vadd.f32 %v2181, %v2206
      %v2396 = vadd.f32 %v2182, %v2207
      %v2397 = vadd.f32 %v2183, %v2208
      %v2398 = vadd.f32 %v2184, %v2209
      %v2399 = vadd.f32 %v2185, %v2210
      %v2400 = vadd.f32 %v2186, %v2211
      %v2401 = vadd.f32 %v2187, %v2212
      %v2402 = vadd.f32 %v2188, %v2213
      %v2403 = vadd.f32 %v2189, %v2214
      %v2404 = vadd.f32 %v2190, %v2215
      %v2405 = vadd.f32 %v2191, %v2216
      %v2406 = vadd.f32 %v2192, %v2217
      %v2407 = vadd.f32 %v2193, %v2218
      %v2408 = vadd.f32 %v2230, %v2255
      %v2409 = vadd.f32 %v2231, %v2256
      %v2410 = vadd.f32 %v2232, %v2257
      %v2411 = vadd.f32 %v2233, %v2258
      %v2412 = vadd.f32 %v2234, %v2259
      %v2413 = vadd.f32 %v2235, %v2260
      %v2414 = vadd.f32 %v2236, %v2261
      %v2415 = vadd.f32 %v2237, %v2262
      %v2416 = vadd.f32 %v2238, %v2263
      %v2417 = vadd.f32 %v2239, %v2264
      %v2418 = vadd.f32 %v2240, %v2265
      %v2419 = vadd.f32 %v2241, %v2266
      %v2420 = vadd.f32 %v2242, %v2267
      %v2421 = vadd.f32 %v2243, %v2268
      %v2422 = vadd.f32 %v2280, %v2305
      %v2423 = vadd.f32 %v2281, %v2306
      %v2424 = vadd.f32 %v2282, %v2307
      %v2425 = vadd.f32 %v2283, %v2308
      %v2426 = vadd.f32 %v2284, %v2309
      %v2427 = vadd.f32 %v2285, %v2310
      %v2428 = vadd.f32 %v2286, %v2311
      %v2429 = vadd.f32 %v2287, %v2312
      %v2430 = vadd.f32 %v2288, %v2313
      %v2431 = vadd.f32 %v2289, %v2314
      %v2432 = vadd.f32 %v2290, %v2315
      %v2433 = vadd.f32 %v2291, %v2316
      %v2434 = vadd.f32 %v2292, %v2317
      %v2435 = vadd.f32 %v2293, %v2318
      %v2436 = vadd.f32 %v2330, %v2355
      %v2437 = vadd.f32 %v2331, %v2356
      %v2438 = vadd.f32 %v2332, %v2357
      %v2439 = vadd.f32 %v2333, %v2358
      %v2440 = vadd.f32 %v2334, %v2359
      %v2441 = vadd.f32 %v2335, %v2360
      %v2442 = vadd.f32 %v2336, %v2361
      %v2443 = vadd.f32 %v2337, %v2362
      %v2444 = vadd.f32 %v2338, %v2363
      %v2445 = vadd.f32 %v2339, %v2364
      %v2446 = vadd.f32 %v2340, %v2365
      %v2447 = vadd.f32 %v2341, %v2366
      %v2448 = vadd.f32 %v2342, %v2367
      %v2449 = vadd.f32 %v2343, %v2368
      %v2450 = vadd.f32 %v2394, %v2408
      %v2451 = vadd.f32 %v2395, %v2409
      %v2452 = vadd.f32 %v2396, %v2410
      %v2453 = vadd.f32 %v2397, %v2411
      %v2454 = vadd.f32 %v2398, %v2412
      %v2455 = vadd.f32 %v2399, %v2413
      %v2456 = vadd.f32 %v2400, %v2414
      %v2457 = vadd.f32 %v2401, %v2415
      %v2458 = vadd.f32 %v2402, %v2416
      %v2459 = vadd.f32 %v2403, %v2417
      %v2460 = vadd.f32 %v2404, %v2418
      %v2461 = vadd.f32 %v2405, %v2419
      %v2462 = vadd.f32 %v2406, %v2420
      %v2463 = vadd.f32 %v2407, %v2421
      %v2464 = vadd.f32 %v2422, %v2436
      %v2465 = vadd.f32 %v2423, %v2437
      %v2466 = vadd.f32 %v2424, %v2438
      %v2467 = vadd.f32 %v2425, %v2439
      %v2468 = vadd.f32 %v2426, %v2440
      %v2469 = vadd.f32 %v2427, %v2441
      %v2470 = vadd.f32 %v2428, %v2442
      %v2471 = vadd.f32 %v2429, %v2443
      %v2472 = vadd.f32 %v2430, %v2444
      %v2473 = vadd.f32 %v2431, %v2445
      %v2474 = vadd.f32 %v2432, %v2446
      %v2475 = vadd.f32 %v2433, %v2447
      %v2476 = vadd.f32 %v2434, %v2448
      %v2477 = vadd.f32 %v2435, %v2449
      %v2478 = vadd.f32 %v2450, %v2464
      %v2479 = vadd.f32 %v2451, %v2465
      %v2480 = vadd.f32 %v2452, %v2466
      %v2481 = vadd.f32 %v2453, %v2467
      %v2482 = vadd.f32 %v2454, %v2468
      %v2483 = vadd.f32 %v2455, %v2469
      %v2484 = vadd.f32 %v2456, %v2470
      %v2485 = vadd.f32 %v2457, %v2471
      %v2486 = vadd.f32 %v2458, %v2472
      %v2487 = vadd.f32 %v2459, %v2473
      %v2488 = vadd.f32 %v2460, %v2474
      %v2489 = vadd.f32 %v2461, %v2475
      %v2490 = vadd.f32 %v2462, %v2476
      %v2491 = vadd.f32 %v2463, %v2477
      %v2492 = vadd.f32 %v2478, %v2380
      %v2493 = vadd.f32 %v2479, %v2381
      %v2494 = vadd.f32 %v2480, %v2382
      %v2495 = vadd.f32 %v2481, %v2383
      %v2496 = vadd.f32 %v2482, %v2384
      %v2497 = vadd.f32 %v2483, %v2385
      %v2498 = vadd.f32 %v2484, %v2386
      %v2499 = vadd.f32 %v2485, %v2387
      %v2500 = vadd.f32 %v2486, %v2388
      %v2501 = vadd.f32 %v2487, %v2389
      %v2502 = vadd.f32 %v2488, %v2390
      %v2503 = vadd.f32 %v2489, %v2391
      %v2504 = vadd.f32 %v2490, %v2392
      %v2505 = vadd.f32 %v2491, %v2393
      %s2506 = scalar_lea.vmem %s9, 4
      %v2507 = vld [vmem:[%s2506] ss:$8 sm:$0x3]
      %v2509 = vlaneseq
      %v2510 = vshrl.u32 %v2509, 7
      %v2511 = vsub.s32 0, %v2510
      %v2512 = vrot.slane %v2507, %v2511
      %v2513 = vlaneseq
      %v2514 = vshrl.u32 %v2513, 7
      %v2515 = vsub.s32 1, %v2514
      %v2516 = vrot.slane %v2507, %v2515
      %v2519 = vmul.f32 %v2492, %v2512
      %v2520 = vmul.f32 %v2493, %v2516
      %v2521 = vmul.f32 %v2494, %v2512
      %v2522 = vmul.f32 %v2495, %v2516
      %v2523 = vmul.f32 %v2496, %v2512
      %v2524 = vmul.f32 %v2497, %v2516
      %v2525 = vmul.f32 %v2498, %v2512
      %v2526 = vmul.f32 %v2499, %v2516
      %v2527 = vmul.f32 %v2500, %v2512
      %v2528 = vmul.f32 %v2501, %v2516
      %v2529 = vmul.f32 %v2502, %v2512
      %v2530 = vmul.f32 %v2503, %v2516
      %v2531 = vmul.f32 %v2504, %v2512
      %v2532 = vmul.f32 %v2505, %v2516
      %s2533 = scalar_lea.vmem %s9, 5
      %v2534 = vld [vmem:[%s2533] ss:$8 sm:$0x3]
      %v2536 = vlaneseq
      %v2537 = vshrl.u32 %v2536, 7
      %v2538 = vsub.s32 0, %v2537
      %v2539 = vrot.slane %v2534, %v2538
      %v2540 = vlaneseq
      %v2541 = vshrl.u32 %v2540, 7
      %v2542 = vsub.s32 1, %v2541
      %v2543 = vrot.slane %v2534, %v2542
      %v2546 = vadd.f32 %v2519, %v2539
      %v2547 = vadd.f32 %v2520, %v2543
      %v2548 = vadd.f32 %v2521, %v2539
      %v2549 = vadd.f32 %v2522, %v2543
      %v2550 = vadd.f32 %v2523, %v2539
      %v2551 = vadd.f32 %v2524, %v2543
      %v2552 = vadd.f32 %v2525, %v2539
      %v2553 = vadd.f32 %v2526, %v2543
      %v2554 = vadd.f32 %v2527, %v2539
      %v2555 = vadd.f32 %v2528, %v2543
      %v2556 = vadd.f32 %v2529, %v2539
      %v2557 = vadd.f32 %v2530, %v2543
      %v2558 = vadd.f32 %v2531, %v2539
      %v2559 = vadd.f32 %v2532, %v2543
      %v2560 = vmax.f32 %v2546, 0.0
      %v2561 = vmax.f32 %v2547, 0.0
      %v2562 = vmax.f32 %v2548, 0.0
      %v2563 = vmax.f32 %v2549, 0.0
      %v2564 = vmax.f32 %v2550, 0.0
      %v2565 = vmax.f32 %v2551, 0.0
      %v2566 = vmax.f32 %v2552, 0.0
      %v2567 = vmax.f32 %v2553, 0.0
      %v2568 = vmax.f32 %v2554, 0.0
      %v2569 = vmax.f32 %v2555, 0.0
      %v2570 = vmax.f32 %v2556, 0.0
      %v2571 = vmax.f32 %v2557, 0.0
      %v2572 = vmax.f32 %v2558, 0.0
      %v2573 = vmax.f32 %v2559, 0.0
      %v2574 = vmin.f32 %v2560, 6.0
      %v2575 = vmin.f32 %v2561, 6.0
      %v2576 = vmin.f32 %v2562, 6.0
      %v2577 = vmin.f32 %v2563, 6.0
      %v2578 = vmin.f32 %v2564, 6.0
      %v2579 = vmin.f32 %v2565, 6.0
      %v2580 = vmin.f32 %v2566, 6.0
      %v2581 = vmin.f32 %v2567, 6.0
      %v2582 = vmin.f32 %v2568, 6.0
      %v2583 = vmin.f32 %v2569, 6.0
      %v2584 = vmin.f32 %v2570, 6.0
      %v2585 = vmin.f32 %v2571, 6.0
      %v2586 = vmin.f32 %v2572, 6.0
      %v2587 = vmin.f32 %v2573, 6.0
      %v2588 = vpack.c.bf16 %v2576, %v2574
      %v2589 = vpack.c.bf16 %v2577, %v2575
      %v2590 = vpack.c.bf16 %v2580, %v2578
      %v2591 = vpack.c.bf16 %v2581, %v2579
      %v2592 = vpack.c.bf16 %v2584, %v2582
      %v2593 = vpack.c.bf16 %v2585, %v2583
      %v2594 = vpack.c.bf16 %v2586, %v2586
      %v2595 = vpack.c.bf16 %v2587, %v2587
      %v2596 = vld [vmem:[%s3] sm:$0xf]
      %v2597 = vld [vmem:[%s3 + $0x4] sm:$0xf]
      %v2598 = vld [vmem:[%s3 + $0x8] sm:$0xf]
      %v2599 = vld [vmem:[%s3 + $0xc] sm:$0xf]
      %v2600 = vld [vmem:[%s3 + $0x10] sm:$0xf]
      %v2601 = vld [vmem:[%s3 + $0x14] sm:$0xf]
      %v2602 = vld [vmem:[%s3 + $0x18] sm:$0xf]
      %v2603 = vld [vmem:[%s3 + $0x1c] sm:$0xf]
      %v2604 = vld [vmem:[%s3 + $0x20] sm:$0xf]
      %v2605 = vld [vmem:[%s3 + $0x24] sm:$0xf]
      %v2606 = vld [vmem:[%s3 + $0x28] sm:$0xf]
      %v2607 = vld [vmem:[%s3 + $0x2c] sm:$0xf]
      %v2608 = vld [vmem:[%s3 + $0x30] sm:$0xf]
      %v2609 = vld [vmem:[%s3 + $0x34] sm:$0xf]
      %v2610 = vld [vmem:[%s3 + $0x38] sm:$0xf]
      %v2611 = vld [vmem:[%s3 + $0x3c] sm:$0xf]
      %v2612 = vld [vmem:[%s3 + $0x40] sm:$0xf]
      %v2613 = vld [vmem:[%s3 + $0x44] sm:$0xf]
      %v2614 = vld [vmem:[%s3 + $0x48] sm:$0xf]
      %v2615 = vld [vmem:[%s3 + $0x4c] sm:$0xf]
      %v2616 = vld [vmem:[%s3 + $0x50] sm:$0xf]
      %v2617 = vld [vmem:[%s3 + $0x54] sm:$0xf]
      %v2618 = vld [vmem:[%s3 + $0x58] sm:$0xf]
      %v2619 = vld [vmem:[%s3 + $0x5c] sm:$0xf]
      %v2644 = vunpack.c.l.b16 %v2596
      %v2645 = vunpack.c.l.b16 %v2597
      %v2646 = vunpack.c.l.b16 %v2598
      %v2647 = vunpack.c.l.b16 %v2599
      %v2648 = vunpack.c.l.b16 %v2600
      %v2649 = vunpack.c.l.b16 %v2601
      %v2650 = vunpack.c.l.b16 %v2602
      %v2651 = vunpack.c.l.b16 %v2603
      %v2652 = vunpack.c.l.b16 %v2604
      %v2653 = vunpack.c.l.b16 %v2605
      %v2654 = vunpack.c.l.b16 %v2606
      %v2655 = vunpack.c.l.b16 %v2607
      %v2656 = vunpack.c.l.b16 %v2608
      %v2657 = vunpack.c.l.b16 %v2609
      %v2658 = vunpack.c.l.b16 %v2610
      %v2659 = vunpack.c.l.b16 %v2611
      %v2660 = vunpack.c.l.b16 %v2612
      %v2661 = vunpack.c.l.b16 %v2613
      %v2662 = vunpack.c.l.b16 %v2614
      %v2663 = vunpack.c.l.b16 %v2615
      %v2664 = vunpack.c.l.b16 %v2616
      %v2665 = vunpack.c.l.b16 %v2617
      %v2666 = vunpack.c.l.b16 %v2618
      %v2667 = vunpack.c.l.b16 %v2619
      %v2668 = vpack.c.b16 %v2645, %v2644
      %v2669 = vpack.c.b16 %v2647, %v2646
      %v2670 = vpack.c.b16 %v2649, %v2648
      %v2671 = vpack.c.b16 %v2651, %v2650
      %v2672 = vpack.c.b16 %v2653, %v2652
      %v2673 = vpack.c.b16 %v2655, %v2654
      %v2674 = vpack.c.b16 %v2657, %v2656
      %v2675 = vpack.c.b16 %v2659, %v2658
      %v2676 = vpack.c.b16 %v2661, %v2660
      %v2677 = vpack.c.b16 %v2663, %v2662
      %v2678 = vpack.c.b16 %v2665, %v2664
      %v2679 = vpack.c.b16 %v2667, %v2666
      %vm2692 = vcmask 523264
      %v2694 = vsel %vm2692, %v2589, 0
      %v2697 = vsel %vm2692, %v2591, 0
      %v2700 = vsel %vm2692, %v2593, 0
      %v2703 = vsel %vm2692, %v2595, 0
      %2705 = vmatprep.subr.bf16.mxu0 0
      %2706 = vmatpush1.bf16.msra.mxu0 %v2668
      %2707 = vmatprep.subr.bf16.mxu0 0
      %2708 = vmatpush1.bf16.msra.mxu0 %v2669
      %2709 = vmatprep.subr.bf16.mxu0 0
      %2710 = vmatpush1.bf16.msra.mxu0 %v2670
      %2711 = vmatprep.subr.bf16.mxu0 0
      %2712 = vmatpush1.bf16.msra.mxu0 %v2671
      %2713 = vmatprep.subr.bf16.mxu0 0
      %2714 = vmatpush1.bf16.msra.mxu0 %v2672
      %2715 = vmatprep.subr.bf16.mxu0 0
      %2716 = vmatpush1.bf16.msra.mxu0 %v2673
      %2717 = vmatprep.subr.bf16.mxu0 0
      %2718 = vmatpush1.bf16.msra.mxu0 %v2674
      %2719 = vmatprep.subr.bf16.mxu0 0
      %2720 = vmatpush1.bf16.msra.mxu0 %v2675
      %2721 = vmatprep.subr.bf16.mxu0 0
      %2722 = vmatpush1.bf16.msra.mxu0 %v2676
      %2723 = vmatprep.subr.bf16.mxu0 0
      %2724 = vmatpush1.bf16.msra.mxu0 %v2677
      %2725 = vmatprep.subr.bf16.mxu0 0
      %2726 = vmatpush1.bf16.msra.mxu0 %v2678
      %2727 = vmatprep.subr.bf16.mxu0 0
      %2728 = vmatpush1.bf16.msra.mxu0 %v2679
      %2729 = vmatprep.subr.bf16.mxu0 0
      %2730 = vmatpush1.bf16.msra.mxu0 0
      %2731 = vmatprep.subr.bf16.mxu0 0
      %2732 = vmatpush1.bf16.msra.mxu0 0
      %2733 = vmatprep.subr.bf16.mxu0 0
      %2734 = vmatpush1.bf16.msra.mxu0 0
      %2735 = vmatprep.subr.bf16.mxu0 0
      %2736 = vmatpush1.bf16.msra.mxu0 0
      %2737 = vmatprep.mubr.bf16.mxu0 %v2694
      %2738 = vmatmul.mubr.bf16.gmra.mrb[0].mxu0 %v2588
      %v2739 = vpop.f32.mrb[0].mxu0
      %v2740 = vadd.f32 0.0, %v2739
      %v2741 = vpop.f32.mrb[0].mxu0
      %v2742 = vpop.f32.mrb[0].mxu0
      %v2743 = vadd.f32 0.0, %v2742
      %v2744 = vpop.f32.mrb[0].mxu0
      %2745 = vmatprep.mubr.bf16.mxu0 %v2697
      %2746 = vmatmul.mubr.bf16.gmra.mrb[0].mxu0 %v2590
      %v2747 = vpop.f32.mrb[0].mxu0
      %v2748 = vadd.f32 0.0, %v2747
      %v2749 = vpop.f32.mrb[0].mxu0
      %v2750 = vpop.f32.mrb[0].mxu0
      %v2751 = vadd.f32 0.0, %v2750
      %v2752 = vpop.f32.mrb[0].mxu0
      %2753 = vmatprep.mubr.bf16.mxu0 %v2700
      %2754 = vmatmul.mubr.bf16.gmra.mrb[0].mxu0 %v2592
      %v2755 = vpop.f32.mrb[0].mxu0
      %v2756 = vadd.f32 0.0, %v2755
      %v2757 = vpop.f32.mrb[0].mxu0
      %v2758 = vpop.f32.mrb[0].mxu0
      %v2759 = vadd.f32 0.0, %v2758
      %v2760 = vpop.f32.mrb[0].mxu0
      %2761 = vmatprep.mubr.bf16.mxu0 %v2703
      %2762 = vmatmul.mubr.bf16.gmra.mrb[0].mxu0 %v2594
      %v2763 = vpop.f32.mrb[0].mxu0
      %v2764 = vadd.f32 0.0, %v2763
      %v2765 = vpop.f32.mrb[0].mxu0
      %v2766 = vpop.f32.mrb[0].mxu0
      %v2767 = vpop.f32.mrb[0].mxu0
      %2768 = vdwg.mxu0
      %v2769 = vld [vmem:[%s9 + $0x6] ss:$0 sm:$0xff]
      %v2770 = vmul.f32 %v2740, %v2769
      %v2771 = vmul.f32 %v2743, %v2769
      %v2772 = vmul.f32 %v2748, %v2769
      %v2773 = vmul.f32 %v2751, %v2769
      %v2774 = vmul.f32 %v2756, %v2769
      %v2775 = vmul.f32 %v2759, %v2769
      %v2776 = vmul.f32 %v2764, %v2769
      %v2777 = vld [vmem:[%s9 + $0x7] ss:$0 sm:$0xff]
      %v2778 = vadd.f32 %v2770, %v2777
      %v2779 = vadd.f32 %v2771, %v2777
      %v2780 = vadd.f32 %v2772, %v2777
      %v2781 = vadd.f32 %v2773, %v2777
      %v2782 = vadd.f32 %v2774, %v2777
      %v2783 = vadd.f32 %v2775, %v2777
      %v2784 = vadd.f32 %v2776, %v2777
      %v2785 = vpack.c.bf16 %v2779, %v2778
      %v2786 = vpack.c.bf16 %v2781, %v2780
      %v2787 = vpack.c.bf16 %v2783, %v2782
      %v2788 = vpack.c.bf16 %v2784, %v2784
      %v2789 = vld [vmem:[%s4] sm:$0xff]
      %v2790 = vld [vmem:[%s4 + $0x8] sm:$0xff]
      %v2791 = vld [vmem:[%s4 + $0x10] sm:$0xff]
      %v2792 = vld [vmem:[%s4 + $0x18] sm:$0xff]
      %v2797 = vunpack.c.l.b16 %v2789
      %v2798 = vunpack.c.h.b16 %v2789
      %v2799 = vunpack.c.l.b16 %v2790
      %v2800 = vunpack.c.h.b16 %v2790
      %v2801 = vunpack.c.l.b16 %v2791
      %v2802 = vunpack.c.h.b16 %v2791
      %v2803 = vunpack.c.l.b16 %v2792
      %v2804 = vunpack.c.h.b16 %v2792
      %v2805 = vpack.c.b16 %v2799, %v2797
      %v2806 = vpack.c.b16 %v2800, %v2798
      %v2807 = vpack.c.b16 %v2803, %v2801
      %v2808 = vpack.c.b16 %v2804, %v2802
      %v2814 = vsel %vm485, %v2785, 0
      %v2817 = vsel %vm485, %v2786, 0
      %v2820 = vsel %vm485, %v2787, 0
      %v2823 = vsel %vm485, %v2788, 0
      %2825 = vmatprep.subr.bf16.mxu0 %v2806
      %2826 = vmatpush1.bf16.msra.mxu0 %v2805
      %2827 = vmatprep.subr.bf16.mxu0 %v2808
      %2828 = vmatpush1.bf16.msra.mxu0 %v2807
      %2829 = vmatprep.subr.bf16.mxu0 0
      %2830 = vmatpush1.bf16.msra.mxu0 0
      %2831 = vmatprep.subr.bf16.mxu0 0
      %2832 = vmatpush1.bf16.msra.mxu0 0
      %2833 = vmatprep.subr.bf16.mxu0 0
      %2834 = vmatpush1.bf16.msra.mxu0 0
      %2835 = vmatprep.subr.bf16.mxu0 0
      %2836 = vmatpush1.bf16.msra.mxu0 0
      %2837 = vmatprep.subr.bf16.mxu0 0
      %2838 = vmatpush1.bf16.msra.mxu0 0
      %2839 = vmatprep.subr.bf16.mxu0 0
      %2840 = vmatpush1.bf16.msra.mxu0 0
      %2841 = vmatprep.subr.bf16.mxu0 0
      %2842 = vmatpush1.bf16.msra.mxu0 0
      %2843 = vmatprep.subr.bf16.mxu0 0
      %2844 = vmatpush1.bf16.msra.mxu0 0
      %2845 = vmatprep.subr.bf16.mxu0 0
      %2846 = vmatpush1.bf16.msra.mxu0 0
      %2847 = vmatprep.subr.bf16.mxu0 0
      %2848 = vmatpush1.bf16.msra.mxu0 0
      %2849 = vmatprep.subr.bf16.mxu0 0
      %2850 = vmatpush1.bf16.msra.mxu0 0
      %2851 = vmatprep.subr.bf16.mxu0 0
      %2852 = vmatpush1.bf16.msra.mxu0 0
      %2853 = vmatprep.subr.bf16.mxu0 0
      %2854 = vmatpush1.bf16.msra.mxu0 0
      %2855 = vmatprep.subr.bf16.mxu0 0
      %2856 = vmatpush1.bf16.msra.mxu0 0
      %2857 = vmatprep.mubr.bf16.mxu0 0
      %2858 = vmatmul.mubr.bf16.gmra.mrb[0].mxu0 %v2814
      %v2859 = vpop.f32.mrb[0].mxu0
      %v2860 = vadd.f32 0.0, %v2859
      %v2861 = vpop.f32.mrb[0].mxu0
      %v2862 = vadd.f32 0.0, %v2861
      %v2863 = vpop.f32.mrb[0].mxu0
      %v2864 = vadd.f32 0.0, %v2863
      %v2865 = vpop.f32.mrb[0].mxu0
      %v2866 = vadd.f32 0.0, %v2865
      %2867 = vmatprep.mubr.bf16.mxu0 0
      %2868 = vmatmul.mubr.bf16.gmra.mrb[0].mxu0 %v2817
      %v2869 = vpop.f32.mrb[0].mxu0
      %v2870 = vadd.f32 0.0, %v2869
      %v2871 = vpop.f32.mrb[0].mxu0
      %v2872 = vadd.f32 0.0, %v2871
      %v2873 = vpop.f32.mrb[0].mxu0
      %v2874 = vadd.f32 0.0, %v2873
      %v2875 = vpop.f32.mrb[0].mxu0
      %v2876 = vadd.f32 0.0, %v2875
      %2877 = vmatprep.mubr.bf16.mxu0 0
      %2878 = vmatmul.mubr.bf16.gmra.mrb[0].mxu0 %v2820
      %v2879 = vpop.f32.mrb[0].mxu0
      %v2880 = vadd.f32 0.0, %v2879
      %v2881 = vpop.f32.mrb[0].mxu0
      %v2882 = vadd.f32 0.0, %v2881
      %v2883 = vpop.f32.mrb[0].mxu0
      %v2884 = vadd.f32 0.0, %v2883
      %v2885 = vpop.f32.mrb[0].mxu0
      %v2886 = vadd.f32 0.0, %v2885
      %2887 = vmatprep.mubr.bf16.mxu0 0
      %2888 = vmatmul.mubr.bf16.gmra.mrb[0].mxu0 %v2823
      %v2889 = vpop.f32.mrb[0].mxu0
      %v2890 = vadd.f32 0.0, %v2889
      %v2891 = vpop.f32.mrb[0].mxu0
      %v2892 = vadd.f32 0.0, %v2891
      %v2893 = vpop.f32.mrb[0].mxu0
      %v2894 = vpop.f32.mrb[0].mxu0
      %2895 = vdwg.mxu0
      %s2896 = scalar_lea.vmem %s9, 24
      %v2897 = vld [vmem:[%s2896] ss:$8 sm:$0x3]
      %v2899 = vlaneseq
      %v2900 = vshrl.u32 %v2899, 7
      %v2901 = vsub.s32 0, %v2900
      %v2902 = vrot.slane %v2897, %v2901
      %v2903 = vlaneseq
      %v2904 = vshrl.u32 %v2903, 7
      %v2905 = vsub.s32 1, %v2904
      %v2906 = vrot.slane %v2897, %v2905
      %v2909 = vmul.f32 %v2860, %v2902
      %v2910 = vmul.f32 %v2862, %v2906
      %v2911 = vmul.f32 %v2864, %v2902
      %v2912 = vmul.f32 %v2866, %v2906
      %v2913 = vmul.f32 %v2870, %v2902
      %v2914 = vmul.f32 %v2872, %v2906
      %v2915 = vmul.f32 %v2874, %v2902
      %v2916 = vmul.f32 %v2876, %v2906
      %v2917 = vmul.f32 %v2880, %v2902
      %v2918 = vmul.f32 %v2882, %v2906
      %v2919 = vmul.f32 %v2884, %v2902
      %v2920 = vmul.f32 %v2886, %v2906
      %v2921 = vmul.f32 %v2890, %v2902
      %v2922 = vmul.f32 %v2892, %v2906
      %s2923 = scalar_lea.vmem %s9, 25
      %v2924 = vld [vmem:[%s2923] ss:$8 sm:$0x3]
      %v2926 = vlaneseq
      %v2927 = vshrl.u32 %v2926, 7
      %v2928 = vsub.s32 0, %v2927
      %v2929 = vrot.slane %v2924, %v2928
      %v2930 = vlaneseq
      %v2931 = vshrl.u32 %v2930, 7
      %v2932 = vsub.s32 1, %v2931
      %v2933 = vrot.slane %v2924, %v2932
      %v2936 = vadd.f32 %v2909, %v2929
      %v2937 = vadd.f32 %v2910, %v2933
      %v2938 = vadd.f32 %v2911, %v2929
      %v2939 = vadd.f32 %v2912, %v2933
      %v2940 = vadd.f32 %v2913, %v2929
      %v2941 = vadd.f32 %v2914, %v2933
      %v2942 = vadd.f32 %v2915, %v2929
      %v2943 = vadd.f32 %v2916, %v2933
      %v2944 = vadd.f32 %v2917, %v2929
      %v2945 = vadd.f32 %v2918, %v2933
      %v2946 = vadd.f32 %v2919, %v2929
      %v2947 = vadd.f32 %v2920, %v2933
      %v2948 = vadd.f32 %v2921, %v2929
      %v2949 = vadd.f32 %v2922, %v2933
      %v2950 = vmax.f32 %v2936, 0.0
      %v2951 = vmax.f32 %v2937, 0.0
      %v2952 = vmax.f32 %v2938, 0.0
      %v2953 = vmax.f32 %v2939, 0.0
      %v2954 = vmax.f32 %v2940, 0.0
      %v2955 = vmax.f32 %v2941, 0.0
      %v2956 = vmax.f32 %v2942, 0.0
      %v2957 = vmax.f32 %v2943, 0.0
      %v2958 = vmax.f32 %v2944, 0.0
      %v2959 = vmax.f32 %v2945, 0.0
      %v2960 = vmax.f32 %v2946, 0.0
      %v2961 = vmax.f32 %v2947, 0.0
      %v2962 = vmax.f32 %v2948, 0.0
      %v2963 = vmax.f32 %v2949, 0.0
      %v2964 = vmin.f32 %v2950, 6.0
      %v2965 = vmin.f32 %v2951, 6.0
      %v2966 = vmin.f32 %v2952, 6.0
      %v2967 = vmin.f32 %v2953, 6.0
      %v2968 = vmin.f32 %v2954, 6.0
      %v2969 = vmin.f32 %v2955, 6.0
      %v2970 = vmin.f32 %v2956, 6.0
      %v2971 = vmin.f32 %v2957, 6.0
      %v2972 = vmin.f32 %v2958, 6.0
      %v2973 = vmin.f32 %v2959, 6.0
      %v2974 = vmin.f32 %v2960, 6.0
      %v2975 = vmin.f32 %v2961, 6.0
      %v2976 = vmin.f32 %v2962, 6.0
      %v2977 = vmin.f32 %v2963, 6.0
      %v2978 = vpack.c.bf16 %v2966, %v2964
      %v2979 = vpack.c.bf16 %v2967, %v2965
      %v2980 = vpack.c.bf16 %v2970, %v2968
      %v2981 = vpack.c.bf16 %v2971, %v2969
      %v2982 = vpack.c.bf16 %v2974, %v2972
      %v2983 = vpack.c.bf16 %v2975, %v2973
      %v2984 = vpack.c.bf16 %v2976, %v2976
      %v2985 = vpack.c.bf16 %v2977, %v2977
      %s2986 = scalar_lea.vmem %s9, 120
      %v2987 = vld [vmem:[%s2986] ss:$8 sm:$0x3]
      %s2988 = scalar_lea.vmem %s9, 121
      %v2989 = vld [vmem:[%s2988] ss:$8 sm:$0x3]
      %s2990 = scalar_lea.vmem %s9, 122
      %v2991 = vld [vmem:[%s2990] ss:$8 sm:$0x3]
      %s2992 = scalar_lea.vmem %s9, 123
      %v2993 = vld [vmem:[%s2992] ss:$8 sm:$0x3]
      %s2994 = scalar_lea.vmem %s9, 124
      %v2995 = vld [vmem:[%s2994] ss:$8 sm:$0x3]
      %s2996 = scalar_lea.vmem %s9, 125
      %v2997 = vld [vmem:[%s2996] ss:$8 sm:$0x3]
      %s2998 = scalar_lea.vmem %s9, 126
      %v2999 = vld [vmem:[%s2998] ss:$8 sm:$0x3]
      %s3000 = scalar_lea.vmem %s9, 127
      %v3001 = vld [vmem:[%s3000] ss:$8 sm:$0x3]
      %s3002 = scalar_lea.vmem %s9, 144
      %v3003 = vld [vmem:[%s3002] ss:$8 sm:$0x3]
      %v3004 = vld [vmem:[%s8] sm:$0xf]
      %v3005 = vld [vmem:[%s8 + $0x4] sm:$0xf]
      %v3006 = vld [vmem:[%s8 + $0x8] sm:$0xf]
      %v3007 = vld [vmem:[%s8 + $0xc] sm:$0xf]
      %v3008 = vld [vmem:[%s8 + $0x10] sm:$0xf]
      %v3009 = vld [vmem:[%s8 + $0x14] sm:$0xf]
      %v3010 = vld [vmem:[%s8 + $0x18] sm:$0xf]
      %v3011 = vld [vmem:[%s8 + $0x1c] sm:$0xf]
      %v3012 = vld [vmem:[%s8 + $0x20] sm:$0xf]
      %v3013 = vld [vmem:[%s8 + $0x24] sm:$0xf]
      %v3014 = vld [vmem:[%s8 + $0x28] sm:$0xf]
      %v3015 = vld [vmem:[%s8 + $0x2c] sm:$0xf]
      %v3016 = vld [vmem:[%s8 + $0x30] sm:$0xf]
      %v3017 = vld [vmem:[%s8 + $0x34] sm:$0xf]
      %v3018 = vld [vmem:[%s8 + $0x38] sm:$0xf]
      %v3019 = vld [vmem:[%s8 + $0x3c] sm:$0xf]
      %v3020 = vld [vmem:[%s8 + $0x40] sm:$0xf]
      %v3021 = vld [vmem:[%s8 + $0x44] sm:$0xf]
      %v3040 = vunpack.c.l.b16 %v3004
      %v3041 = vunpack.c.l.b16 %v3005
      %v3042 = vunpack.c.l.b16 %v3006
      %v3043 = vunpack.c.l.b16 %v3007
      %v3044 = vunpack.c.l.b16 %v3008
      %v3045 = vunpack.c.l.b16 %v3009
      %v3046 = vunpack.c.l.b16 %v3010
      %v3047 = vunpack.c.l.b16 %v3011
      %v3048 = vunpack.c.l.b16 %v3012
      %v3049 = vunpack.c.l.b16 %v3013
      %v3050 = vunpack.c.l.b16 %v3014
      %v3051 = vunpack.c.l.b16 %v3015
      %v3052 = vunpack.c.l.b16 %v3016
      %v3053 = vunpack.c.l.b16 %v3017
      %v3054 = vunpack.c.l.b16 %v3018
      %v3055 = vunpack.c.l.b16 %v3019
      %v3056 = vunpack.c.l.b16 %v3020
      %v3057 = vunpack.c.l.b16 %v3021
      %v3058 = vpack.c.b16 %v3041, %v3040
      %v3059 = vpack.c.b16 %v3043, %v3042
      %v3060 = vpack.c.b16 %v3045, %v3044
      %v3061 = vpack.c.b16 %v3047, %v3046
      %v3062 = vpack.c.b16 %v3049, %v3048
      %v3063 = vpack.c.b16 %v3051, %v3050
      %v3064 = vpack.c.b16 %v3053, %v3052
      %v3065 = vpack.c.b16 %v3055, %v3054
      %v3066 = vpack.c.b16 %v3057, %v3056
      %vm3067 = vcmask 457728
      %v3069 = vsel %vm3067, %v3058, 0
      %v3072 = vsel %vm3067, %v3059, 0
      %v3075 = vsel %vm3067, %v3060, 0
      %v3078 = vsel %vm3067, %v3061, 0
      %v3081 = vsel %vm3067, %v3062, 0
      %v3084 = vsel %vm3067, %v3063, 0
      %v3087 = vsel %vm3067, %v3064, 0
      %v3090 = vsel %vm3067, %v3065, 0
      %v3093 = vsel %vm3067, %v3066, 0
      %vm3095 = vcmask 1043456
      %v3097 = vsel %vm3095, %v2984, 0
      %v3100 = vsel %vm3095, %v2985, 0
      %3102 = vmatprep.subr.bf16.mxu0 %v2979
      %3103 = vmatpush1.bf16.msra.mxu0 %v2978
      %3104 = vmatprep.subr.bf16.mxu0 %v2981
      %3105 = vmatpush1.bf16.msra.mxu0 %v2980
      %3106 = vmatprep.subr.bf16.mxu0 %v2983
      %3107 = vmatpush1.bf16.msra.mxu0 %v2982
      %3108 = vmatprep.subr.bf16.mxu0 %v3100
      %3109 = vmatpush1.bf16.msra.mxu0 %v3097
      %3110 = vmatprep.subr.bf16.mxu0 0
      %3111 = vmatpush1.bf16.msra.mxu0 0
      %3112 = vmatprep.subr.bf16.mxu0 0
      %3113 = vmatpush1.bf16.msra.mxu0 0
      %3114 = vmatprep.subr.bf16.mxu0 0
      %3115 = vmatpush1.bf16.msra.mxu0 0
      %3116 = vmatprep.subr.bf16.mxu0 0
      %3117 = vmatpush1.bf16.msra.mxu0 0
      %3118 = vmatprep.subr.bf16.mxu0 0
      %3119 = vmatpush1.bf16.msra.mxu0 0
      %3120 = vmatprep.subr.bf16.mxu0 0
      %3121 = vmatpush1.bf16.msra.mxu0 0
      %3122 = vmatprep.subr.bf16.mxu0 0
      %3123 = vmatpush1.bf16.msra.mxu0 0
      %3124 = vmatprep.subr.bf16.mxu0 0
      %3125 = vmatpush1.bf16.msra.mxu0 0
      %3126 = vmatprep.subr.bf16.mxu0 0
      %3127 = vmatpush1.bf16.msra.mxu0 0
      %3128 = vmatprep.subr.bf16.mxu0 0
      %3129 = vmatpush1.bf16.msra.mxu0 0
      %3130 = vmatprep.subr.bf16.mxu0 0
      %3131 = vmatpush1.bf16.msra.mxu0 0
      %3132 = vmatprep.subr.bf16.mxu0 0
      %3133 = vmatpush1.bf16.msra.mxu0 0
      %3134 = vmatprep.mubr.bf16.mxu0 0
      %3135 = vmatmul.mubr.bf16.gmra.mrb[0].mxu0 %v3069
      %v3136 = vpop.f32.mrb[0].mxu0
      %v3137 = vadd.f32 0.0, %v3136
      %v3138 = vpop.f32.mrb[0].mxu0
      %v3139 = vadd.f32 0.0, %v3138
      %v3140 = vpop.f32.mrb[0].mxu0
      %v3141 = vadd.f32 0.0, %v3140
      %v3142 = vpop.f32.mrb[0].mxu0
      %v3143 = vadd.f32 0.0, %v3142
      %3144 = vmatprep.mubr.bf16.mxu0 0
      %3145 = vmatmul.mubr.bf16.gmra.mrb[0].mxu0 %v3072
      %v3146 = vpop.f32.mrb[0].mxu0
      %v3147 = vadd.f32 0.0, %v3146
      %v3148 = vpop.f32.mrb[0].mxu0
      %v3149 = vadd.f32 0.0, %v3148
      %v3150 = vpop.f32.mrb[0].mxu0
      %v3151 = vadd.f32 0.0, %v3150
      %v3152 = vpop.f32.mrb[0].mxu0
      %v3153 = vadd.f32 0.0, %v3152
      %3154 = vmatprep.mubr.bf16.mxu0 0
      %3155 = vmatmul.mubr.bf16.gmra.mrb[0].mxu0 %v3075
      %v3156 = vpop.f32.mrb[0].mxu0
      %v3157 = vadd.f32 0.0, %v3156
      %v3158 = vpop.f32.mrb[0].mxu0
      %v3159 = vadd.f32 0.0, %v3158
      %v3160 = vpop.f32.mrb[0].mxu0
      %v3161 = vadd.f32 0.0, %v3160
      %v3162 = vpop.f32.mrb[0].mxu0
      %v3163 = vadd.f32 0.0, %v3162
      %3164 = vmatprep.mubr.bf16.mxu0 0
      %3165 = vmatmul.mubr.bf16.gmra.mrb[0].mxu0 %v3078
      %v3166 = vpop.f32.mrb[0].mxu0
      %v3167 = vadd.f32 0.0, %v3166
      %v3168 = vpop.f32.mrb[0].mxu0
      %v3169 = vadd.f32 0.0, %v3168
      %v3170 = vpop.f32.mrb[0].mxu0
      %v3171 = vadd.f32 0.0, %v3170
      %v3172 = vpop.f32.mrb[0].mxu0
      %v3173 = vadd.f32 0.0, %v3172
      %3174 = vmatprep.mubr.bf16.mxu0 0
      %3175 = vmatmul.mubr.bf16.gmra.mrb[0].mxu0 %v3081
      %v3176 = vpop.f32.mrb[0].mxu0
      %v3177 = vadd.f32 0.0, %v3176
      %v3178 = vpop.f32.mrb[0].mxu0
      %v3179 = vadd.f32 0.0, %v3178
      %v3180 = vpop.f32.mrb[0].mxu0
      %v3181 = vadd.f32 0.0, %v3180
      %v3182 = vpop.f32.mrb[0].mxu0
      %v3183 = vadd.f32 0.0, %v3182
      %3184 = vmatprep.mubr.bf16.mxu0 0
      %3185 = vmatmul.mubr.bf16.gmra.mrb[0].mxu0 %v3084
      %v3186 = vpop.f32.mrb[0].mxu0
      %v3187 = vadd.f32 0.0, %v3186
      %v3188 = vpop.f32.mrb[0].mxu0
      %v3189 = vadd.f32 0.0, %v3188
      %v3190 = vpop.f32.mrb[0].mxu0
      %v3191 = vadd.f32 0.0, %v3190
      %v3192 = vpop.f32.mrb[0].mxu0
      %v3193 = vadd.f32 0.0, %v3192
      %3194 = vmatprep.mubr.bf16.mxu0 0
      %3195 = vmatmul.mubr.bf16.gmra.mrb[0].mxu0 %v3087
      %v3196 = vpop.f32.mrb[0].mxu0
      %v3197 = vadd.f32 0.0, %v3196
      %v3198 = vpop.f32.mrb[0].mxu0
      %v3199 = vadd.f32 0.0, %v3198
      %v3200 = vpop.f32.mrb[0].mxu0
      %v3201 = vadd.f32 0.0, %v3200
      %v3202 = vpop.f32.mrb[0].mxu0
      %v3203 = vadd.f32 0.0, %v3202
      %3204 = vmatprep.mubr.bf16.mxu0 0
      %3205 = vmatmul.mubr.bf16.gmra.mrb[0].mxu0 %v3090
      %v3206 = vpop.f32.mrb[0].mxu0
      %v3207 = vadd.f32 0.0, %v3206
      %v3208 = vpop.f32.mrb[0].mxu0
      %v3209 = vadd.f32 0.0, %v3208
      %v3210 = vpop.f32.mrb[0].mxu0
      %v3211 = vadd.f32 0.0, %v3210
      %v3212 = vpop.f32.mrb[0].mxu0
      %v3213 = vadd.f32 0.0, %v3212
      %3214 = vmatprep.mubr.bf16.mxu0 0
      %3215 = vmatmul.mubr.bf16.gmra.mrb[0].mxu0 %v3093
      %v3216 = vpop.f32.mrb[0].mxu0
      %v3217 = vadd.f32 0.0, %v3216
      %v3218 = vpop.f32.mrb[0].mxu0
      %v3219 = vadd.f32 0.0, %v3218
      %v3220 = vpop.f32.mrb[0].mxu0
      %v3221 = vadd.f32 0.0, %v3220
      %v3222 = vpop.f32.mrb[0].mxu0
      %v3223 = vadd.f32 0.0, %v3222
      %3224 = vdwg.mxu0
      %v3226 = vlaneseq
      %v3227 = vshrl.u32 %v3226, 7
      %v3228 = vsub.s32 0, %v3227
      %v3229 = vrot.slane %v2987, %v3228
      %v3230 = vlaneseq
      %v3231 = vshrl.u32 %v3230, 7
      %v3232 = vsub.s32 1, %v3231
      %v3233 = vrot.slane %v2987, %v3232
      %v3236 = vmul.f32 %v3137, %v3229
      %v3237 = vmul.f32 %v3139, %v3233
      %v3238 = vmul.f32 %v3141, %v3229
      %v3239 = vmul.f32 %v3143, %v3233
      %v3241 = vlaneseq
      %v3242 = vshrl.u32 %v3241, 7
      %v3243 = vsub.s32 0, %v3242
      %v3244 = vrot.slane %v2989, %v3243
      %v3245 = vlaneseq
      %v3246 = vshrl.u32 %v3245, 7
      %v3247 = vsub.s32 1, %v3246
      %v3248 = vrot.slane %v2989, %v3247
      %v3251 = vmul.f32 %v3147, %v3244
      %v3252 = vmul.f32 %v3149, %v3248
      %v3253 = vmul.f32 %v3151, %v3244
      %v3254 = vmul.f32 %v3153, %v3248
      %v3256 = vlaneseq
      %v3257 = vshrl.u32 %v3256, 7
      %v3258 = vsub.s32 0, %v3257
      %v3259 = vrot.slane %v2991, %v3258
      %v3260 = vlaneseq
      %v3261 = vshrl.u32 %v3260, 7
      %v3262 = vsub.s32 1, %v3261
      %v3263 = vrot.slane %v2991, %v3262
      %v3266 = vmul.f32 %v3157, %v3259
      %v3267 = vmul.f32 %v3159, %v3263
      %v3268 = vmul.f32 %v3161, %v3259
      %v3269 = vmul.f32 %v3163, %v3263
      %v3271 = vlaneseq
      %v3272 = vshrl.u32 %v3271, 7
      %v3273 = vsub.s32 0, %v3272
      %v3274 = vrot.slane %v2993, %v3273
      %v3275 = vlaneseq
      %v3276 = vshrl.u32 %v3275, 7
      %v3277 = vsub.s32 1, %v3276
      %v3278 = vrot.slane %v2993, %v3277
      %v3281 = vmul.f32 %v3167, %v3274
      %v3282 = vmul.f32 %v3169, %v3278
      %v3283 = vmul.f32 %v3171, %v3274
      %v3284 = vmul.f32 %v3173, %v3278
      %v3286 = vlaneseq
      %v3287 = vshrl.u32 %v3286, 7
      %v3288 = vsub.s32 0, %v3287
      %v3289 = vrot.slane %v2995, %v3288
      %v3290 = vlaneseq
      %v3291 = vshrl.u32 %v3290, 7
      %v3292 = vsub.s32 1, %v3291
      %v3293 = vrot.slane %v2995, %v3292
      %v3296 = vmul.f32 %v3177, %v3289
      %v3297 = vmul.f32 %v3179, %v3293
      %v3298 = vmul.f32 %v3181, %v3289
      %v3299 = vmul.f32 %v3183, %v3293
      %v3301 = vlaneseq
      %v3302 = vshrl.u32 %v3301, 7
      %v3303 = vsub.s32 0, %v3302
      %v3304 = vrot.slane %v2997, %v3303
      %v3305 = vlaneseq
      %v3306 = vshrl.u32 %v3305, 7
      %v3307 = vsub.s32 1, %v3306
      %v3308 = vrot.slane %v2997, %v3307
      %v3311 = vmul.f32 %v3187, %v3304
      %v3312 = vmul.f32 %v3189, %v3308
      %v3313 = vmul.f32 %v3191, %v3304
      %v3314 = vmul.f32 %v3193, %v3308
      %v3316 = vlaneseq
      %v3317 = vshrl.u32 %v3316, 7
      %v3318 = vsub.s32 0, %v3317
      %v3319 = vrot.slane %v2999, %v3318
      %v3320 = vlaneseq
      %v3321 = vshrl.u32 %v3320, 7
      %v3322 = vsub.s32 1, %v3321
      %v3323 = vrot.slane %v2999, %v3322
      %v3326 = vmul.f32 %v3197, %v3319
      %v3327 = vmul.f32 %v3199, %v3323
      %v3328 = vmul.f32 %v3201, %v3319
      %v3329 = vmul.f32 %v3203, %v3323
      %v3331 = vlaneseq
      %v3332 = vshrl.u32 %v3331, 7
      %v3333 = vsub.s32 0, %v3332
      %v3334 = vrot.slane %v3001, %v3333
      %v3335 = vlaneseq
      %v3336 = vshrl.u32 %v3335, 7
      %v3337 = vsub.s32 1, %v3336
      %v3338 = vrot.slane %v3001, %v3337
      %v3341 = vmul.f32 %v3207, %v3334
      %v3342 = vmul.f32 %v3209, %v3338
      %v3343 = vmul.f32 %v3211, %v3334
      %v3344 = vmul.f32 %v3213, %v3338
      %v3346 = vlaneseq
      %v3347 = vshrl.u32 %v3346, 7
      %v3348 = vsub.s32 0, %v3347
      %v3349 = vrot.slane %v3003, %v3348
      %v3350 = vlaneseq
      %v3351 = vshrl.u32 %v3350, 7
      %v3352 = vsub.s32 1, %v3351
      %v3353 = vrot.slane %v3003, %v3352
      %v3356 = vmul.f32 %v3217, %v3349
      %v3357 = vmul.f32 %v3219, %v3353
      %v3358 = vmul.f32 %v3221, %v3349
      %v3359 = vmul.f32 %v3223, %v3353
      %v3360 = vadd.f32 %v3236, %v3251
      %v3361 = vadd.f32 %v3237, %v3252
      %v3362 = vadd.f32 %v3238, %v3253
      %v3363 = vadd.f32 %v3239, %v3254
      %v3364 = vadd.f32 %v3266, %v3281
      %v3365 = vadd.f32 %v3267, %v3282
      %v3366 = vadd.f32 %v3268, %v3283
      %v3367 = vadd.f32 %v3269, %v3284
      %v3368 = vadd.f32 %v3296, %v3311
      %v3369 = vadd.f32 %v3297, %v3312
      %v3370 = vadd.f32 %v3298, %v3313
      %v3371 = vadd.f32 %v3299, %v3314
      %v3372 = vadd.f32 %v3326, %v3341
      %v3373 = vadd.f32 %v3327, %v3342
      %v3374 = vadd.f32 %v3328, %v3343
      %v3375 = vadd.f32 %v3329, %v3344
      %v3376 = vadd.f32 %v3360, %v3364
      %v3377 = vadd.f32 %v3361, %v3365
      %v3378 = vadd.f32 %v3362, %v3366
      %v3379 = vadd.f32 %v3363, %v3367
      %v3380 = vadd.f32 %v3368, %v3372
      %v3381 = vadd.f32 %v3369, %v3373
      %v3382 = vadd.f32 %v3370, %v3374
      %v3383 = vadd.f32 %v3371, %v3375
      %v3384 = vadd.f32 %v3376, %v3380
      %v3385 = vadd.f32 %v3377, %v3381
      %v3386 = vadd.f32 %v3378, %v3382
      %v3387 = vadd.f32 %v3379, %v3383
      %v3388 = vadd.f32 %v3384, %v3356
      %v3389 = vadd.f32 %v3385, %v3357
      %v3390 = vadd.f32 %v3386, %v3358
      %v3391 = vadd.f32 %v3387, %v3359
      %s3392 = scalar_lea.vmem %s9, 26
      %v3393 = vld [vmem:[%s3392] ss:$8 sm:$0x3]
      %v3395 = vlaneseq
      %v3396 = vshrl.u32 %v3395, 7
      %v3397 = vsub.s32 0, %v3396
      %v3398 = vrot.slane %v3393, %v3397
      %v3399 = vlaneseq
      %v3400 = vshrl.u32 %v3399, 7
      %v3401 = vsub.s32 1, %v3400
      %v3402 = vrot.slane %v3393, %v3401
      %v3405 = vmul.f32 %v3388, %v3398
      %v3406 = vmul.f32 %v3389, %v3402
      %v3407 = vmul.f32 %v3390, %v3398
      %v3408 = vmul.f32 %v3391, %v3402
      %s3409 = scalar_lea.vmem %s9, 27
      %v3410 = vld [vmem:[%s3409] ss:$8 sm:$0x3]
      %v3412 = vlaneseq
      %v3413 = vshrl.u32 %v3412, 7
      %v3414 = vsub.s32 0, %v3413
      %v3415 = vrot.slane %v3410, %v3414
      %v3416 = vlaneseq
      %v3417 = vshrl.u32 %v3416, 7
      %v3418 = vsub.s32 1, %v3417
      %v3419 = vrot.slane %v3410, %v3418
      %v3422 = vadd.f32 %v3405, %v3415
      %v3423 = vadd.f32 %v3406, %v3419
      %v3424 = vadd.f32 %v3407, %v3415
      %v3425 = vadd.f32 %v3408, %v3419
      %v3426 = vmax.f32 %v3422, 0.0
      %v3427 = vmax.f32 %v3423, 0.0
      %v3428 = vmax.f32 %v3424, 0.0
      %v3429 = vmax.f32 %v3425, 0.0
      %v3430 = vmin.f32 %v3426, 6.0
      %v3431 = vmin.f32 %v3427, 6.0
      %v3432 = vmin.f32 %v3428, 6.0
      %v3433 = vmin.f32 %v3429, 6.0
      %v3434 = vpack.c.bf16 %v3432, %v3430
      %v3435 = vpack.c.bf16 %v3433, %v3431
      %v3436 = vld [vmem:[%s5] sm:$0xf]
      %v3437 = vld [vmem:[%s5 + $0x4] sm:$0xf]
      %v3438 = vld [vmem:[%s5 + $0x8] sm:$0xf]
      %v3439 = vld [vmem:[%s5 + $0xc] sm:$0xf]
      %v3440 = vld [vmem:[%s5 + $0x10] sm:$0xf]
      %v3441 = vld [vmem:[%s5 + $0x14] sm:$0xf]
      %v3442 = vld [vmem:[%s5 + $0x18] sm:$0xf]
      %v3443 = vld [vmem:[%s5 + $0x1c] sm:$0xf]
      %v3444 = vld [vmem:[%s5 + $0x20] sm:$0xf]
      %v3445 = vld [vmem:[%s5 + $0x24] sm:$0xf]
      %v3446 = vld [vmem:[%s5 + $0x28] sm:$0xf]
      %v3447 = vld [vmem:[%s5 + $0x2c] sm:$0xf]
      %v3448 = vld [vmem:[%s5 + $0x30] sm:$0xf]
      %v3449 = vld [vmem:[%s5 + $0x34] sm:$0xf]
      %v3450 = vld [vmem:[%s5 + $0x38] sm:$0xf]
      %v3451 = vld [vmem:[%s5 + $0x3c] sm:$0xf]
      %v3452 = vld [vmem:[%s5 + $0x40] sm:$0xf]
      %v3453 = vld [vmem:[%s5 + $0x44] sm:$0xf]
      %v3454 = vld [vmem:[%s5 + $0x48] sm:$0xf]
      %v3455 = vld [vmem:[%s5 + $0x4c] sm:$0xf]
      %v3456 = vld [vmem:[%s5 + $0x50] sm:$0xf]
      %v3457 = vld [vmem:[%s5 + $0x54] sm:$0xf]
      %v3458 = vld [vmem:[%s5 + $0x58] sm:$0xf]
      %v3459 = vld [vmem:[%s5 + $0x5c] sm:$0xf]
      %v3484 = vunpack.c.l.b16 %v3436
      %v3485 = vunpack.c.l.b16 %v3437
      %v3486 = vunpack.c.l.b16 %v3438
      %v3487 = vunpack.c.l.b16 %v3439
      %v3488 = vunpack.c.l.b16 %v3440
      %v3489 = vunpack.c.l.b16 %v3441
      %v3490 = vunpack.c.l.b16 %v3442
      %v3491 = vunpack.c.l.b16 %v3443
      %v3492 = vunpack.c.l.b16 %v3444
      %v3493 = vunpack.c.l.b16 %v3445
      %v3494 = vunpack.c.l.b16 %v3446
      %v3495 = vunpack.c.l.b16 %v3447
      %v3496 = vunpack.c.l.b16 %v3448
      %v3497 = vunpack.c.l.b16 %v3449
      %v3498 = vunpack.c.l.b16 %v3450
      %v3499 = vunpack.c.l.b16 %v3451
      %v3500 = vunpack.c.l.b16 %v3452
      %v3501 = vunpack.c.l.b16 %v3453
      %v3502 = vunpack.c.l.b16 %v3454
      %v3503 = vunpack.c.l.b16 %v3455
      %v3504 = vunpack.c.l.b16 %v3456
      %v3505 = vunpack.c.l.b16 %v3457
      %v3506 = vunpack.c.l.b16 %v3458
      %v3507 = vunpack.c.l.b16 %v3459
      %v3508 = vpack.c.b16 %v3485, %v3484
      %v3509 = vpack.c.b16 %v3487, %v3486
      %v3510 = vpack.c.b16 %v3489, %v3488
      %v3511 = vpack.c.b16 %v3491, %v3490
      %v3512 = vpack.c.b16 %v3493, %v3492
      %v3513 = vpack.c.b16 %v3495, %v3494
      %v3514 = vpack.c.b16 %v3497, %v3496
      %v3515 = vpack.c.b16 %v3499, %v3498
      %v3516 = vpack.c.b16 %v3501, %v3500
      %v3517 = vpack.c.b16 %v3503, %v3502
      %v3518 = vpack.c.b16 %v3505, %v3504
      %v3519 = vpack.c.b16 %v3507, %v3506
      %v3533 = vsel %vm2692, %v3435, 0
      %3535 = vmatprep.subr.bf16.mxu0 0
      %3536 = vmatpush1.bf16.msra.mxu0 %v3508
      %3537 = vmatprep.subr.bf16.mxu0 0
      %3538 = vmatpush1.bf16.msra.mxu0 %v3509
      %3539 = vmatprep.subr.bf16.mxu0 0
      %3540 = vmatpush1.bf16.msra.mxu0 %v3510
      %3541 = vmatprep.subr.bf16.mxu0 0
      %3542 = vmatpush1.bf16.msra.mxu0 %v3511
      %3543 = vmatprep.subr.bf16.mxu0 0
      %3544 = vmatpush1.bf16.msra.mxu0 %v3512
      %3545 = vmatprep.subr.bf16.mxu0 0
      %3546 = vmatpush1.bf16.msra.mxu0 %v3513
      %3547 = vmatprep.subr.bf16.mxu0 0
      %3548 = vmatpush1.bf16.msra.mxu0 %v3514
      %3549 = vmatprep.subr.bf16.mxu0 0
      %3550 = vmatpush1.bf16.msra.mxu0 %v3515
      %3551 = vmatprep.subr.bf16.mxu0 0
      %3552 = vmatpush1.bf16.msra.mxu0 %v3516
      %3553 = vmatprep.subr.bf16.mxu0 0
      %3554 = vmatpush1.bf16.msra.mxu0 %v3517
      %3555 = vmatprep.subr.bf16.mxu0 0
      %3556 = vmatpush1.bf16.msra.mxu0 %v3518
      %3557 = vmatprep.subr.bf16.mxu0 0
      %3558 = vmatpush1.bf16.msra.mxu0 %v3519
      %3559 = vmatprep.subr.bf16.mxu0 0
      %3560 = vmatpush1.bf16.msra.mxu0 0
      %3561 = vmatprep.subr.bf16.mxu0 0
      %3562 = vmatpush1.bf16.msra.mxu0 0
      %3563 = vmatprep.subr.bf16.mxu0 0
      %3564 = vmatpush1.bf16.msra.mxu0 0
      %3565 = vmatprep.subr.bf16.mxu0 0
      %3566 = vmatpush1.bf16.msra.mxu0 0
      %3567 = vmatprep.mubr.bf16.mxu0 %v3533
      %3568 = vmatmul.mubr.bf16.gmra.mrb[0].mxu0 %v3434
      %v3569 = vpop.f32.mrb[0].mxu0
      %v3570 = vadd.f32 0.0, %v3569
      %v3571 = vpop.f32.mrb[0].mxu0
      %v3572 = vpop.f32.mrb[0].mxu0
      %v3573 = vadd.f32 0.0, %v3572
      %v3574 = vpop.f32.mrb[0].mxu0
      %3575 = vdwg.mxu0
      %v3576 = vld [vmem:[%s9 + $0x1c] ss:$0 sm:$0xff]
      %v3577 = vmul.f32 %v3570, %v3576
      %v3578 = vmul.f32 %v3573, %v3576
      %v3579 = vld [vmem:[%s9 + $0x1d] ss:$0 sm:$0xff]
      %v3580 = vadd.f32 %v3577, %v3579
      %v3581 = vadd.f32 %v3578, %v3579
      %v3582 = vpack.c.bf16 %v3581, %v3580
      %v3583 = vld [vmem:[%s6] sm:$0xff]
      %v3584 = vld [vmem:[%s6 + $0x8] sm:$0xf]
      %v3585 = vld [vmem:[%s6 + $0xc] sm:$0xff]
      %v3586 = vld [vmem:[%s6 + $0x14] sm:$0xf]
      %v3587 = vld [vmem:[%s6 + $0x18] sm:$0xff]
      %v3588 = vld [vmem:[%s6 + $0x20] sm:$0xf]
      %v3589 = vld [vmem:[%s6 + $0x24] sm:$0xff]
      %v3590 = vld [vmem:[%s6 + $0x2c] sm:$0xf]
      %v3591 = vld [vmem:[%s6 + $0x30] sm:$0xff]
      %v3592 = vld [vmem:[%s6 + $0x38] sm:$0xf]
      %v3593 = vld [vmem:[%s6 + $0x3c] sm:$0xff]
      %v3594 = vld [vmem:[%s6 + $0x44] sm:$0xf]
      %v3595 = vld [vmem:[%s6 + $0x48] sm:$0xff]
      %v3596 = vld [vmem:[%s6 + $0x50] sm:$0xf]
      %v3597 = vld [vmem:[%s6 + $0x54] sm:$0xff]
      %v3598 = vld [vmem:[%s6 + $0x5c] sm:$0xf]
      %v3615 = vunpack.c.l.b16 %v3583
      %v3616 = vunpack.c.h.b16 %v3583
      %v3617 = vunpack.c.l.b16 %v3584
      %v3618 = vunpack.c.l.b16 %v3585
      %v3619 = vunpack.c.h.b16 %v3585
      %v3620 = vunpack.c.l.b16 %v3586
      %v3621 = vunpack.c.l.b16 %v3587
      %v3622 = vunpack.c.h.b16 %v3587
      %v3623 = vunpack.c.l.b16 %v3588
      %v3624 = vunpack.c.l.b16 %v3589
      %v3625 = vunpack.c.h.b16 %v3589
      %v3626 = vunpack.c.l.b16 %v3590
      %v3627 = vunpack.c.l.b16 %v3591
      %v3628 = vunpack.c.h.b16 %v3591
      %v3629 = vunpack.c.l.b16 %v3592
      %v3630 = vunpack.c.l.b16 %v3593
      %v3631 = vunpack.c.h.b16 %v3593
      %v3632 = vunpack.c.l.b16 %v3594
      %v3633 = vunpack.c.l.b16 %v3595
      %v3634 = vunpack.c.h.b16 %v3595
      %v3635 = vunpack.c.l.b16 %v3596
      %v3636 = vunpack.c.l.b16 %v3597
      %v3637 = vunpack.c.h.b16 %v3597
      %v3638 = vunpack.c.l.b16 %v3598
      %v3639 = vpack.c.b16 %v3618, %v3615
      %v3640 = vpack.c.b16 %v3619, %v3616
      %v3641 = vpack.c.b16 %v3620, %v3617
      %v3642 = vpack.c.b16 %v3624, %v3621
      %v3643 = vpack.c.b16 %v3625, %v3622
      %v3644 = vpack.c.b16 %v3626, %v3623
      %v3645 = vpack.c.b16 %v3630, %v3627
      %v3646 = vpack.c.b16 %v3631, %v3628
      %v3647 = vpack.c.b16 %v3632, %v3629
      %v3648 = vpack.c.b16 %v3636, %v3633
      %v3649 = vpack.c.b16 %v3637, %v3634
      %v3650 = vpack.c.b16 %v3638, %v3635
      %v3664 = vsel %vm2692, %v3582, 0
      %3666 = vmatprep.subr.bf16.mxu0 %v3640
      %3667 = vmatpush1.bf16.msra.mxu0 %v3639
      %3668 = vmatprep.subr.bf16.mxu0 %v3643
      %3669 = vmatpush1.bf16.msra.mxu0 %v3642
      %3670 = vmatprep.subr.bf16.mxu0 %v3646
      %3671 = vmatpush1.bf16.msra.mxu0 %v3645
      %3672 = vmatprep.subr.bf16.mxu0 %v3649
      %3673 = vmatpush1.bf16.msra.mxu0 %v3648
      %3674 = vmatprep.subr.bf16.mxu0 0
      %3675 = vmatpush1.bf16.msra.mxu0 0
      %3676 = vmatprep.subr.bf16.mxu0 0
      %3677 = vmatpush1.bf16.msra.mxu0 0
      %3678 = vmatprep.subr.bf16.mxu0 0
      %3679 = vmatpush1.bf16.msra.mxu0 0
      %3680 = vmatprep.subr.bf16.mxu0 0
      %3681 = vmatpush1.bf16.msra.mxu0 0
      %3682 = vmatprep.subr.bf16.mxu0 0
      %3683 = vmatpush1.bf16.msra.mxu0 0
      %3684 = vmatprep.subr.bf16.mxu0 0
      %3685 = vmatpush1.bf16.msra.mxu0 0
      %3686 = vmatprep.subr.bf16.mxu0 0
      %3687 = vmatpush1.bf16.msra.mxu0 0
      %3688 = vmatprep.subr.bf16.mxu0 0
      %3689 = vmatpush1.bf16.msra.mxu0 0
      %3690 = vmatprep.subr.bf16.mxu0 0
      %3691 = vmatpush1.bf16.msra.mxu0 0
      %3692 = vmatprep.subr.bf16.mxu0 0
      %3693 = vmatpush1.bf16.msra.mxu0 0
      %3694 = vmatprep.subr.bf16.mxu0 0
      %3695 = vmatpush1.bf16.msra.mxu0 0
      %3696 = vmatprep.subr.bf16.mxu0 0
      %3697 = vmatpush1.bf16.msra.mxu0 0
      %3698 = vmatprep.mubr.bf16.mxu0 0
      %3699 = vmatmul.mubr.bf16.gmra.mrb[0].mxu0 %v3664
      %v3700 = vpop.f32.mrb[0].mxu0
      %v3701 = vadd.f32 0.0, %v3700
      %v3702 = vpop.f32.mrb[0].mxu0
      %v3703 = vadd.f32 0.0, %v3702
      %v3704 = vpop.f32.mrb[0].mxu0
      %v3705 = vadd.f32 0.0, %v3704
      %v3706 = vpop.f32.mrb[0].mxu0
      %v3707 = vadd.f32 0.0, %v3706
      %3708 = vdwg.mxu0
      %3709 = vmatprep.subr.bf16.mxu0 0
      %3710 = vmatpush1.bf16.msra.mxu0 %v3641
      %3711 = vmatprep.subr.bf16.mxu0 0
      %3712 = vmatpush1.bf16.msra.mxu0 %v3644
      %3713 = vmatprep.subr.bf16.mxu0 0
      %3714 = vmatpush1.bf16.msra.mxu0 %v3647
      %3715 = vmatprep.subr.bf16.mxu0 0
      %3716 = vmatpush1.bf16.msra.mxu0 %v3650
      %3717 = vmatprep.subr.bf16.mxu0 0
      %3718 = vmatpush1.bf16.msra.mxu0 0
      %3719 = vmatprep.subr.bf16.mxu0 0
      %3720 = vmatpush1.bf16.msra.mxu0 0
      %3721 = vmatprep.subr.bf16.mxu0 0
      %3722 = vmatpush1.bf16.msra.mxu0 0
      %3723 = vmatprep.subr.bf16.mxu0 0
      %3724 = vmatpush1.bf16.msra.mxu0 0
      %3725 = vmatprep.subr.bf16.mxu0 0
      %3726 = vmatpush1.bf16.msra.mxu0 0
      %3727 = vmatprep.subr.bf16.mxu0 0
      %3728 = vmatpush1.bf16.msra.mxu0 0
      %3729 = vmatprep.subr.bf16.mxu0 0
      %3730 = vmatpush1.bf16.msra.mxu0 0
      %3731 = vmatprep.subr.bf16.mxu0 0
      %3732 = vmatpush1.bf16.msra.mxu0 0
      %3733 = vmatprep.subr.bf16.mxu0 0
      %3734 = vmatpush1.bf16.msra.mxu0 0
      %3735 = vmatprep.subr.bf16.mxu0 0
      %3736 = vmatpush1.bf16.msra.mxu0 0
      %3737 = vmatprep.subr.bf16.mxu0 0
      %3738 = vmatpush1.bf16.msra.mxu0 0
      %3739 = vmatprep.subr.bf16.mxu0 0
      %3740 = vmatpush1.bf16.msra.mxu0 0
      %3741 = vmatprep.mubr.bf16.mxu0 0
      %3742 = vmatmul.mubr.bf16.gmra.mrb[0].mxu0 %v3664
      %v3743 = vpop.f32.mrb[0].mxu0
      %v3744 = vadd.f32 0.0, %v3743
      %v3745 = vpop.f32.mrb[0].mxu0
      %v3746 = vpop.f32.mrb[0].mxu0
      %v3747 = vadd.f32 0.0, %v3746
      %v3748 = vpop.f32.mrb[0].mxu0
      %3749 = vdwg.mxu0
      %s3750 = scalar_lea.vmem %s9, 30
      %v3751 = vld [vmem:[%s3750] ss:$8 sm:$0x7]
      %v3753 = vlaneseq
      %v3754 = vshrl.u32 %v3753, 7
      %v3755 = vsub.s32 0, %v3754
      %v3756 = vrot.slane %v3751, %v3755
      %v3757 = vlaneseq
      %v3758 = vshrl.u32 %v3757, 7
      %v3759 = vsub.s32 1, %v3758
      %v3760 = vrot.slane %v3751, %v3759
      %v3761 = vlaneseq
      %v3762 = vshrl.u32 %v3761, 7
      %v3763 = vsub.s32 2, %v3762
      %v3764 = vrot.slane %v3751, %v3763
      %v3768 = vmul.f32 %v3701, %v3756
      %v3769 = vmul.f32 %v3703, %v3760
      %v3770 = vmul.f32 %v3744, %v3764
      %v3771 = vmul.f32 %v3705, %v3756
      %v3772 = vmul.f32 %v3707, %v3760
      %v3773 = vmul.f32 %v3747, %v3764
      %s3774 = scalar_lea.vmem %s9, 31
      %v3775 = vld [vmem:[%s3774] ss:$8 sm:$0x7]
      %v3777 = vlaneseq
      %v3778 = vshrl.u32 %v3777, 7
      %v3779 = vsub.s32 0, %v3778
      %v3780 = vrot.slane %v3775, %v3779
      %v3781 = vlaneseq
      %v3782 = vshrl.u32 %v3781, 7
      %v3783 = vsub.s32 1, %v3782
      %v3784 = vrot.slane %v3775, %v3783
      %v3785 = vlaneseq
      %v3786 = vshrl.u32 %v3785, 7
      %v3787 = vsub.s32 2, %v3786
      %v3788 = vrot.slane %v3775, %v3787
      %v3792 = vadd.f32 %v3768, %v3780
      %v3793 = vadd.f32 %v3769, %v3784
      %v3794 = vadd.f32 %v3770, %v3788
      %v3795 = vadd.f32 %v3771, %v3780
      %v3796 = vadd.f32 %v3772, %v3784
      %v3797 = vadd.f32 %v3773, %v3788
      %v3798 = vmax.f32 %v3792, 0.0
      %v3799 = vmax.f32 %v3793, 0.0
      %v3800 = vmax.f32 %v3794, 0.0
      %v3801 = vmax.f32 %v3795, 0.0
      %v3802 = vmax.f32 %v3796, 0.0
      %v3803 = vmax.f32 %v3797, 0.0
      %v3804 = vmin.f32 %v3798, 6.0
      %v3805 = vmin.f32 %v3799, 6.0
      %v3806 = vmin.f32 %v3800, 6.0
      %v3807 = vmin.f32 %v3801, 6.0
      %v3808 = vmin.f32 %v3802, 6.0
      %v3809 = vmin.f32 %v3803, 6.0
      %v3810 = vpack.c.bf16 %v3807, %v3804
      %v3811 = vpack.c.bf16 %v3808, %v3805
      %v3812 = vpack.c.bf16 %v3809, %v3806
      %v3813 = vld [vmem:[%s9 + $0xa8] sm:$0xff]
      %v3814 = vld [vmem:[%s9 + $0xb0] sm:$0xff]
      %v3815 = vld [vmem:[%s9 + $0xb8] sm:$0xff]
      %v3816 = vld [vmem:[%s9 + $0xc0] sm:$0xff]
      %v3817 = vld [vmem:[%s9 + $0xc8] sm:$0xff]
      %v3818 = vld [vmem:[%s9 + $0xd0] sm:$0xff]
      %v3819 = vunpack.c.l.bf16 %v3810
      %v3820 = vunpack.c.l.bf16 %v3811
      %v3821 = vunpack.c.l.bf16 %v3812
      %v3822 = vunpack.c.h.bf16 %v3810
      %v3823 = vunpack.c.h.bf16 %v3811
      %v3824 = vunpack.c.h.bf16 %v3812
      %v3825 = vmul.f32 %v3819, %v3813
      %v3826 = vmul.f32 %v3820, %v3814
      %v3827 = vmul.f32 %v3821, %v3815
      %v3828 = vmul.f32 %v3822, %v3816
      %v3829 = vmul.f32 %v3823, %v3817
      %v3830 = vmul.f32 %v3824, %v3818
      %v3831 = vadd.f32 %v3825, %v3828
      %v3832 = vrot.slane %v3831, 4
      %v3833 = vadd.f32 %v3831, %v3832
      %v3834 = vrot.slane %v3833, 2
      %v3835 = vadd.f32 %v3833, %v3834
      %v3836 = vrot.slane %v3835, 1
      %v3837 = vadd.f32 %v3835, %v3836
      %v3838 = vadd.f32 %v3826, %v3829
      %v3839 = vrot.slane %v3838, 4
      %v3840 = vadd.f32 %v3838, %v3839
      %v3841 = vrot.slane %v3840, 2
      %v3842 = vadd.f32 %v3840, %v3841
      %v3843 = vrot.slane %v3842, 1
      %v3844 = vadd.f32 %v3842, %v3843
      %v3845 = vadd.f32 %v3827, %v3830
      %v3846 = vrot.slane %v3845, 4
      %v3847 = vadd.f32 %v3845, %v3846
      %v3848 = vrot.slane %v3847, 2
      %v3849 = vadd.f32 %v3847, %v3848
      %v3850 = vrot.slane %v3849, 1
      %v3851 = vadd.f32 %v3849, %v3850
      %s3852 = scalar_lea.vmem %s9, 48
      %v3853 = vld [vmem:[%s3852] ss:$8 sm:$0x7]
      %v3855 = vlaneseq
      %v3856 = vshrl.u32 %v3855, 7
      %v3857 = vsub.s32 0, %v3856
      %v3858 = vrot.slane %v3853, %v3857
      %v3859 = vlaneseq
      %v3860 = vshrl.u32 %v3859, 7
      %v3861 = vsub.s32 1, %v3860
      %v3862 = vrot.slane %v3853, %v3861
      %v3863 = vlaneseq
      %v3864 = vshrl.u32 %v3863, 7
      %v3865 = vsub.s32 2, %v3864
      %v3866 = vrot.slane %v3853, %v3865
      %v3870 = vmul.f32 %v3837, %v3858
      %v3871 = vmul.f32 %v3844, %v3862
      %v3872 = vmul.f32 %v3851, %v3866
      %s3873 = scalar_lea.vmem %s9, 49
      %v3874 = vld [vmem:[%s3873] ss:$8 sm:$0x7]
      %v3876 = vlaneseq
      %v3877 = vshrl.u32 %v3876, 7
      %v3878 = vsub.s32 0, %v3877
      %v3879 = vrot.slane %v3874, %v3878
      %v3880 = vlaneseq
      %v3881 = vshrl.u32 %v3880, 7
      %v3882 = vsub.s32 1, %v3881
      %v3883 = vrot.slane %v3874, %v3882
      %v3884 = vlaneseq
      %v3885 = vshrl.u32 %v3884, 7
      %v3886 = vsub.s32 2, %v3885
      %v3887 = vrot.slane %v3874, %v3886
      %v3891 = vadd.f32 %v3870, %v3879
      %v3892 = vadd.f32 %v3871, %v3883
      %v3893 = vadd.f32 %v3872, %v3887
      %v3894 = vmax.f32 %v3891, 0.0
      %v3895 = vmax.f32 %v3892, 0.0
      %v3896 = vmax.f32 %v3893, 0.0
      %v3897 = vmin.f32 %v3894, 6.0
      %v3898 = vmin.f32 %v3895, 6.0
      %v3899 = vmin.f32 %v3896, 6.0
      %s3900 = scalar_lea.vmem %s9, 50
      %v3901 = vld [vmem:[%s3900] ss:$8 sm:$0x7]
      %v3903 = vlaneseq
      %v3904 = vshrl.u32 %v3903, 7
      %v3905 = vsub.s32 0, %v3904
      %v3906 = vrot.slane %v3901, %v3905
      %v3907 = vlaneseq
      %v3908 = vshrl.u32 %v3907, 7
      %v3909 = vsub.s32 1, %v3908
      %v3910 = vrot.slane %v3901, %v3909
      %v3911 = vlaneseq
      %v3912 = vshrl.u32 %v3911, 7
      %v3913 = vsub.s32 2, %v3912
      %v3914 = vrot.slane %v3901, %v3913
      %v3918 = vmul.f32 %v3897, %v3906
      %v3919 = vmul.f32 %v3898, %v3910
      %v3920 = vmul.f32 %v3899, %v3914
      %vm3921 = vcmask 1040384
      %v3922 = vsel %vm3921, %v3918, 0.0
      %v3923 = vsel %vm3921, %v3919, 0.0
      %v3924 = vadd.f32 %v3922, %v3923
      %v3925 = vsel %vm3921, %v3920, 0.0
      %v3926 = vadd.f32 %v3924, %v3925
      %3927 = vadd.xlane.f32.xlu0 %v3926
      %v3928 = vpop.xlane.xlu0 %3927
      %v3929 = vld [vmem:[%s9 + $0x33] ss:$0 sm:$0xff]
      %v3930 = vadd.f32 %v3928, %v3929
      %v3931 = vxor.u32 %v3930, 2147483648
      %v3932 = vmul.f32 %v3931, 1.442695
      %v3933 = vpow.pop %v3932
      %v3934 = vadd.f32 %v3933, 1.0
      %v3935 = vrcp.pop %v3934
      %v3936 = vmul.f32 1.0, %v3935
      %vm3937 = vcmask 0
      %3938 = vst.msk [vmem:[%s355] sm:$0x1] %vm3937, %v3936
      %p3939 = scmp.lt.s32.totalorder %s21, 1
      %s3940 = scalar_select %p3939, %s21, 1
      %s3941 = scalar_lea.vmem %s10, %s3940
      // Predicated region
      $region61: #{_lambda_.1} parent=59 // pred_check
        %p3942 = pneg %p254
      $region62: #{_lambda_.1} parent=59 // pred_check_branch
        %3944 = sbr.rel (%p3942) target = $region64
      $region63: #{_lambda_.1} parent=59 // pred_region
        _
      $region64: #{_lambda_.1} parent=59 // pred_fallthru
        _
    $region60: #{_lambda_.1} parent=5 // pred_fallthru
      _
    %p3945 = scmp.le.s32.totalorder 2, %s16
    // Predicated region
    $region65: #{_lambda_.1} parent=5 // pred_check
      %p3946 = pneg %p3945
    $region66: #{_lambda_.1} parent=5 // pred_check_branch
      %3948 = sbr.rel (%p3946) target = $region68
    $region67: #{_lambda_.1} parent=5 // pred_region
      %s3949 = ssub.s32 %s16, 2
      // Predicated region
      $region69: #{_lambda_.1} parent=67 // pred_check
        %p3950 = pneg %p260
      $region70: #{_lambda_.1} parent=67 // pred_check_branch
        %3952 = sbr.rel (%p3950) target = $region72
      $region71: #{_lambda_.1} parent=67 // pred_region
        %p3953 = scmp.lt.s32.totalorder %s22, 1
        %s3954 = scalar_select %p3953, %s22, 1
        %s3955 = scalar_lea.vmem %s10, %s3954
      $region72: #{_lambda_.1} parent=67 // pred_fallthru
        _
    $region68: #{_lambda_.1} parent=5 // pred_fallthru
      _
  $region6: #{_lambda_.1} parent=0 // loop_footer
    %s20 = sadd.s32 1, %s16
  $region7: #{_lambda_.1} parent=0 // loop_footer_branch
    %15 = sbr.rel target = $region3
  $region8: #{_lambda_.1} parent=0 // loop_exit
    _

</llo_original>
